<compile_context>
chip_gen: v7x
topology: tpu7x:2x2x1
jax: 0.10.0
libtpu: 0.0.40
codegen_flags: <defaults>
</compile_context>

<pallas_src>
import math
import random

import numpy as np
import jax
import jax.numpy as jnp
from jax.experimental import pallas as pl
from jax.experimental.pallas import tpu as pltpu

# ---------------- config (small, consistent with the module) ----------------
N_ITEMS = 50          # item_num
BATCH = 4             # args.batch_size
MAXLEN = 8            # args.maxlen
HIDDEN = 32           # args.hidden_units
NUM_HEADS = 2         # args.num_heads
NUM_BLOCKS = 2        # args.num_blocks
LN_EPS = 1e-8

# packed per-layer vector rows: [aln_w, aln_b, bq, bk, bv, bo, fln_w, fln_b, b1, b2]
_V_ROWS = 10
# packed per-layer matrix slots: [wq, wk, wv, wo, w1, w2]
_W_SLOTS = 6


# ---------------- fused Pallas kernel ----------------
def _layernorm(x, w, b, eps=LN_EPS):
    mu = jnp.mean(x, axis=-1, keepdims=True)
    var = jnp.mean(jnp.square(x - mu), axis=-1, keepdims=True)
    return (x - mu) * jax.lax.rsqrt(var + eps) * w + b


def _cl4srec_fused_kernel(x_ref, pe_ref, tm_ref, am_ref,
                          w_ref, v_ref, lln_ref, pos_ref, neg_ref,
                          pos_out_ref, neg_out_ref, sim_ref):
    """Whole forward hot path on a (N, D) slab, N = 3*B*L rows.

    Rows [0, B*L)        : original log_seqs
    Rows [B*L, 2*B*L)    : augmented view 1
    Rows [2*B*L, 3*B*L)  : augmented view 2
    """
    N, D = x_ref.shape
    L = MAXLEN
    H = NUM_HEADS
    Dh = D // H
    BL = pos_ref.shape[0]          # B * L (rows of the un-augmented batch)
    NA = sim_ref.shape[0]          # 2 * B augmented views

    sqrt_d = jnp.float32(math.sqrt(D))
    scale = jnp.float32(1.0 / math.sqrt(Dh))
    dim_nt = (((1,), (1,)), ((), ()))      # contract last dims  =>  A @ B.T

    def vrow(i):                           # (1, D) bias / LN-param row
        return v_ref[i:i + 1, :]

    # ---- embedding prologue: scale, + positional, timeline mask ----
    tmask = tm_ref[...]                                        # (N, 1)
    seqs = (x_ref[...] * sqrt_d + pe_ref[...]) * tmask         # (N, D)

    # (N, N) attention mask: same-sequence & causal & key-not-padding (precomputed).
    attn_ok = am_ref[...] > 0.5

    # per-head lane masks: concat-free multi-head attention (hoisted).
    lane = jax.lax.broadcasted_iota(jnp.int32, (1, D), 1)
    head_masks = [jnp.logical_and(lane >= h * Dh, lane < (h + 1) * Dh)
                  .astype(jnp.float32) for h in range(H)]

    for layer in range(NUM_BLOCKS):
        wb, vb = _W_SLOTS * layer, _V_ROWS * layer

        # attention layernorm -> Q ; K, V from raw seqs
        q_in = _layernorm(seqs, vrow(vb + 0), vrow(vb + 1))
        q = jnp.dot(q_in, w_ref[wb + 0], preferred_element_type=jnp.float32) + vrow(vb + 2)
        k = jnp.dot(seqs, w_ref[wb + 1], preferred_element_type=jnp.float32) + vrow(vb + 3)
        v = jnp.dot(seqs, w_ref[wb + 2], preferred_element_type=jnp.float32) + vrow(vb + 4)

        # multi-head attention without lane slicing / concat:
        #   (Q * m_h) @ K^T == Q_h @ K_h^T ;  sum_h P_h @ (V * m_h) == concat_h(P_h @ V_h)
        attn = jnp.zeros((N, D), jnp.float32)
        for hm in head_masks:
            s = jax.lax.dot_general(q * hm, k, dim_nt,
                                    preferred_element_type=jnp.float32) * scale
            s = jnp.where(attn_ok, s, jnp.float32(-1e9))
            s = s - jnp.max(s, axis=-1, keepdims=True)
            p = jnp.exp(s)
            p = p * pl.reciprocal(jnp.sum(p, axis=-1, keepdims=True), approx=True)
            attn = attn + jnp.dot(p, v * hm, preferred_element_type=jnp.float32)
        attn = jnp.dot(attn, w_ref[wb + 3], preferred_element_type=jnp.float32) + vrow(vb + 5)

        # residual: Q + MHA(Q, seqs)
        seqs = q_in + attn

        # forward layernorm + PointWiseFeedForward (with residual)
        seqs = _layernorm(seqs, vrow(vb + 6), vrow(vb + 7))
        ff = jnp.dot(seqs, w_ref[wb + 4], preferred_element_type=jnp.float32) + vrow(vb + 8)
        ff = jnp.maximum(ff, 0.0)
        ff = jnp.dot(ff, w_ref[wb + 5], preferred_element_type=jnp.float32) + vrow(vb + 9)
        seqs = seqs + ff

        # re-apply timeline mask
        seqs = seqs * tmask

    feats = _layernorm(seqs, lln_ref[0:1, :], lln_ref[1:2, :])     # (N, D)

    # ---- pointwise pos/neg logits on the un-augmented rows ----
    main = feats[:BL, :]
    pos_out_ref[...] = jnp.sum(main * pos_ref[...], axis=-1, keepdims=True)
    neg_out_ref[...] = jnp.sum(main * neg_ref[...], axis=-1, keepdims=True)

    # ---- InfoNCE similarity: pick last-position rows of the augmented views
    #      via a selection matmul (no strided slices / relayouts), then z @ z.T.
    rsel = jax.lax.broadcasted_iota(jnp.int32, (NA, N), 0)
    csel = jax.lax.broadcasted_iota(jnp.int32, (NA, N), 1)
    sel = (csel == BL + rsel * L + (L - 1)).astype(jnp.float32)    # (2B, N) one-hot rows
    z = jnp.dot(sel, feats, preferred_element_type=jnp.float32)    # (2B, D)
    sim_ref[...] = jax.lax.dot_general(z, z, dim_nt, preferred_element_type=jnp.float32)


def cl4srec_fused(params, log_seqs, aug1, aug2, pos_seqs, neg_seqs):
    """One pallas_call for encoder(log/aug1/aug2) + pos/neg logits + similarity."""
    B, L = log_seqs.shape
    D = HIDDEN
    stacked = jnp.concatenate([log_seqs, aug1, aug2], axis=0)      # (3B, L)
    S = 3 * B
    N = S * L

    # embedding gathers are glue (XLA); everything downstream is in the kernel
    x = params['item_emb'][stacked].reshape(N, D)                  # (N, D)
    pe_t = jnp.tile(params['pos_emb'], (S, 1))                     # (N, D) tiled positions
    valid = (stacked != 0)
    tmask = valid.astype(jnp.float32).reshape(N, 1)                # (N, 1)

    # (N, N) mask: same-sequence & causal & key-not-padding (layout plumbing, not compute)
    sid = jnp.arange(N, dtype=jnp.int32) // L
    idx = jnp.arange(N, dtype=jnp.int32)
    amask = ((sid[:, None] == sid[None, :])
             & (idx[None, :] <= idx[:, None])
             & valid.reshape(1, N)).astype(jnp.float32)

    pos_e = params['item_emb'][pos_seqs].reshape(B * L, D)
    neg_e = params['item_emb'][neg_seqs].reshape(B * L, D)

    def full(shape):
        return pl.BlockSpec(shape, lambda i, _n=len(shape): (0,) * _n)

    pos_flat, neg_flat, sim = pl.pallas_call(
        _cl4srec_fused_kernel,
        grid=(1,),
        in_specs=[
            full((N, D)),                       # item embeddings (stacked, flattened)
            full((N, D)),                       # positional embeddings (tiled)
            full((N, 1)),                       # timeline mask (column)
            full((N, N)),                       # attention mask
            full((NUM_BLOCKS * _W_SLOTS, D, D)),  # packed weight matrices
            full((NUM_BLOCKS * _V_ROWS, D)),      # packed biases / LN params
            full((2, D)),                       # last layernorm [w; b]
            full((B * L, D)),                   # pos item embeddings (flattened)
            full((B * L, D)),                   # neg item embeddings (flattened)
        ],
        out_specs=[full((B * L, 1)), full((B * L, 1)), full((2 * B, 2 * B))],
        out_shape=(jax.ShapeDtypeStruct((B * L, 1), jnp.float32),
                   jax.ShapeDtypeStruct((B * L, 1), jnp.float32),
                   jax.ShapeDtypeStruct((2 * B, 2 * B), jnp.float32)),
        compiler_params=pltpu.CompilerParams(dimension_semantics=("arbitrary",)),
    )(x, pe_t, tmask, amask,
      params['w_pack'], params['v_pack'], params['lln_pack'], pos_e, neg_e)

    return pos_flat.reshape(B, L), neg_flat.reshape(B, L), sim


# ---------------- InfoNCE glue (tiny 8x7 cross entropy around the kernel's sim output) ----------------
def mask_correlated_samples(batch_size):
    N = 2 * batch_size
    mask = np.ones((N, N), dtype=bool)
    np.fill_diagonal(mask, False)
    for i in range(batch_size):
        mask[i, batch_size + i] = False
        mask[batch_size + i, i] = False
    return mask


def info_nce_from_sim(sim, batch_size, temp=1.0):
    N = 2 * batch_size
    sim = sim / jnp.float32(temp)
    sim_i_j = jnp.diagonal(sim, offset=batch_size)
    sim_j_i = jnp.diagonal(sim, offset=-batch_size)
    positive = jnp.concatenate([sim_i_j, sim_j_i]).reshape(N, 1)
    mask = mask_correlated_samples(batch_size)
    ri, ci = np.nonzero(mask)
    negative = sim[ri, ci].reshape(N, N - 2)
    logits = jnp.concatenate([positive, negative], axis=1)
    # labels are all zero -> cross entropy against column 0
    logz = jax.nn.logsumexp(logits, axis=-1)
    return jnp.mean(logz - logits[:, 0])


# ---------------- data augmentation (host-side numpy, seeded) ----------------
def item_crop(seq, seqlen, eta=0.6):
    num_left = math.floor(seqlen * eta)
    if seqlen - num_left <= 1:
        return seq.copy()
    crop_begin = random.randint(1, seqlen - num_left)
    out = np.zeros_like(seq)
    out[-num_left:] = seq[-num_left - crop_begin:-crop_begin]
    return out


def item_mask(seq, seqlen, gamma=0.3):
    num_mask = math.floor(seqlen * gamma)
    mask_index = np.random.randint(1, seqlen + 1, num_mask)
    out = seq.copy()
    out[-mask_index] = 0
    return out


def item_reorder(seq, seqlen, beta=0.6):
    num_reorder = math.floor(seqlen * beta)
    if seqlen - num_reorder <= 1:
        return seq.copy()
    reorder_begin = np.random.randint(1, seqlen - num_reorder)
    out = seq.copy()
    shuffle_index = np.arange(-reorder_begin - num_reorder, -reorder_begin)
    np.random.shuffle(shuffle_index)
    vals = out[-reorder_begin - num_reorder:-reorder_begin].copy()
    out[shuffle_index] = vals
    return out


def augment(log_seqs, seq_lens):
    # TODO(synk): stochastic augmentation is host-side Python/numpy (no Pallas equivalent);
    # seeded for determinism.
    random.seed(0)
    np.random.seed(0)
    aug1 = log_seqs.copy()
    aug2 = log_seqs.copy()
    for i in range(log_seqs.shape[0]):
        switch = random.sample(range(3), k=2)
        sl = int(seq_lens[i])
        for which, dst in zip(switch, (aug1, aug2)):
            if which == 0:
                dst[i] = item_crop(log_seqs[i], sl)
            elif which == 1:
                dst[i] = item_mask(log_seqs[i], sl)
            else:
                dst[i] = item_reorder(log_seqs[i], sl)
    return aug1, aug2


# ---------------- parameters (deterministic init, packed layout) ----------------
def init_params(key):
    D, NB = HIDDEN, NUM_BLOCKS
    k_item, k_pos, k_w = jax.random.split(key, 3)
    item_emb = 0.1 * jax.random.normal(k_item, (N_ITEMS + 1, D), jnp.float32)
    item_emb = item_emb.at[0].set(0.0)                       # padding_idx=0
    pos_emb = 0.1 * jax.random.normal(k_pos, (MAXLEN, D), jnp.float32)
    # packed matrices: per layer [wq, wk, wv, wo, w1, w2]
    w_pack = 0.1 * jax.random.normal(k_w, (NB * _W_SLOTS, D, D), jnp.float32)
    # packed vectors: per layer [aln_w, aln_b, bq, bk, bv, bo, fln_w, fln_b, b1, b2]
    ones = jnp.ones((1, D), jnp.float32)
    zeros = jnp.zeros((1, D), jnp.float32)
    layer_rows = [ones, zeros, zeros, zeros, zeros, zeros, ones, zeros, zeros, zeros]
    v_pack = jnp.concatenate(layer_rows * NB, axis=0)        # (NB*10, D)
    lln_pack = jnp.concatenate([ones, zeros], axis=0)        # last LN [w; b]
    return dict(item_emb=item_emb, pos_emb=pos_emb,
                w_pack=w_pack, v_pack=v_pack, lln_pack=lln_pack)


# ---------------- CL4SRec.forward ----------------
def forward(params, log_seqs, item_seq_len, pos_seqs, neg_seqs):
    aug_seqs1, aug_seqs2 = augment(log_seqs, item_seq_len)
    pos_logits, neg_logits, sim = cl4srec_fused(
        params,
        jnp.asarray(log_seqs, jnp.int32),
        jnp.asarray(aug_seqs1, jnp.int32),
        jnp.asarray(aug_seqs2, jnp.int32),
        jnp.asarray(pos_seqs, jnp.int32),
        jnp.asarray(neg_seqs, jnp.int32))
    aug_loss = info_nce_from_sim(sim, BATCH, temp=1.0)
    return pos_logits, neg_logits, aug_loss


if __name__ == "__main__":
    key = jax.random.PRNGKey(0)
    params = init_params(key)

    rng = np.random.RandomState(0)
    item_seq_len = np.array([5, 6, 7, 8], dtype=np.int64)
    log_seqs = np.zeros((BATCH, MAXLEN), dtype=np.int64)
    pos_seqs = np.zeros((BATCH, MAXLEN), dtype=np.int64)
    neg_seqs = np.zeros((BATCH, MAXLEN), dtype=np.int64)
    for i, sl in enumerate(item_seq_len):
        log_seqs[i, -sl:] = rng.randint(1, N_ITEMS + 1, sl)
        pos_seqs[i, -sl:] = rng.randint(1, N_ITEMS + 1, sl)
        neg_seqs[i, -sl:] = rng.randint(1, N_ITEMS + 1, sl)

    pos_logits, neg_logits, aug_loss = forward(params, log_seqs, item_seq_len,
                                               pos_seqs, neg_seqs)
    jax.block_until_ready((pos_logits, neg_logits, aug_loss))
    assert pos_logits.shape == (BATCH, MAXLEN)
    assert neg_logits.shape == (BATCH, MAXLEN)
    assert aug_loss.shape == ()
    assert bool(jnp.isfinite(aug_loss))
    print("KERNEL_OK")
</pallas_src>

<mosaic_0001>
module attributes {stable_mosaic.version = 11 : i64} {
  func.func @_cl4srec_fused_kernel(%arg0: i32, %arg1: memref<96x32xf32, #tpu.memory_space<vmem>>, %arg2: memref<96x32xf32, #tpu.memory_space<vmem>>, %arg3: memref<96x1xf32, #tpu.memory_space<vmem>>, %arg4: memref<96x96xf32, #tpu.memory_space<vmem>>, %arg5: memref<12x32x32xf32, #tpu.memory_space<vmem>>, %arg6: memref<20x32xf32, #tpu.memory_space<vmem>>, %arg7: memref<2x32xf32, #tpu.memory_space<vmem>>, %arg8: memref<32x32xf32, #tpu.memory_space<vmem>>, %arg9: memref<32x32xf32, #tpu.memory_space<vmem>>, %arg10: memref<32x1xf32, #tpu.memory_space<vmem>>, %arg11: memref<32x1xf32, #tpu.memory_space<vmem>>, %arg12: memref<8x8xf32, #tpu.memory_space<vmem>>) attributes {dimension_semantics = [#tpu.dimension_semantics<arbitrary>], iteration_bounds = array<i64: 1>, scalar_prefetch = 0 : i64, scratch_operands = 0 : i64, tpu.core_type = #tpu.core_type<tc>, window_params = [{pipeline_mode = #tpu.pipeline_mode<synchronous>, transform_indices = @transform_0, window_bounds = array<i64: 96, 32>}, {pipeline_mode = #tpu.pipeline_mode<synchronous>, transform_indices = @transform_1, window_bounds = array<i64: 96, 32>}, {pipeline_mode = #tpu.pipeline_mode<synchronous>, transform_indices = @transform_2, window_bounds = array<i64: 96, 1>}, {pipeline_mode = #tpu.pipeline_mode<synchronous>, transform_indices = @transform_3, window_bounds = array<i64: 96, 96>}, {pipeline_mode = #tpu.pipeline_mode<synchronous>, transform_indices = @transform_4, window_bounds = array<i64: 12, 32, 32>}, {pipeline_mode = #tpu.pipeline_mode<synchronous>, transform_indices = @transform_5, window_bounds = array<i64: 20, 32>}, {pipeline_mode = #tpu.pipeline_mode<synchronous>, transform_indices = @transform_6, window_bounds = array<i64: 2, 32>}, {pipeline_mode = #tpu.pipeline_mode<synchronous>, transform_indices = @transform_7, window_bounds = array<i64: 32, 32>}, {pipeline_mode = #tpu.pipeline_mode<synchronous>, transform_indices = @transform_8, window_bounds = array<i64: 32, 32>}, {pipeline_mode = #tpu.pipeline_mode<synchronous>, transform_indices = @transform_9, window_bounds = array<i64: 32, 1>}, {pipeline_mode = #tpu.pipeline_mode<synchronous>, transform_indices = @transform_10, window_bounds = array<i64: 32, 1>}, {pipeline_mode = #tpu.pipeline_mode<synchronous>, transform_indices = @transform_11, window_bounds = array<i64: 8, 8>}]} {
    %c0 = arith.constant 0 : index
    %c0_0 = arith.constant 0 : index
    %0 = vector.load %arg3[%c0, %c0_0] : memref<96x1xf32, #tpu.memory_space<vmem>>, vector<96x1xf32>
    %c0_1 = arith.constant 0 : index
    %c0_2 = arith.constant 0 : index
    %1 = vector.load %arg1[%c0_1, %c0_2] : memref<96x32xf32, #tpu.memory_space<vmem>>, vector<96x32xf32>
    %cst = arith.constant 5.65685415 : f32
    %2 = vector.broadcast %cst : f32 to vector<96x32xf32>
    %3 = arith.mulf %1, %2 : vector<96x32xf32>
    %c0_3 = arith.constant 0 : index
    %c0_4 = arith.constant 0 : index
    %4 = vector.load %arg2[%c0_3, %c0_4] : memref<96x32xf32, #tpu.memory_space<vmem>>, vector<96x32xf32>
    %5 = arith.addf %3, %4 : vector<96x32xf32>
    %6 = vector.broadcast %0 : vector<96x1xf32> to vector<96x32xf32>
    %7 = arith.mulf %5, %6 : vector<96x32xf32>
    %c0_5 = arith.constant 0 : index
    %c0_6 = arith.constant 0 : index
    %8 = vector.load %arg4[%c0_5, %c0_6] : memref<96x96xf32, #tpu.memory_space<vmem>>, vector<96x96xf32>
    %cst_7 = arith.constant 5.000000e-01 : f32
    %9 = vector.broadcast %cst_7 : f32 to vector<96x96xf32>
    %10 = arith.cmpf ogt, %8, %9 : vector<96x96xf32>
    %11 = tpu.iota {dimensions = array<i32: 1>} : vector<1x32xi32>
    %c0_i32 = arith.constant 0 : i32
    %12 = vector.broadcast %c0_i32 : i32 to vector<1x32xi32>
    %13 = arith.cmpi sge, %11, %12 : vector<1x32xi32>
    %c16_i32 = arith.constant 16 : i32
    %14 = vector.broadcast %c16_i32 : i32 to vector<1x32xi32>
    %15 = arith.cmpi slt, %11, %14 : vector<1x32xi32>
    %16 = arith.andi %13, %15 : vector<1x32xi1>
    %17 = arith.extui %16 : vector<1x32xi1> to vector<1x32xi32>
    %18 = arith.sitofp %17 : vector<1x32xi32> to vector<1x32xf32>
    %c16_i32_8 = arith.constant 16 : i32
    %19 = vector.broadcast %c16_i32_8 : i32 to vector<1x32xi32>
    %20 = arith.cmpi sge, %11, %19 : vector<1x32xi32>
    %c32_i32 = arith.constant 32 : i32
    %21 = vector.broadcast %c32_i32 : i32 to vector<1x32xi32>
    %22 = arith.cmpi slt, %11, %21 : vector<1x32xi32>
    %23 = arith.andi %20, %22 : vector<1x32xi1>
    %24 = arith.extui %23 : vector<1x32xi1> to vector<1x32xi32>
    %25 = arith.sitofp %24 : vector<1x32xi32> to vector<1x32xf32>
    %c0_9 = arith.constant 0 : index
    %c0_10 = arith.constant 0 : index
    %26 = vector.load %arg6[%c0_9, %c0_10] : memref<20x32xf32, #tpu.memory_space<vmem>>, vector<1x32xf32>
    %c1 = arith.constant 1 : index
    %c0_11 = arith.constant 0 : index
    %27 = vector.load %arg6[%c1, %c0_11] : memref<20x32xf32, #tpu.memory_space<vmem>>, vector<1x32xf32>
    %cst_12 = arith.constant dense<0.000000e+00> : vector<96xf32>
    %28 = vector.multi_reduction <add>, %7, %cst_12 [1] : vector<96x32xf32> to vector<96xf32>
    %29 = vector.shape_cast %28 : vector<96xf32> to vector<96x1xf32>
    %cst_13 = arith.constant 3.200000e+01 : f32
    %30 = vector.broadcast %cst_13 : f32 to vector<96x1xf32>
    %31 = arith.divf %29, %30 : vector<96x1xf32>
    %32 = vector.broadcast %31 : vector<96x1xf32> to vector<96x32xf32>
    %33 = arith.subf %7, %32 : vector<96x32xf32>
    %34 = arith.mulf %33, %33 : vector<96x32xf32>
    %cst_14 = arith.constant dense<0.000000e+00> : vector<96xf32>
    %35 = vector.multi_reduction <add>, %34, %cst_14 [1] : vector<96x32xf32> to vector<96xf32>
    %36 = vector.shape_cast %35 : vector<96xf32> to vector<96x1xf32>
    %cst_15 = arith.constant 3.200000e+01 : f32
    %37 = vector.broadcast %cst_15 : f32 to vector<96x1xf32>
    %38 = arith.divf %36, %37 : vector<96x1xf32>
    %39 = vector.broadcast %31 : vector<96x1xf32> to vector<96x32xf32>
    %40 = arith.subf %7, %39 : vector<96x32xf32>
    %cst_16 = arith.constant 9.99999993E-9 : f32
    %41 = vector.broadcast %cst_16 : f32 to vector<96x1xf32>
    %42 = arith.addf %38, %41 : vector<96x1xf32>
    %43 = math.rsqrt %42 : vector<96x1xf32>
    %44 = vector.broadcast %43 : vector<96x1xf32> to vector<96x32xf32>
    %45 = arith.mulf %40, %44 : vector<96x32xf32>
    %46 = vector.broadcast %26 : vector<1x32xf32> to vector<96x32xf32>
    %47 = arith.mulf %45, %46 : vector<96x32xf32>
    %48 = vector.broadcast %27 : vector<1x32xf32> to vector<96x32xf32>
    %49 = arith.addf %47, %48 : vector<96x32xf32>
    %c0_17 = arith.constant 0 : index
    %c0_18 = arith.constant 0 : index
    %c0_19 = arith.constant 0 : index
    %50 = vector.load %arg5[%c0_17, %c0_18, %c0_19] : memref<12x32x32xf32, #tpu.memory_space<vmem>>, vector<1x32x32xf32>
    %51 = vector.shape_cast %50 : vector<1x32x32xf32> to vector<32x32xf32>
    %cst_20 = arith.constant dense<0.000000e+00> : vector<96x32xf32>
    %52 = tpu.matmul %49, %51, %cst_20 {dimension_numbers = #tpu.dot_dimension_numbers<[1], [0], [0], [1], [0, 0, 1, 1], [], []>} : vector<96x32xf32>, vector<32x32xf32>, vector<96x32xf32> -> vector<96x32xf32>
    %c2 = arith.constant 2 : index
    %c0_21 = arith.constant 0 : index
    %53 = vector.load %arg6[%c2, %c0_21] : memref<20x32xf32, #tpu.memory_space<vmem>>, vector<1x32xf32>
    %54 = vector.broadcast %53 : vector<1x32xf32> to vector<96x32xf32>
    %55 = arith.addf %52, %54 : vector<96x32xf32>
    %c1_22 = arith.constant 1 : index
    %c0_23 = arith.constant 0 : index
    %c0_24 = arith.constant 0 : index
    %56 = vector.load %arg5[%c1_22, %c0_23, %c0_24] : memref<12x32x32xf32, #tpu.memory_space<vmem>>, vector<1x32x32xf32>
    %57 = vector.shape_cast %56 : vector<1x32x32xf32> to vector<32x32xf32>
    %cst_25 = arith.constant dense<0.000000e+00> : vector<96x32xf32>
    %58 = tpu.matmul %7, %57, %cst_25 {dimension_numbers = #tpu.dot_dimension_numbers<[1], [0], [0], [1], [0, 0, 1, 1], [], []>} : vector<96x32xf32>, vector<32x32xf32>, vector<96x32xf32> -> vector<96x32xf32>
    %c3 = arith.constant 3 : index
    %c0_26 = arith.constant 0 : index
    %59 = vector.load %arg6[%c3, %c0_26] : memref<20x32xf32, #tpu.memory_space<vmem>>, vector<1x32xf32>
    %60 = vector.broadcast %59 : vector<1x32xf32> to vector<96x32xf32>
    %61 = arith.addf %58, %60 : vector<96x32xf32>
    %c2_27 = arith.constant 2 : index
    %c0_28 = arith.constant 0 : index
    %c0_29 = arith.constant 0 : index
    %62 = vector.load %arg5[%c2_27, %c0_28, %c0_29] : memref<12x32x32xf32, #tpu.memory_space<vmem>>, vector<1x32x32xf32>
    %63 = vector.shape_cast %62 : vector<1x32x32xf32> to vector<32x32xf32>
    %cst_30 = arith.constant dense<0.000000e+00> : vector<96x32xf32>
    %64 = tpu.matmul %7, %63, %cst_30 {dimension_numbers = #tpu.dot_dimension_numbers<[1], [0], [0], [1], [0, 0, 1, 1], [], []>} : vector<96x32xf32>, vector<32x32xf32>, vector<96x32xf32> -> vector<96x32xf32>
    %c4 = arith.constant 4 : index
    %c0_31 = arith.constant 0 : index
    %65 = vector.load %arg6[%c4, %c0_31] : memref<20x32xf32, #tpu.memory_space<vmem>>, vector<1x32xf32>
    %66 = vector.broadcast %65 : vector<1x32xf32> to vector<96x32xf32>
    %67 = arith.addf %64, %66 : vector<96x32xf32>
    %cst_32 = arith.constant 0.000000e+00 : f32
    %68 = vector.broadcast %cst_32 : f32 to vector<96x32xf32>
    %69 = vector.broadcast %18 : vector<1x32xf32> to vector<96x32xf32>
    %70 = arith.mulf %55, %69 : vector<96x32xf32>
    %cst_33 = arith.constant dense<0.000000e+00> : vector<96x96xf32>
    %71 = tpu.matmul %70, %61, %cst_33 {dimension_numbers = #tpu.dot_dimension_numbers<[1], [1], [0], [0], [0, 0, 1, 0], [], []>} : vector<96x32xf32>, vector<96x32xf32>, vector<96x96xf32> -> vector<96x96xf32>
    %cst_34 = arith.constant 2.500000e-01 : f32
    %72 = vector.broadcast %cst_34 : f32 to vector<96x96xf32>
    %73 = arith.mulf %71, %72 : vector<96x96xf32>
    %cst_35 = arith.constant -1.000000e+09 : f32
    %74 = vector.broadcast %cst_35 : f32 to vector<96x96xf32>
    %75 = arith.select %10, %73, %74 : vector<96x96xi1>, vector<96x96xf32>
    %cst_36 = arith.constant dense<0xFF800000> : vector<96xf32>
    %76 = vector.multi_reduction <maximumf>, %75, %cst_36 [1] : vector<96x96xf32> to vector<96xf32>
    %77 = vector.shape_cast %76 : vector<96xf32> to vector<96x1xf32>
    %78 = vector.broadcast %77 : vector<96x1xf32> to vector<96x96xf32>
    %79 = arith.subf %75, %78 : vector<96x96xf32>
    %80 = math.exp %79 : vector<96x96xf32>
    %cst_37 = arith.constant dense<0.000000e+00> : vector<96xf32>
    %81 = vector.multi_reduction <add>, %80, %cst_37 [1] : vector<96x96xf32> to vector<96xf32>
    %82 = vector.shape_cast %81 : vector<96xf32> to vector<96x1xf32>
    %83 = tpu.reciprocal %82 {approx = true} : vector<96x1xf32> -> vector<96x1xf32>
    %84 = vector.broadcast %83 : vector<96x1xf32> to vector<96x96xf32>
    %85 = arith.mulf %80, %84 : vector<96x96xf32>
    %86 = vector.broadcast %18 : vector<1x32xf32> to vector<96x32xf32>
    %87 = arith.mulf %67, %86 : vector<96x32xf32>
    %cst_38 = arith.constant dense<0.000000e+00> : vector<96x32xf32>
    %88 = tpu.matmul %85, %87, %cst_38 {dimension_numbers = #tpu.dot_dimension_numbers<[1], [0], [0], [1], [0, 0, 1, 1], [], []>} : vector<96x96xf32>, vector<96x32xf32>, vector<96x32xf32> -> vector<96x32xf32>
    %89 = arith.addf %68, %88 : vector<96x32xf32>
    %90 = vector.broadcast %25 : vector<1x32xf32> to vector<96x32xf32>
    %91 = arith.mulf %55, %90 : vector<96x32xf32>
    %cst_39 = arith.constant dense<0.000000e+00> : vector<96x96xf32>
    %92 = tpu.matmul %91, %61, %cst_39 {dimension_numbers = #tpu.dot_dimension_numbers<[1], [1], [0], [0], [0, 0, 1, 0], [], []>} : vector<96x32xf32>, vector<96x32xf32>, vector<96x96xf32> -> vector<96x96xf32>
    %cst_40 = arith.constant 2.500000e-01 : f32
    %93 = vector.broadcast %cst_40 : f32 to vector<96x96xf32>
    %94 = arith.mulf %92, %93 : vector<96x96xf32>
    %cst_41 = arith.constant -1.000000e+09 : f32
    %95 = vector.broadcast %cst_41 : f32 to vector<96x96xf32>
    %96 = arith.select %10, %94, %95 : vector<96x96xi1>, vector<96x96xf32>
    %cst_42 = arith.constant dense<0xFF800000> : vector<96xf32>
    %97 = vector.multi_reduction <maximumf>, %96, %cst_42 [1] : vector<96x96xf32> to vector<96xf32>
    %98 = vector.shape_cast %97 : vector<96xf32> to vector<96x1xf32>
    %99 = vector.broadcast %98 : vector<96x1xf32> to vector<96x96xf32>
    %100 = arith.subf %96, %99 : vector<96x96xf32>
    %101 = math.exp %100 : vector<96x96xf32>
    %cst_43 = arith.constant dense<0.000000e+00> : vector<96xf32>
    %102 = vector.multi_reduction <add>, %101, %cst_43 [1] : vector<96x96xf32> to vector<96xf32>
    %103 = vector.shape_cast %102 : vector<96xf32> to vector<96x1xf32>
    %104 = tpu.reciprocal %103 {approx = true} : vector<96x1xf32> -> vector<96x1xf32>
    %105 = vector.broadcast %104 : vector<96x1xf32> to vector<96x96xf32>
    %106 = arith.mulf %101, %105 : vector<96x96xf32>
    %107 = vector.broadcast %25 : vector<1x32xf32> to vector<96x32xf32>
    %108 = arith.mulf %67, %107 : vector<96x32xf32>
    %cst_44 = arith.constant dense<0.000000e+00> : vector<96x32xf32>
    %109 = tpu.matmul %106, %108, %cst_44 {dimension_numbers = #tpu.dot_dimension_numbers<[1], [0], [0], [1], [0, 0, 1, 1], [], []>} : vector<96x96xf32>, vector<96x32xf32>, vector<96x32xf32> -> vector<96x32xf32>
    %110 = arith.addf %89, %109 : vector<96x32xf32>
    %c3_45 = arith.constant 3 : index
    %c0_46 = arith.constant 0 : index
    %c0_47 = arith.constant 0 : index
    %111 = vector.load %arg5[%c3_45, %c0_46, %c0_47] : memref<12x32x32xf32, #tpu.memory_space<vmem>>, vector<1x32x32xf32>
    %112 = vector.shape_cast %111 : vector<1x32x32xf32> to vector<32x32xf32>
    %cst_48 = arith.constant dense<0.000000e+00> : vector<96x32xf32>
    %113 = tpu.matmul %110, %112, %cst_48 {dimension_numbers = #tpu.dot_dimension_numbers<[1], [0], [0], [1], [0, 0, 1, 1], [], []>} : vector<96x32xf32>, vector<32x32xf32>, vector<96x32xf32> -> vector<96x32xf32>
    %c5 = arith.constant 5 : index
    %c0_49 = arith.constant 0 : index
    %114 = vector.load %arg6[%c5, %c0_49] : memref<20x32xf32, #tpu.memory_space<vmem>>, vector<1x32xf32>
    %115 = vector.broadcast %114 : vector<1x32xf32> to vector<96x32xf32>
    %116 = arith.addf %113, %115 : vector<96x32xf32>
    %117 = arith.addf %49, %116 : vector<96x32xf32>
    %c6 = arith.constant 6 : index
    %c0_50 = arith.constant 0 : index
    %118 = vector.load %arg6[%c6, %c0_50] : memref<20x32xf32, #tpu.memory_space<vmem>>, vector<1x32xf32>
    %c7 = arith.constant 7 : index
    %c0_51 = arith.constant 0 : index
    %119 = vector.load %arg6[%c7, %c0_51] : memref<20x32xf32, #tpu.memory_space<vmem>>, vector<1x32xf32>
    %cst_52 = arith.constant dense<0.000000e+00> : vector<96xf32>
    %120 = vector.multi_reduction <add>, %117, %cst_52 [1] : vector<96x32xf32> to vector<96xf32>
    %121 = vector.shape_cast %120 : vector<96xf32> to vector<96x1xf32>
    %cst_53 = arith.constant 3.200000e+01 : f32
    %122 = vector.broadcast %cst_53 : f32 to vector<96x1xf32>
    %123 = arith.divf %121, %122 : vector<96x1xf32>
    %124 = vector.broadcast %123 : vector<96x1xf32> to vector<96x32xf32>
    %125 = arith.subf %117, %124 : vector<96x32xf32>
    %126 = arith.mulf %125, %125 : vector<96x32xf32>
    %cst_54 = arith.constant dense<0.000000e+00> : vector<96xf32>
    %127 = vector.multi_reduction <add>, %126, %cst_54 [1] : vector<96x32xf32> to vector<96xf32>
    %128 = vector.shape_cast %127 : vector<96xf32> to vector<96x1xf32>
    %cst_55 = arith.constant 3.200000e+01 : f32
    %129 = vector.broadcast %cst_55 : f32 to vector<96x1xf32>
    %130 = arith.divf %128, %129 : vector<96x1xf32>
    %131 = vector.broadcast %123 : vector<96x1xf32> to vector<96x32xf32>
    %132 = arith.subf %117, %131 : vector<96x32xf32>
    %cst_56 = arith.constant 9.99999993E-9 : f32
    %133 = vector.broadcast %cst_56 : f32 to vector<96x1xf32>
    %134 = arith.addf %130, %133 : vector<96x1xf32>
    %135 = math.rsqrt %134 : vector<96x1xf32>
    %136 = vector.broadcast %135 : vector<96x1xf32> to vector<96x32xf32>
    %137 = arith.mulf %132, %136 : vector<96x32xf32>
    %138 = vector.broadcast %118 : vector<1x32xf32> to vector<96x32xf32>
    %139 = arith.mulf %137, %138 : vector<96x32xf32>
    %140 = vector.broadcast %119 : vector<1x32xf32> to vector<96x32xf32>
    %141 = arith.addf %139, %140 : vector<96x32xf32>
    %c4_57 = arith.constant 4 : index
    %c0_58 = arith.constant 0 : index
    %c0_59 = arith.constant 0 : index
    %142 = vector.load %arg5[%c4_57, %c0_58, %c0_59] : memref<12x32x32xf32, #tpu.memory_space<vmem>>, vector<1x32x32xf32>
    %143 = vector.shape_cast %142 : vector<1x32x32xf32> to vector<32x32xf32>
    %cst_60 = arith.constant dense<0.000000e+00> : vector<96x32xf32>
    %144 = tpu.matmul %141, %143, %cst_60 {dimension_numbers = #tpu.dot_dimension_numbers<[1], [0], [0], [1], [0, 0, 1, 1], [], []>} : vector<96x32xf32>, vector<32x32xf32>, vector<96x32xf32> -> vector<96x32xf32>
    %c8 = arith.constant 8 : index
    %c0_61 = arith.constant 0 : index
    %145 = vector.load %arg6[%c8, %c0_61] : memref<20x32xf32, #tpu.memory_space<vmem>>, vector<1x32xf32>
    %146 = vector.broadcast %145 : vector<1x32xf32> to vector<96x32xf32>
    %147 = arith.addf %144, %146 : vector<96x32xf32>
    %cst_62 = arith.constant 0.000000e+00 : f32
    %148 = vector.broadcast %cst_62 : f32 to vector<96x32xf32>
    %149 = arith.maximumf %147, %148 : vector<96x32xf32>
    %c5_63 = arith.constant 5 : index
    %c0_64 = arith.constant 0 : index
    %c0_65 = arith.constant 0 : index
    %150 = vector.load %arg5[%c5_63, %c0_64, %c0_65] : memref<12x32x32xf32, #tpu.memory_space<vmem>>, vector<1x32x32xf32>
    %151 = vector.shape_cast %150 : vector<1x32x32xf32> to vector<32x32xf32>
    %cst_66 = arith.constant dense<0.000000e+00> : vector<96x32xf32>
    %152 = tpu.matmul %149, %151, %cst_66 {dimension_numbers = #tpu.dot_dimension_numbers<[1], [0], [0], [1], [0, 0, 1, 1], [], []>} : vector<96x32xf32>, vector<32x32xf32>, vector<96x32xf32> -> vector<96x32xf32>
    %c9 = arith.constant 9 : index
    %c0_67 = arith.constant 0 : index
    %153 = vector.load %arg6[%c9, %c0_67] : memref<20x32xf32, #tpu.memory_space<vmem>>, vector<1x32xf32>
    %154 = vector.broadcast %153 : vector<1x32xf32> to vector<96x32xf32>
    %155 = arith.addf %152, %154 : vector<96x32xf32>
    %156 = arith.addf %141, %155 : vector<96x32xf32>
    %157 = vector.broadcast %0 : vector<96x1xf32> to vector<96x32xf32>
    %158 = arith.mulf %156, %157 : vector<96x32xf32>
    %c10 = arith.constant 10 : index
    %c0_68 = arith.constant 0 : index
    %159 = vector.load %arg6[%c10, %c0_68] : memref<20x32xf32, #tpu.memory_space<vmem>>, vector<1x32xf32>
    %c11 = arith.constant 11 : index
    %c0_69 = arith.constant 0 : index
    %160 = vector.load %arg6[%c11, %c0_69] : memref<20x32xf32, #tpu.memory_space<vmem>>, vector<1x32xf32>
    %cst_70 = arith.constant dense<0.000000e+00> : vector<96xf32>
    %161 = vector.multi_reduction <add>, %158, %cst_70 [1] : vector<96x32xf32> to vector<96xf32>
    %162 = vector.shape_cast %161 : vector<96xf32> to vector<96x1xf32>
    %cst_71 = arith.constant 3.200000e+01 : f32
    %163 = vector.broadcast %cst_71 : f32 to vector<96x1xf32>
    %164 = arith.divf %162, %163 : vector<96x1xf32>
    %165 = vector.broadcast %164 : vector<96x1xf32> to vector<96x32xf32>
    %166 = arith.subf %158, %165 : vector<96x32xf32>
    %167 = arith.mulf %166, %166 : vector<96x32xf32>
    %cst_72 = arith.constant dense<0.000000e+00> : vector<96xf32>
    %168 = vector.multi_reduction <add>, %167, %cst_72 [1] : vector<96x32xf32> to vector<96xf32>
    %169 = vector.shape_cast %168 : vector<96xf32> to vector<96x1xf32>
    %cst_73 = arith.constant 3.200000e+01 : f32
    %170 = vector.broadcast %cst_73 : f32 to vector<96x1xf32>
    %171 = arith.divf %169, %170 : vector<96x1xf32>
    %172 = vector.broadcast %164 : vector<96x1xf32> to vector<96x32xf32>
    %173 = arith.subf %158, %172 : vector<96x32xf32>
    %cst_74 = arith.constant 9.99999993E-9 : f32
    %174 = vector.broadcast %cst_74 : f32 to vector<96x1xf32>
    %175 = arith.addf %171, %174 : vector<96x1xf32>
    %176 = math.rsqrt %175 : vector<96x1xf32>
    %177 = vector.broadcast %176 : vector<96x1xf32> to vector<96x32xf32>
    %178 = arith.mulf %173, %177 : vector<96x32xf32>
    %179 = vector.broadcast %159 : vector<1x32xf32> to vector<96x32xf32>
    %180 = arith.mulf %178, %179 : vector<96x32xf32>
    %181 = vector.broadcast %160 : vector<1x32xf32> to vector<96x32xf32>
    %182 = arith.addf %180, %181 : vector<96x32xf32>
    %c6_75 = arith.constant 6 : index
    %c0_76 = arith.constant 0 : index
    %c0_77 = arith.constant 0 : index
    %183 = vector.load %arg5[%c6_75, %c0_76, %c0_77] : memref<12x32x32xf32, #tpu.memory_space<vmem>>, vector<1x32x32xf32>
    %184 = vector.shape_cast %183 : vector<1x32x32xf32> to vector<32x32xf32>
    %cst_78 = arith.constant dense<0.000000e+00> : vector<96x32xf32>
    %185 = tpu.matmul %182, %184, %cst_78 {dimension_numbers = #tpu.dot_dimension_numbers<[1], [0], [0], [1], [0, 0, 1, 1], [], []>} : vector<96x32xf32>, vector<32x32xf32>, vector<96x32xf32> -> vector<96x32xf32>
    %c12 = arith.constant 12 : index
    %c0_79 = arith.constant 0 : index
    %186 = vector.load %arg6[%c12, %c0_79] : memref<20x32xf32, #tpu.memory_space<vmem>>, vector<1x32xf32>
    %187 = vector.broadcast %186 : vector<1x32xf32> to vector<96x32xf32>
    %188 = arith.addf %185, %187 : vector<96x32xf32>
    %c7_80 = arith.constant 7 : index
    %c0_81 = arith.constant 0 : index
    %c0_82 = arith.constant 0 : index
    %189 = vector.load %arg5[%c7_80, %c0_81, %c0_82] : memref<12x32x32xf32, #tpu.memory_space<vmem>>, vector<1x32x32xf32>
    %190 = vector.shape_cast %189 : vector<1x32x32xf32> to vector<32x32xf32>
    %cst_83 = arith.constant dense<0.000000e+00> : vector<96x32xf32>
    %191 = tpu.matmul %158, %190, %cst_83 {dimension_numbers = #tpu.dot_dimension_numbers<[1], [0], [0], [1], [0, 0, 1, 1], [], []>} : vector<96x32xf32>, vector<32x32xf32>, vector<96x32xf32> -> vector<96x32xf32>
    %c13 = arith.constant 13 : index
    %c0_84 = arith.constant 0 : index
    %192 = vector.load %arg6[%c13, %c0_84] : memref<20x32xf32, #tpu.memory_space<vmem>>, vector<1x32xf32>
    %193 = vector.broadcast %192 : vector<1x32xf32> to vector<96x32xf32>
    %194 = arith.addf %191, %193 : vector<96x32xf32>
    %c8_85 = arith.constant 8 : index
    %c0_86 = arith.constant 0 : index
    %c0_87 = arith.constant 0 : index
    %195 = vector.load %arg5[%c8_85, %c0_86, %c0_87] : memref<12x32x32xf32, #tpu.memory_space<vmem>>, vector<1x32x32xf32>
    %196 = vector.shape_cast %195 : vector<1x32x32xf32> to vector<32x32xf32>
    %cst_88 = arith.constant dense<0.000000e+00> : vector<96x32xf32>
    %197 = tpu.matmul %158, %196, %cst_88 {dimension_numbers = #tpu.dot_dimension_numbers<[1], [0], [0], [1], [0, 0, 1, 1], [], []>} : vector<96x32xf32>, vector<32x32xf32>, vector<96x32xf32> -> vector<96x32xf32>
    %c14 = arith.constant 14 : index
    %c0_89 = arith.constant 0 : index
    %198 = vector.load %arg6[%c14, %c0_89] : memref<20x32xf32, #tpu.memory_space<vmem>>, vector<1x32xf32>
    %199 = vector.broadcast %198 : vector<1x32xf32> to vector<96x32xf32>
    %200 = arith.addf %197, %199 : vector<96x32xf32>
    %cst_90 = arith.constant 0.000000e+00 : f32
    %201 = vector.broadcast %cst_90 : f32 to vector<96x32xf32>
    %202 = vector.broadcast %18 : vector<1x32xf32> to vector<96x32xf32>
    %203 = arith.mulf %188, %202 : vector<96x32xf32>
    %cst_91 = arith.constant dense<0.000000e+00> : vector<96x96xf32>
    %204 = tpu.matmul %203, %194, %cst_91 {dimension_numbers = #tpu.dot_dimension_numbers<[1], [1], [0], [0], [0, 0, 1, 0], [], []>} : vector<96x32xf32>, vector<96x32xf32>, vector<96x96xf32> -> vector<96x96xf32>
    %cst_92 = arith.constant 2.500000e-01 : f32
    %205 = vector.broadcast %cst_92 : f32 to vector<96x96xf32>
    %206 = arith.mulf %204, %205 : vector<96x96xf32>
    %cst_93 = arith.constant -1.000000e+09 : f32
    %207 = vector.broadcast %cst_93 : f32 to vector<96x96xf32>
    %208 = arith.select %10, %206, %207 : vector<96x96xi1>, vector<96x96xf32>
    %cst_94 = arith.constant dense<0xFF800000> : vector<96xf32>
    %209 = vector.multi_reduction <maximumf>, %208, %cst_94 [1] : vector<96x96xf32> to vector<96xf32>
    %210 = vector.shape_cast %209 : vector<96xf32> to vector<96x1xf32>
    %211 = vector.broadcast %210 : vector<96x1xf32> to vector<96x96xf32>
    %212 = arith.subf %208, %211 : vector<96x96xf32>
    %213 = math.exp %212 : vector<96x96xf32>
    %cst_95 = arith.constant dense<0.000000e+00> : vector<96xf32>
    %214 = vector.multi_reduction <add>, %213, %cst_95 [1] : vector<96x96xf32> to vector<96xf32>
    %215 = vector.shape_cast %214 : vector<96xf32> to vector<96x1xf32>
    %216 = tpu.reciprocal %215 {approx = true} : vector<96x1xf32> -> vector<96x1xf32>
    %217 = vector.broadcast %216 : vector<96x1xf32> to vector<96x96xf32>
    %218 = arith.mulf %213, %217 : vector<96x96xf32>
    %219 = vector.broadcast %18 : vector<1x32xf32> to vector<96x32xf32>
    %220 = arith.mulf %200, %219 : vector<96x32xf32>
    %cst_96 = arith.constant dense<0.000000e+00> : vector<96x32xf32>
    %221 = tpu.matmul %218, %220, %cst_96 {dimension_numbers = #tpu.dot_dimension_numbers<[1], [0], [0], [1], [0, 0, 1, 1], [], []>} : vector<96x96xf32>, vector<96x32xf32>, vector<96x32xf32> -> vector<96x32xf32>
    %222 = arith.addf %201, %221 : vector<96x32xf32>
    %223 = vector.broadcast %25 : vector<1x32xf32> to vector<96x32xf32>
    %224 = arith.mulf %188, %223 : vector<96x32xf32>
    %cst_97 = arith.constant dense<0.000000e+00> : vector<96x96xf32>
    %225 = tpu.matmul %224, %194, %cst_97 {dimension_numbers = #tpu.dot_dimension_numbers<[1], [1], [0], [0], [0, 0, 1, 0], [], []>} : vector<96x32xf32>, vector<96x32xf32>, vector<96x96xf32> -> vector<96x96xf32>
    %cst_98 = arith.constant 2.500000e-01 : f32
    %226 = vector.broadcast %cst_98 : f32 to vector<96x96xf32>
    %227 = arith.mulf %225, %226 : vector<96x96xf32>
    %cst_99 = arith.constant -1.000000e+09 : f32
    %228 = vector.broadcast %cst_99 : f32 to vector<96x96xf32>
    %229 = arith.select %10, %227, %228 : vector<96x96xi1>, vector<96x96xf32>
    %cst_100 = arith.constant dense<0xFF800000> : vector<96xf32>
    %230 = vector.multi_reduction <maximumf>, %229, %cst_100 [1] : vector<96x96xf32> to vector<96xf32>
    %231 = vector.shape_cast %230 : vector<96xf32> to vector<96x1xf32>
    %232 = vector.broadcast %231 : vector<96x1xf32> to vector<96x96xf32>
    %233 = arith.subf %229, %232 : vector<96x96xf32>
    %234 = math.exp %233 : vector<96x96xf32>
    %cst_101 = arith.constant dense<0.000000e+00> : vector<96xf32>
    %235 = vector.multi_reduction <add>, %234, %cst_101 [1] : vector<96x96xf32> to vector<96xf32>
    %236 = vector.shape_cast %235 : vector<96xf32> to vector<96x1xf32>
    %237 = tpu.reciprocal %236 {approx = true} : vector<96x1xf32> -> vector<96x1xf32>
    %238 = vector.broadcast %237 : vector<96x1xf32> to vector<96x96xf32>
    %239 = arith.mulf %234, %238 : vector<96x96xf32>
    %240 = vector.broadcast %25 : vector<1x32xf32> to vector<96x32xf32>
    %241 = arith.mulf %200, %240 : vector<96x32xf32>
    %cst_102 = arith.constant dense<0.000000e+00> : vector<96x32xf32>
    %242 = tpu.matmul %239, %241, %cst_102 {dimension_numbers = #tpu.dot_dimension_numbers<[1], [0], [0], [1], [0, 0, 1, 1], [], []>} : vector<96x96xf32>, vector<96x32xf32>, vector<96x32xf32> -> vector<96x32xf32>
    %243 = arith.addf %222, %242 : vector<96x32xf32>
    %c9_103 = arith.constant 9 : index
    %c0_104 = arith.constant 0 : index
    %c0_105 = arith.constant 0 : index
    %244 = vector.load %arg5[%c9_103, %c0_104, %c0_105] : memref<12x32x32xf32, #tpu.memory_space<vmem>>, vector<1x32x32xf32>
    %245 = vector.shape_cast %244 : vector<1x32x32xf32> to vector<32x32xf32>
    %cst_106 = arith.constant dense<0.000000e+00> : vector<96x32xf32>
    %246 = tpu.matmul %243, %245, %cst_106 {dimension_numbers = #tpu.dot_dimension_numbers<[1], [0], [0], [1], [0, 0, 1, 1], [], []>} : vector<96x32xf32>, vector<32x32xf32>, vector<96x32xf32> -> vector<96x32xf32>
    %c15 = arith.constant 15 : index
    %c0_107 = arith.constant 0 : index
    %247 = vector.load %arg6[%c15, %c0_107] : memref<20x32xf32, #tpu.memory_space<vmem>>, vector<1x32xf32>
    %248 = vector.broadcast %247 : vector<1x32xf32> to vector<96x32xf32>
    %249 = arith.addf %246, %248 : vector<96x32xf32>
    %250 = arith.addf %182, %249 : vector<96x32xf32>
    %c16 = arith.constant 16 : index
    %c0_108 = arith.constant 0 : index
    %251 = vector.load %arg6[%c16, %c0_108] : memref<20x32xf32, #tpu.memory_space<vmem>>, vector<1x32xf32>
    %c17 = arith.constant 17 : index
    %c0_109 = arith.constant 0 : index
    %252 = vector.load %arg6[%c17, %c0_109] : memref<20x32xf32, #tpu.memory_space<vmem>>, vector<1x32xf32>
    %cst_110 = arith.constant dense<0.000000e+00> : vector<96xf32>
    %253 = vector.multi_reduction <add>, %250, %cst_110 [1] : vector<96x32xf32> to vector<96xf32>
    %254 = vector.shape_cast %253 : vector<96xf32> to vector<96x1xf32>
    %cst_111 = arith.constant 3.200000e+01 : f32
    %255 = vector.broadcast %cst_111 : f32 to vector<96x1xf32>
    %256 = arith.divf %254, %255 : vector<96x1xf32>
    %257 = vector.broadcast %256 : vector<96x1xf32> to vector<96x32xf32>
    %258 = arith.subf %250, %257 : vector<96x32xf32>
    %259 = arith.mulf %258, %258 : vector<96x32xf32>
    %cst_112 = arith.constant dense<0.000000e+00> : vector<96xf32>
    %260 = vector.multi_reduction <add>, %259, %cst_112 [1] : vector<96x32xf32> to vector<96xf32>
    %261 = vector.shape_cast %260 : vector<96xf32> to vector<96x1xf32>
    %cst_113 = arith.constant 3.200000e+01 : f32
    %262 = vector.broadcast %cst_113 : f32 to vector<96x1xf32>
    %263 = arith.divf %261, %262 : vector<96x1xf32>
    %264 = vector.broadcast %256 : vector<96x1xf32> to vector<96x32xf32>
    %265 = arith.subf %250, %264 : vector<96x32xf32>
    %cst_114 = arith.constant 9.99999993E-9 : f32
    %266 = vector.broadcast %cst_114 : f32 to vector<96x1xf32>
    %267 = arith.addf %263, %266 : vector<96x1xf32>
    %268 = math.rsqrt %267 : vector<96x1xf32>
    %269 = vector.broadcast %268 : vector<96x1xf32> to vector<96x32xf32>
    %270 = arith.mulf %265, %269 : vector<96x32xf32>
    %271 = vector.broadcast %251 : vector<1x32xf32> to vector<96x32xf32>
    %272 = arith.mulf %270, %271 : vector<96x32xf32>
    %273 = vector.broadcast %252 : vector<1x32xf32> to vector<96x32xf32>
    %274 = arith.addf %272, %273 : vector<96x32xf32>
    %c10_115 = arith.constant 10 : index
    %c0_116 = arith.constant 0 : index
    %c0_117 = arith.constant 0 : index
    %275 = vector.load %arg5[%c10_115, %c0_116, %c0_117] : memref<12x32x32xf32, #tpu.memory_space<vmem>>, vector<1x32x32xf32>
    %276 = vector.shape_cast %275 : vector<1x32x32xf32> to vector<32x32xf32>
    %cst_118 = arith.constant dense<0.000000e+00> : vector<96x32xf32>
    %277 = tpu.matmul %274, %276, %cst_118 {dimension_numbers = #tpu.dot_dimension_numbers<[1], [0], [0], [1], [0, 0, 1, 1], [], []>} : vector<96x32xf32>, vector<32x32xf32>, vector<96x32xf32> -> vector<96x32xf32>
    %c18 = arith.constant 18 : index
    %c0_119 = arith.constant 0 : index
    %278 = vector.load %arg6[%c18, %c0_119] : memref<20x32xf32, #tpu.memory_space<vmem>>, vector<1x32xf32>
    %279 = vector.broadcast %278 : vector<1x32xf32> to vector<96x32xf32>
    %280 = arith.addf %277, %279 : vector<96x32xf32>
    %cst_120 = arith.constant 0.000000e+00 : f32
    %281 = vector.broadcast %cst_120 : f32 to vector<96x32xf32>
    %282 = arith.maximumf %280, %281 : vector<96x32xf32>
    %c11_121 = arith.constant 11 : index
    %c0_122 = arith.constant 0 : index
    %c0_123 = arith.constant 0 : index
    %283 = vector.load %arg5[%c11_121, %c0_122, %c0_123] : memref<12x32x32xf32, #tpu.memory_space<vmem>>, vector<1x32x32xf32>
    %284 = vector.shape_cast %283 : vector<1x32x32xf32> to vector<32x32xf32>
    %cst_124 = arith.constant dense<0.000000e+00> : vector<96x32xf32>
    %285 = tpu.matmul %282, %284, %cst_124 {dimension_numbers = #tpu.dot_dimension_numbers<[1], [0], [0], [1], [0, 0, 1, 1], [], []>} : vector<96x32xf32>, vector<32x32xf32>, vector<96x32xf32> -> vector<96x32xf32>
    %c19 = arith.constant 19 : index
    %c0_125 = arith.constant 0 : index
    %286 = vector.load %arg6[%c19, %c0_125] : memref<20x32xf32, #tpu.memory_space<vmem>>, vector<1x32xf32>
    %287 = vector.broadcast %286 : vector<1x32xf32> to vector<96x32xf32>
    %288 = arith.addf %285, %287 : vector<96x32xf32>
    %289 = arith.addf %274, %288 : vector<96x32xf32>
    %290 = vector.broadcast %0 : vector<96x1xf32> to vector<96x32xf32>
    %291 = arith.mulf %289, %290 : vector<96x32xf32>
    %c0_126 = arith.constant 0 : index
    %c0_127 = arith.constant 0 : index
    %292 = vector.load %arg7[%c0_126, %c0_127] : memref<2x32xf32, #tpu.memory_space<vmem>>, vector<1x32xf32>
    %c1_128 = arith.constant 1 : index
    %c0_129 = arith.constant 0 : index
    %293 = vector.load %arg7[%c1_128, %c0_129] : memref<2x32xf32, #tpu.memory_space<vmem>>, vector<1x32xf32>
    %cst_130 = arith.constant dense<0.000000e+00> : vector<96xf32>
    %294 = vector.multi_reduction <add>, %291, %cst_130 [1] : vector<96x32xf32> to vector<96xf32>
    %295 = vector.shape_cast %294 : vector<96xf32> to vector<96x1xf32>
    %cst_131 = arith.constant 3.200000e+01 : f32
    %296 = vector.broadcast %cst_131 : f32 to vector<96x1xf32>
    %297 = arith.divf %295, %296 : vector<96x1xf32>
    %298 = vector.broadcast %297 : vector<96x1xf32> to vector<96x32xf32>
    %299 = arith.subf %291, %298 : vector<96x32xf32>
    %300 = arith.mulf %299, %299 : vector<96x32xf32>
    %cst_132 = arith.constant dense<0.000000e+00> : vector<96xf32>
    %301 = vector.multi_reduction <add>, %300, %cst_132 [1] : vector<96x32xf32> to vector<96xf32>
    %302 = vector.shape_cast %301 : vector<96xf32> to vector<96x1xf32>
    %cst_133 = arith.constant 3.200000e+01 : f32
    %303 = vector.broadcast %cst_133 : f32 to vector<96x1xf32>
    %304 = arith.divf %302, %303 : vector<96x1xf32>
    %305 = vector.broadcast %297 : vector<96x1xf32> to vector<96x32xf32>
    %306 = arith.subf %291, %305 : vector<96x32xf32>
    %cst_134 = arith.constant 9.99999993E-9 : f32
    %307 = vector.broadcast %cst_134 : f32 to vector<96x1xf32>
    %308 = arith.addf %304, %307 : vector<96x1xf32>
    %309 = math.rsqrt %308 : vector<96x1xf32>
    %310 = vector.broadcast %309 : vector<96x1xf32> to vector<96x32xf32>
    %311 = arith.mulf %306, %310 : vector<96x32xf32>
    %312 = vector.broadcast %292 : vector<1x32xf32> to vector<96x32xf32>
    %313 = arith.mulf %311, %312 : vector<96x32xf32>
    %314 = vector.broadcast %293 : vector<1x32xf32> to vector<96x32xf32>
    %315 = arith.addf %313, %314 : vector<96x32xf32>
    %316 = vector.extract_strided_slice %315 {offsets = [0, 0], sizes = [32, 32], strides = [1, 1]} : vector<96x32xf32> to vector<32x32xf32>
    %c0_135 = arith.constant 0 : index
    %c0_136 = arith.constant 0 : index
    %317 = vector.load %arg8[%c0_135, %c0_136] : memref<32x32xf32, #tpu.memory_space<vmem>>, vector<32x32xf32>
    %318 = arith.mulf %316, %317 : vector<32x32xf32>
    %cst_137 = arith.constant dense<0.000000e+00> : vector<32xf32>
    %319 = vector.multi_reduction <add>, %318, %cst_137 [1] : vector<32x32xf32> to vector<32xf32>
    %320 = vector.shape_cast %319 : vector<32xf32> to vector<32x1xf32>
    %c0_138 = arith.constant 0 : index
    %c0_139 = arith.constant 0 : index
    %321 = vector.load %arg10[%c0_138, %c0_139] : memref<32x1xf32, #tpu.memory_space<vmem>>, vector<32x1xf32>
    tpu.vector_store %arg10[%c0_138, %c0_139], %320 {strides = array<i32>} : memref<32x1xf32, #tpu.memory_space<vmem>>, vector<32x1xf32>,
    %c0_140 = arith.constant 0 : index
    %c0_141 = arith.constant 0 : index
    %322 = vector.load %arg9[%c0_140, %c0_141] : memref<32x32xf32, #tpu.memory_space<vmem>>, vector<32x32xf32>
    %323 = arith.mulf %316, %322 : vector<32x32xf32>
    %cst_142 = arith.constant dense<0.000000e+00> : vector<32xf32>
    %324 = vector.multi_reduction <add>, %323, %cst_142 [1] : vector<32x32xf32> to vector<32xf32>
    %325 = vector.shape_cast %324 : vector<32xf32> to vector<32x1xf32>
    %c0_143 = arith.constant 0 : index
    %c0_144 = arith.constant 0 : index
    %326 = vector.load %arg11[%c0_143, %c0_144] : memref<32x1xf32, #tpu.memory_space<vmem>>, vector<32x1xf32>
    tpu.vector_store %arg11[%c0_143, %c0_144], %325 {strides = array<i32>} : memref<32x1xf32, #tpu.memory_space<vmem>>, vector<32x1xf32>,
    %327 = tpu.iota {dimensions = array<i32: 0>} : vector<8x96xi32>
    %328 = tpu.iota {dimensions = array<i32: 1>} : vector<8x96xi32>
    %c8_i32 = arith.constant 8 : i32
    %329 = vector.broadcast %c8_i32 : i32 to vector<8x96xi32>
    %330 = arith.muli %327, %329 : vector<8x96xi32>
    %c32_i32_145 = arith.constant 32 : i32
    %331 = vector.broadcast %c32_i32_145 : i32 to vector<8x96xi32>
    %332 = arith.addi %331, %330 : vector<8x96xi32>
    %c7_i32 = arith.constant 7 : i32
    %333 = vector.broadcast %c7_i32 : i32 to vector<8x96xi32>
    %334 = arith.addi %332, %333 : vector<8x96xi32>
    %335 = arith.cmpi eq, %328, %334 : vector<8x96xi32>
    %336 = arith.extui %335 : vector<8x96xi1> to vector<8x96xi32>
    %337 = arith.sitofp %336 : vector<8x96xi32> to vector<8x96xf32>
    %cst_146 = arith.constant dense<0.000000e+00> : vector<8x32xf32>
    %338 = tpu.matmul %337, %315, %cst_146 {dimension_numbers = #tpu.dot_dimension_numbers<[1], [0], [0], [1], [0, 0, 1, 1], [], []>} : vector<8x96xf32>, vector<96x32xf32>, vector<8x32xf32> -> vector<8x32xf32>
    %cst_147 = arith.constant dense<0.000000e+00> : vector<8x8xf32>
    %339 = tpu.matmul %338, %338, %cst_147 {dimension_numbers = #tpu.dot_dimension_numbers<[1], [1], [0], [0], [0, 0, 1, 0], [], []>} : vector<8x32xf32>, vector<8x32xf32>, vector<8x8xf32> -> vector<8x8xf32>
    %c0_148 = arith.constant 0 : index
    %c0_149 = arith.constant 0 : index
    %340 = vector.load %arg12[%c0_148, %c0_149] : memref<8x8xf32, #tpu.memory_space<vmem>>, vector<8x8xf32>
    tpu.vector_store %arg12[%c0_148, %c0_149], %339 {strides = array<i32>} : memref<8x8xf32, #tpu.memory_space<vmem>>, vector<8x8xf32>,
    return
  }
  func.func @transform_0(%arg0: i32) -> (i32, i32) {
    %c0_i32 = arith.constant 0 : i32
    %c0_i32_0 = arith.constant 0 : i32
    %c0_i32_1 = arith.constant 0 : i32
    return %c0_i32, %c0_i32_0 : i32, i32
  }
  func.func @transform_1(%arg0: i32) -> (i32, i32) {
    %c0_i32 = arith.constant 0 : i32
    %c0_i32_0 = arith.constant 0 : i32
    %c0_i32_1 = arith.constant 0 : i32
    return %c0_i32, %c0_i32_0 : i32, i32
  }
  func.func @transform_2(%arg0: i32) -> (i32, i32) {
    %c0_i32 = arith.constant 0 : i32
    %c0_i32_0 = arith.constant 0 : i32
    %c0_i32_1 = arith.constant 0 : i32
    return %c0_i32, %c0_i32_0 : i32, i32
  }
  func.func @transform_3(%arg0: i32) -> (i32, i32) {
    %c0_i32 = arith.constant 0 : i32
    %c0_i32_0 = arith.constant 0 : i32
    %c0_i32_1 = arith.constant 0 : i32
    return %c0_i32, %c0_i32_0 : i32, i32
  }
  func.func @transform_4(%arg0: i32) -> (i32, i32, i32) {
    %c0_i32 = arith.constant 0 : i32
    %c0_i32_0 = arith.constant 0 : i32
    %c0_i32_1 = arith.constant 0 : i32
    %c0_i32_2 = arith.constant 0 : i32
    return %c0_i32, %c0_i32_0, %c0_i32_1 : i32, i32, i32
  }
  func.func @transform_5(%arg0: i32) -> (i32, i32) {
    %c0_i32 = arith.constant 0 : i32
    %c0_i32_0 = arith.constant 0 : i32
    %c0_i32_1 = arith.constant 0 : i32
    return %c0_i32, %c0_i32_0 : i32, i32
  }
  func.func @transform_6(%arg0: i32) -> (i32, i32) {
    %c0_i32 = arith.constant 0 : i32
    %c0_i32_0 = arith.constant 0 : i32
    %c0_i32_1 = arith.constant 0 : i32
    return %c0_i32, %c0_i32_0 : i32, i32
  }
  func.func @transform_7(%arg0: i32) -> (i32, i32) {
    %c0_i32 = arith.constant 0 : i32
    %c0_i32_0 = arith.constant 0 : i32
    %c0_i32_1 = arith.constant 0 : i32
    return %c0_i32, %c0_i32_0 : i32, i32
  }
  func.func @transform_8(%arg0: i32) -> (i32, i32) {
    %c0_i32 = arith.constant 0 : i32
    %c0_i32_0 = arith.constant 0 : i32
    %c0_i32_1 = arith.constant 0 : i32
    return %c0_i32, %c0_i32_0 : i32, i32
  }
  func.func @transform_9(%arg0: i32) -> (i32, i32) {
    %c0_i32 = arith.constant 0 : i32
    %c0_i32_0 = arith.constant 0 : i32
    %c0_i32_1 = arith.constant 0 : i32
    return %c0_i32, %c0_i32_0 : i32, i32
  }
  func.func @transform_10(%arg0: i32) -> (i32, i32) {
    %c0_i32 = arith.constant 0 : i32
    %c0_i32_0 = arith.constant 0 : i32
    %c0_i32_1 = arith.constant 0 : i32
    return %c0_i32, %c0_i32_0 : i32, i32
  }
  func.func @transform_11(%arg0: i32) -> (i32, i32) {
    %c0_i32 = arith.constant 0 : i32
    %c0_i32_0 = arith.constant 0 : i32
    %c0_i32_1 = arith.constant 0 : i32
    return %c0_i32, %c0_i32_0 : i32, i32
  }
}

</mosaic_0001>

<llo_original>
// kernel: tpu_custom_call.1
$region0: #{tpu_custom_call.1}
  #allocation0 [shape = 'u32[]', space=smem, size = 0x4, offset = 0x4, fixed_abs, tag = 'smem constant byte address 0x4 - core index']
  #allocation1 [shape = 'u32[144,128]{1,0:T(1,128)}', space=vmem, size = 0x12000, scoped, tag = 'internal scratch']
  %s0 = inlined_call_operand.vmem [shape: f32[96,32], index: 0, kind: input, shape index: {}]
  %s1 = inlined_call_operand.vmem [shape: f32[96,32], index: 1, kind: input, shape index: {}]
  %s2 = inlined_call_operand.vmem [shape: f32[96,1], index: 2, kind: input, shape index: {}]
  %s3 = inlined_call_operand.vmem [shape: f32[96,96], index: 3, kind: input, shape index: {}]
  %s4 = inlined_call_operand.hbm [shape: f32[12,32,32], index: 4, kind: input, shape index: {}]
  %s5 = inlined_call_operand.vmem [shape: f32[20,32], index: 5, kind: input, shape index: {}]
  %s6 = inlined_call_operand.vmem [shape: f32[2,32], index: 6, kind: input, shape index: {}]
  %s7 = inlined_call_operand.vmem [shape: f32[32,32], index: 7, kind: input, shape index: {}]
  %s8 = inlined_call_operand.vmem [shape: f32[32,32], index: 8, kind: input, shape index: {}]
  %s9 = inlined_call_operand.vmem [shape: f32[32,1], index: 9, kind: output, shape index: {0}]
  %s10 = inlined_call_operand.vmem [shape: f32[32,1], index: 10, kind: output, shape index: {1}]
  %s11 = inlined_call_operand.hbm [shape: f32[8,8], index: 11, kind: output, shape index: {2}]
  %12 = xla_tuple %s9, %s10, %s11
  %s13 = sld [smem:[#allocation0]]
  $region66: #{tpu_custom_call.1} parent=0
    _
  %s15 = ssub.s32 1, %s13
  %s16 = scalar_select 0, %s15, %s13
  $region1: #{tpu_custom_call.1} parent=0
    #allocation2 [shape = 'u8[196608]{0}', space=vmem, size = 0x30000, scoped, tag = 'input window, operand 4, single buffered']
    #allocation3 [shape = 's32[1]{0}', space=sflag, size = 0x4, scoped, tag = 'scoped memory for tpu_custom_call.1']
    #allocation4 [shape = 's32[1]{0}', space=sflag, size = 0x4, scoped, tag = 'scoped memory for tpu_custom_call.1']
    #allocation5 [shape = 'u8[4096]{0}', space=vmem, size = 0x1000, scoped, tag = 'output window, operand 2, single buffered']
    %17 = vsyncpa [#allocation3], 0
    %18 = vsyncpa [#allocation4], 0
    // Predicated region
    $region2: #{tpu_custom_call.1} parent=1 // pred_check
      _
    $region3: #{tpu_custom_call.1} parent=1 // pred_check_branch
      %20 = sbr.rel (0) target = $region5
    $region4: #{tpu_custom_call.1} parent=1 // pred_region
      _
    $region5: #{tpu_custom_call.1} parent=1 // pred_fallthru
      _
    // Predicated region
    $region6: #{tpu_custom_call.1} parent=1 // pred_check
      _
    $region7: #{tpu_custom_call.1} parent=1 // pred_check_branch
      %22 = sbr.rel (0) target = $region9
    $region8: #{tpu_custom_call.1} parent=1 // pred_region
      _
    $region9: #{tpu_custom_call.1} parent=1 // pred_fallthru
      _
    // Predicated region
    $region10: #{tpu_custom_call.1} parent=1 // pred_check
      _
    $region11: #{tpu_custom_call.1} parent=1 // pred_check_branch
      %24 = sbr.rel (0) target = $region13
    $region12: #{tpu_custom_call.1} parent=1 // pred_region
      _
    $region13: #{tpu_custom_call.1} parent=1 // pred_fallthru
      _
    // Predicated region
    $region14: #{tpu_custom_call.1} parent=1 // pred_check
      _
    $region15: #{tpu_custom_call.1} parent=1 // pred_check_branch
      %26 = sbr.rel (0) target = $region17
    $region16: #{tpu_custom_call.1} parent=1 // pred_region
      _
    $region17: #{tpu_custom_call.1} parent=1 // pred_fallthru
      _
    // Predicated region
    $region18: #{tpu_custom_call.1} parent=1 // pred_check
      _
    $region19: #{tpu_custom_call.1} parent=1 // pred_check_branch
      %28 = sbr.rel (0) target = $region21
    $region20: #{tpu_custom_call.1} parent=1 // pred_region
      %s30 = ssub.s32 6144, 6144
      %31 = vsyncadd [#allocation3], %s30
      %s32 = sshll.u32 [#allocation2], 4
      %s33 = int_to_ptr.vmem [resolvable:$true] %s32
      %38 = dma.hbm_to_vmem [thread:$0]  %s4, 6144, %s33, [#allocation3], 128, 128, 8
    $region21: #{tpu_custom_call.1} parent=1 // pred_fallthru
      _
    // Predicated region
    $region22: #{tpu_custom_call.1} parent=1 // pred_check
      _
    $region23: #{tpu_custom_call.1} parent=1 // pred_check_branch
      %40 = sbr.rel (0) target = $region25
    $region24: #{tpu_custom_call.1} parent=1 // pred_region
      _
    $region25: #{tpu_custom_call.1} parent=1 // pred_fallthru
      _
    // Predicated region
    $region26: #{tpu_custom_call.1} parent=1 // pred_check
      _
    $region27: #{tpu_custom_call.1} parent=1 // pred_check_branch
      %42 = sbr.rel (0) target = $region29
    $region28: #{tpu_custom_call.1} parent=1 // pred_region
      _
    $region29: #{tpu_custom_call.1} parent=1 // pred_fallthru
      _
    // Predicated region
    $region30: #{tpu_custom_call.1} parent=1 // pred_check
      _
    $region31: #{tpu_custom_call.1} parent=1 // pred_check_branch
      %44 = sbr.rel (0) target = $region33
    $region32: #{tpu_custom_call.1} parent=1 // pred_region
      _
    $region33: #{tpu_custom_call.1} parent=1 // pred_fallthru
      _
    // Predicated region
    $region34: #{tpu_custom_call.1} parent=1 // pred_check
      _
    $region35: #{tpu_custom_call.1} parent=1 // pred_check_branch
      %46 = sbr.rel (0) target = $region37
    $region36: #{tpu_custom_call.1} parent=1 // pred_region
      _
    $region37: #{tpu_custom_call.1} parent=1 // pred_fallthru
      _
    // Predicated region
    $region38: #{tpu_custom_call.1} parent=1 // pred_check
      _
    $region39: #{tpu_custom_call.1} parent=1 // pred_check_branch
      %48 = sbr.rel (0) target = $region41
    $region40: #{tpu_custom_call.1} parent=1 // pred_region
      %49 = dma.done [#allocation3], 6144
    $region41: #{tpu_custom_call.1} parent=1 // pred_fallthru
      _
    %v50 = vld [vmem:[%s2] sm:$0xff]
    %v51 = vld [vmem:[%s2 + $0x8] sm:$0xff]
    %v52 = vld [vmem:[%s2 + $0x10] sm:$0xff]
    %v53 = vld [vmem:[%s2 + $0x18] sm:$0xff]
    %v54 = vld [vmem:[%s2 + $0x20] sm:$0xff]
    %v55 = vld [vmem:[%s2 + $0x28] sm:$0xff]
    %v56 = vld [vmem:[%s2 + $0x30] sm:$0xff]
    %v57 = vld [vmem:[%s2 + $0x38] sm:$0xff]
    %v58 = vld [vmem:[%s2 + $0x40] sm:$0xff]
    %v59 = vld [vmem:[%s2 + $0x48] sm:$0xff]
    %v60 = vld [vmem:[%s2 + $0x50] sm:$0xff]
    %v61 = vld [vmem:[%s2 + $0x58] sm:$0xff]
    %v62 = vld [vmem:[%s0] sm:$0xff]
    %v63 = vld [vmem:[%s0 + $0x8] sm:$0xff]
    %v64 = vld [vmem:[%s0 + $0x10] sm:$0xff]
    %v65 = vld [vmem:[%s0 + $0x18] sm:$0xff]
    %v66 = vld [vmem:[%s0 + $0x20] sm:$0xff]
    %v67 = vld [vmem:[%s0 + $0x28] sm:$0xff]
    %v68 = vld [vmem:[%s0 + $0x30] sm:$0xff]
    %v69 = vld [vmem:[%s0 + $0x38] sm:$0xff]
    %v70 = vld [vmem:[%s0 + $0x40] sm:$0xff]
    %v71 = vld [vmem:[%s0 + $0x48] sm:$0xff]
    %v72 = vld [vmem:[%s0 + $0x50] sm:$0xff]
    %v73 = vld [vmem:[%s0 + $0x58] sm:$0xff]
    %v74 = vmul.f32 %v62, 5.656854
    %v75 = vmul.f32 %v63, 5.656854
    %v76 = vmul.f32 %v64, 5.656854
    %v77 = vmul.f32 %v65, 5.656854
    %v78 = vmul.f32 %v66, 5.656854
    %v79 = vmul.f32 %v67, 5.656854
    %v80 = vmul.f32 %v68, 5.656854
    %v81 = vmul.f32 %v69, 5.656854
    %v82 = vmul.f32 %v70, 5.656854
    %v83 = vmul.f32 %v71, 5.656854
    %v84 = vmul.f32 %v72, 5.656854
    %v85 = vmul.f32 %v73, 5.656854
    %v86 = vld [vmem:[%s1] sm:$0xff]
    %v87 = vld [vmem:[%s1 + $0x8] sm:$0xff]
    %v88 = vld [vmem:[%s1 + $0x10] sm:$0xff]
    %v89 = vld [vmem:[%s1 + $0x18] sm:$0xff]
    %v90 = vld [vmem:[%s1 + $0x20] sm:$0xff]
    %v91 = vld [vmem:[%s1 + $0x28] sm:$0xff]
    %v92 = vld [vmem:[%s1 + $0x30] sm:$0xff]
    %v93 = vld [vmem:[%s1 + $0x38] sm:$0xff]
    %v94 = vld [vmem:[%s1 + $0x40] sm:$0xff]
    %v95 = vld [vmem:[%s1 + $0x48] sm:$0xff]
    %v96 = vld [vmem:[%s1 + $0x50] sm:$0xff]
    %v97 = vld [vmem:[%s1 + $0x58] sm:$0xff]
    %v98 = vadd.f32 %v74, %v86
    %v99 = vadd.f32 %v75, %v87
    %v100 = vadd.f32 %v76, %v88
    %v101 = vadd.f32 %v77, %v89
    %v102 = vadd.f32 %v78, %v90
    %v103 = vadd.f32 %v79, %v91
    %v104 = vadd.f32 %v80, %v92
    %v105 = vadd.f32 %v81, %v93
    %v106 = vadd.f32 %v82, %v94
    %v107 = vadd.f32 %v83, %v95
    %v108 = vadd.f32 %v84, %v96
    %v109 = vadd.f32 %v85, %v97
    %111 = vset.pattern.permute.xlu0 0
    %112 = vperm.xlu0 %111, %v50
    %v113 = vpop.permute.xlu0 %112
    %116 = vset.pattern.permute.xlu0 0
    %117 = vperm.xlu0 %116, %v51
    %v118 = vpop.permute.xlu0 %117
    %121 = vset.pattern.permute.xlu0 0
    %122 = vperm.xlu0 %121, %v52
    %v123 = vpop.permute.xlu0 %122
    %126 = vset.pattern.permute.xlu0 0
    %127 = vperm.xlu0 %126, %v53
    %v128 = vpop.permute.xlu0 %127
    %131 = vset.pattern.permute.xlu0 0
    %132 = vperm.xlu0 %131, %v54
    %v133 = vpop.permute.xlu0 %132
    %136 = vset.pattern.permute.xlu0 0
    %137 = vperm.xlu0 %136, %v55
    %v138 = vpop.permute.xlu0 %137
    %141 = vset.pattern.permute.xlu0 0
    %142 = vperm.xlu0 %141, %v56
    %v143 = vpop.permute.xlu0 %142
    %146 = vset.pattern.permute.xlu0 0
    %147 = vperm.xlu0 %146, %v57
    %v148 = vpop.permute.xlu0 %147
    %151 = vset.pattern.permute.xlu0 0
    %152 = vperm.xlu0 %151, %v58
    %v153 = vpop.permute.xlu0 %152
    %156 = vset.pattern.permute.xlu0 0
    %157 = vperm.xlu0 %156, %v59
    %v158 = vpop.permute.xlu0 %157
    %161 = vset.pattern.permute.xlu0 0
    %162 = vperm.xlu0 %161, %v60
    %v163 = vpop.permute.xlu0 %162
    %166 = vset.pattern.permute.xlu0 0
    %167 = vperm.xlu0 %166, %v61
    %v168 = vpop.permute.xlu0 %167
    %v170 = vmul.f32 %v98, %v113
    %v171 = vmul.f32 %v99, %v118
    %v172 = vmul.f32 %v100, %v123
    %v173 = vmul.f32 %v101, %v128
    %v174 = vmul.f32 %v102, %v133
    %v175 = vmul.f32 %v103, %v138
    %v176 = vmul.f32 %v104, %v143
    %v177 = vmul.f32 %v105, %v148
    %v178 = vmul.f32 %v106, %v153
    %v179 = vmul.f32 %v107, %v158
    %v180 = vmul.f32 %v108, %v163
    %v181 = vmul.f32 %v109, %v168
    %v182 = vld [vmem:[%s3] sm:$0xff]
    %v183 = vld [vmem:[%s3 + $0x8] sm:$0xff]
    %v184 = vld [vmem:[%s3 + $0x10] sm:$0xff]
    %v185 = vld [vmem:[%s3 + $0x18] sm:$0xff]
    %v186 = vld [vmem:[%s3 + $0x20] sm:$0xff]
    %v187 = vld [vmem:[%s3 + $0x28] sm:$0xff]
    %v188 = vld [vmem:[%s3 + $0x30] sm:$0xff]
    %v189 = vld [vmem:[%s3 + $0x38] sm:$0xff]
    %v190 = vld [vmem:[%s3 + $0x40] sm:$0xff]
    %v191 = vld [vmem:[%s3 + $0x48] sm:$0xff]
    %v192 = vld [vmem:[%s3 + $0x50] sm:$0xff]
    %v193 = vld [vmem:[%s3 + $0x58] sm:$0xff]
    %vm194 = vcmp.gt.f32.partialorder %v182, 0.5
    %vm195 = vcmp.gt.f32.partialorder %v183, 0.5
    %vm196 = vcmp.gt.f32.partialorder %v184, 0.5
    %vm197 = vcmp.gt.f32.partialorder %v185, 0.5
    %vm198 = vcmp.gt.f32.partialorder %v186, 0.5
    %vm199 = vcmp.gt.f32.partialorder %v187, 0.5
    %vm200 = vcmp.gt.f32.partialorder %v188, 0.5
    %vm201 = vcmp.gt.f32.partialorder %v189, 0.5
    %vm202 = vcmp.gt.f32.partialorder %v190, 0.5
    %vm203 = vcmp.gt.f32.partialorder %v191, 0.5
    %vm204 = vcmp.gt.f32.partialorder %v192, 0.5
    %vm205 = vcmp.gt.f32.partialorder %v193, 0.5
    %v206 = vlaneseq
    %v207 = vand.u32 %v206, 127
    %vm208 = vcmp.ge.s32.totalorder %v207, 0
    %vm209 = vcmp.lt.s32.totalorder %v207, 16
    %vm210 = vmand %vm208, %vm209
    %v211 = vsel %vm210, 1, 0
    %v212 = vcvt.s32.f32 %v211
    %vm213 = vcmp.ge.s32.totalorder %v207, 16
    %vm214 = vcmp.lt.s32.totalorder %v207, 32
    %vm215 = vmand %vm213, %vm214
    %v216 = vsel %vm215, 1, 0
    %v217 = vcvt.s32.f32 %v216
    %v218 = vld [vmem:[%s5] sm:$0x1]
    %v219 = vld [vmem:[%s5 + $0x1] sm:$0x1]
    %vm220 = vcmask 261120
    %v221 = vsel %vm220, %v170, 0.0
    %222 = vadd.xlane.f32.xlu0 %v221
    %v223 = vpop.xlane.xlu0 %222
    %v224 = vsel %vm220, %v171, 0.0
    %225 = vadd.xlane.f32.xlu0 %v224
    %v226 = vpop.xlane.xlu0 %225
    %v227 = vsel %vm220, %v172, 0.0
    %228 = vadd.xlane.f32.xlu0 %v227
    %v229 = vpop.xlane.xlu0 %228
    %v230 = vsel %vm220, %v173, 0.0
    %231 = vadd.xlane.f32.xlu0 %v230
    %v232 = vpop.xlane.xlu0 %231
    %v233 = vsel %vm220, %v174, 0.0
    %234 = vadd.xlane.f32.xlu0 %v233
    %v235 = vpop.xlane.xlu0 %234
    %v236 = vsel %vm220, %v175, 0.0
    %237 = vadd.xlane.f32.xlu0 %v236
    %v238 = vpop.xlane.xlu0 %237
    %v239 = vsel %vm220, %v176, 0.0
    %240 = vadd.xlane.f32.xlu0 %v239
    %v241 = vpop.xlane.xlu0 %240
    %v242 = vsel %vm220, %v177, 0.0
    %243 = vadd.xlane.f32.xlu0 %v242
    %v244 = vpop.xlane.xlu0 %243
    %v245 = vsel %vm220, %v178, 0.0
    %246 = vadd.xlane.f32.xlu0 %v245
    %v247 = vpop.xlane.xlu0 %246
    %v248 = vsel %vm220, %v179, 0.0
    %249 = vadd.xlane.f32.xlu0 %v248
    %v250 = vpop.xlane.xlu0 %249
    %v251 = vsel %vm220, %v180, 0.0
    %252 = vadd.xlane.f32.xlu0 %v251
    %v253 = vpop.xlane.xlu0 %252
    %v254 = vsel %vm220, %v181, 0.0
    %255 = vadd.xlane.f32.xlu0 %v254
    %v256 = vpop.xlane.xlu0 %255
    %v257 = vrcp.pop 32.0
    %v258 = vmul.f32 %v223, %v257
    %v259 = vmul.f32 %v226, %v257
    %v260 = vmul.f32 %v229, %v257
    %v261 = vmul.f32 %v232, %v257
    %v262 = vmul.f32 %v235, %v257
    %v263 = vmul.f32 %v238, %v257
    %v264 = vmul.f32 %v241, %v257
    %v265 = vmul.f32 %v244, %v257
    %v266 = vmul.f32 %v247, %v257
    %v267 = vmul.f32 %v250, %v257
    %v268 = vmul.f32 %v253, %v257
    %v269 = vmul.f32 %v256, %v257
    %v270 = vsub.f32 %v170, %v258
    %v271 = vsub.f32 %v171, %v259
    %v272 = vsub.f32 %v172, %v260
    %v273 = vsub.f32 %v173, %v261
    %v274 = vsub.f32 %v174, %v262
    %v275 = vsub.f32 %v175, %v263
    %v276 = vsub.f32 %v176, %v264
    %v277 = vsub.f32 %v177, %v265
    %v278 = vsub.f32 %v178, %v266
    %v279 = vsub.f32 %v179, %v267
    %v280 = vsub.f32 %v180, %v268
    %v281 = vsub.f32 %v181, %v269
    %v282 = vmul.f32 %v270, %v270
    %v283 = vmul.f32 %v271, %v271
    %v284 = vmul.f32 %v272, %v272
    %v285 = vmul.f32 %v273, %v273
    %v286 = vmul.f32 %v274, %v274
    %v287 = vmul.f32 %v275, %v275
    %v288 = vmul.f32 %v276, %v276
    %v289 = vmul.f32 %v277, %v277
    %v290 = vmul.f32 %v278, %v278
    %v291 = vmul.f32 %v279, %v279
    %v292 = vmul.f32 %v280, %v280
    %v293 = vmul.f32 %v281, %v281
    %v294 = vsel %vm220, %v282, 0.0
    %295 = vadd.xlane.f32.xlu0 %v294
    %v296 = vpop.xlane.xlu0 %295
    %v297 = vsel %vm220, %v283, 0.0
    %298 = vadd.xlane.f32.xlu0 %v297
    %v299 = vpop.xlane.xlu0 %298
    %v300 = vsel %vm220, %v284, 0.0
    %301 = vadd.xlane.f32.xlu0 %v300
    %v302 = vpop.xlane.xlu0 %301
    %v303 = vsel %vm220, %v285, 0.0
    %304 = vadd.xlane.f32.xlu0 %v303
    %v305 = vpop.xlane.xlu0 %304
    %v306 = vsel %vm220, %v286, 0.0
    %307 = vadd.xlane.f32.xlu0 %v306
    %v308 = vpop.xlane.xlu0 %307
    %v309 = vsel %vm220, %v287, 0.0
    %310 = vadd.xlane.f32.xlu0 %v309
    %v311 = vpop.xlane.xlu0 %310
    %v312 = vsel %vm220, %v288, 0.0
    %313 = vadd.xlane.f32.xlu0 %v312
    %v314 = vpop.xlane.xlu0 %313
    %v315 = vsel %vm220, %v289, 0.0
    %316 = vadd.xlane.f32.xlu0 %v315
    %v317 = vpop.xlane.xlu0 %316
    %v318 = vsel %vm220, %v290, 0.0
    %319 = vadd.xlane.f32.xlu0 %v318
    %v320 = vpop.xlane.xlu0 %319
    %v321 = vsel %vm220, %v291, 0.0
    %322 = vadd.xlane.f32.xlu0 %v321
    %v323 = vpop.xlane.xlu0 %322
    %v324 = vsel %vm220, %v292, 0.0
    %325 = vadd.xlane.f32.xlu0 %v324
    %v326 = vpop.xlane.xlu0 %325
    %v327 = vsel %vm220, %v293, 0.0
    %328 = vadd.xlane.f32.xlu0 %v327
    %v329 = vpop.xlane.xlu0 %328
    %v330 = vmul.f32 %v296, %v257
    %v331 = vmul.f32 %v299, %v257
    %v332 = vmul.f32 %v302, %v257
    %v333 = vmul.f32 %v305, %v257
    %v334 = vmul.f32 %v308, %v257
    %v335 = vmul.f32 %v311, %v257
    %v336 = vmul.f32 %v314, %v257
    %v337 = vmul.f32 %v317, %v257
    %v338 = vmul.f32 %v320, %v257
    %v339 = vmul.f32 %v323, %v257
    %v340 = vmul.f32 %v326, %v257
    %v341 = vmul.f32 %v329, %v257
    %v342 = vadd.f32 %v330, 1e-08
    %v343 = vadd.f32 %v331, 1e-08
    %v344 = vadd.f32 %v332, 1e-08
    %v345 = vadd.f32 %v333, 1e-08
    %v346 = vadd.f32 %v334, 1e-08
    %v347 = vadd.f32 %v335, 1e-08
    %v348 = vadd.f32 %v336, 1e-08
    %v349 = vadd.f32 %v337, 1e-08
    %v350 = vadd.f32 %v338, 1e-08
    %v351 = vadd.f32 %v339, 1e-08
    %v352 = vadd.f32 %v340, 1e-08
    %v353 = vadd.f32 %v341, 1e-08
    %v354 = vrsqrt.pop %v342
    %v355 = vrsqrt.pop %v343
    %v356 = vrsqrt.pop %v344
    %v357 = vrsqrt.pop %v345
    %v358 = vrsqrt.pop %v346
    %v359 = vrsqrt.pop %v347
    %v360 = vrsqrt.pop %v348
    %v361 = vrsqrt.pop %v349
    %v362 = vrsqrt.pop %v350
    %v363 = vrsqrt.pop %v351
    %v364 = vrsqrt.pop %v352
    %v365 = vrsqrt.pop %v353
    %v366 = vmul.f32 %v270, %v354
    %v367 = vmul.f32 %v271, %v355
    %v368 = vmul.f32 %v272, %v356
    %v369 = vmul.f32 %v273, %v357
    %v370 = vmul.f32 %v274, %v358
    %v371 = vmul.f32 %v275, %v359
    %v372 = vmul.f32 %v276, %v360
    %v373 = vmul.f32 %v277, %v361
    %v374 = vmul.f32 %v278, %v362
    %v375 = vmul.f32 %v279, %v363
    %v376 = vmul.f32 %v280, %v364
    %v377 = vmul.f32 %v281, %v365
    %v378 = vlaneseq
    %v379 = vshrl.u32 %v378, 7
    %v380 = vsub.s32 0, %v379
    %v381 = vrot.slane %v218, %v380
    %v382 = vmul.f32 %v366, %v381
    %v383 = vmul.f32 %v367, %v381
    %v384 = vmul.f32 %v368, %v381
    %v385 = vmul.f32 %v369, %v381
    %v386 = vmul.f32 %v370, %v381
    %v387 = vmul.f32 %v371, %v381
    %v388 = vmul.f32 %v372, %v381
    %v389 = vmul.f32 %v373, %v381
    %v390 = vmul.f32 %v374, %v381
    %v391 = vmul.f32 %v375, %v381
    %v392 = vmul.f32 %v376, %v381
    %v393 = vmul.f32 %v377, %v381
    %v394 = vlaneseq
    %v395 = vshrl.u32 %v394, 7
    %v396 = vsub.s32 0, %v395
    %v397 = vrot.slane %v219, %v396
    %v398 = vadd.f32 %v382, %v397
    %v399 = vadd.f32 %v383, %v397
    %v400 = vadd.f32 %v384, %v397
    %v401 = vadd.f32 %v385, %v397
    %v402 = vadd.f32 %v386, %v397
    %v403 = vadd.f32 %v387, %v397
    %v404 = vadd.f32 %v388, %v397
    %v405 = vadd.f32 %v389, %v397
    %v406 = vadd.f32 %v390, %v397
    %v407 = vadd.f32 %v391, %v397
    %v408 = vadd.f32 %v392, %v397
    %v409 = vadd.f32 %v393, %v397
    %v410 = vld [vmem:[#allocation2] sm:$0xff]
    %v411 = vld [vmem:[#allocation2 + $0x8] sm:$0xff]
    %v412 = vld [vmem:[#allocation2 + $0x10] sm:$0xff]
    %v413 = vld [vmem:[#allocation2 + $0x18] sm:$0xff]
    %v414 = vld [vmem:[%s5 + $0x2] sm:$0x1]
    %v415 = vlaneseq
    %v416 = vshrl.u32 %v415, 7
    %v417 = vsub.s32 0, %v416
    %v418 = vrot.slane %v414, %v417
    %v420 = vsel %vm220, %v398, 0
    %v423 = vsel %vm220, %v399, 0
    %v426 = vsel %vm220, %v400, 0
    %v429 = vsel %vm220, %v401, 0
    %v432 = vsel %vm220, %v402, 0
    %v435 = vsel %vm220, %v403, 0
    %v438 = vsel %vm220, %v404, 0
    %v441 = vsel %vm220, %v405, 0
    %v444 = vsel %vm220, %v406, 0
    %v447 = vsel %vm220, %v407, 0
    %v450 = vsel %vm220, %v408, 0
    %v453 = vsel %vm220, %v409, 0
    %455 = vmatprep.subr.mxu0 0.0
    %456 = vmatpush1.msra.mxu0 %v410
    %457 = vmatprep.subr.mxu0 0.0
    %458 = vmatpush1.msra.mxu0 %v411
    %459 = vmatprep.subr.mxu0 0.0
    %460 = vmatpush1.msra.mxu0 %v412
    %461 = vmatprep.subr.mxu0 0.0
    %462 = vmatpush1.msra.mxu0 %v413
    %463 = vmatprep.subr.mxu0 0.0
    %464 = vmatpush1.msra.mxu0 0.0
    %465 = vmatprep.subr.mxu0 0.0
    %466 = vmatpush1.msra.mxu0 0.0
    %467 = vmatprep.subr.mxu0 0.0
    %468 = vmatpush1.msra.mxu0 0.0
    %469 = vmatprep.subr.mxu0 0.0
    %470 = vmatpush1.msra.mxu0 0.0
    %471 = vmatprep.subr.mxu0 0.0
    %472 = vmatpush1.msra.mxu0 0.0
    %473 = vmatprep.subr.mxu0 0.0
    %474 = vmatpush1.msra.mxu0 0.0
    %475 = vmatprep.subr.mxu0 0.0
    %476 = vmatpush1.msra.mxu0 0.0
    %477 = vmatprep.subr.mxu0 0.0
    %478 = vmatpush1.msra.mxu0 0.0
    %479 = vmatprep.subr.mxu0 0.0
    %480 = vmatpush1.msra.mxu0 0.0
    %481 = vmatprep.subr.mxu0 0.0
    %482 = vmatpush1.msra.mxu0 0.0
    %483 = vmatprep.subr.mxu0 0.0
    %484 = vmatpush1.msra.mxu0 0.0
    %485 = vmatprep.subr.mxu0 0.0
    %486 = vmatpush1.msra.mxu0 0.0
    %487 = vmatprep.subr.mxu0 0.0
    %488 = vmatpush1.msra.mxu0 0.0
    %489 = vmatprep.subr.mxu0 0.0
    %490 = vmatpush1.msra.mxu0 0.0
    %491 = vmatprep.subr.mxu0 0.0
    %492 = vmatpush1.msra.mxu0 0.0
    %493 = vmatprep.subr.mxu0 0.0
    %494 = vmatpush1.msra.mxu0 0.0
    %495 = vmatprep.subr.mxu0 0.0
    %496 = vmatpush1.msra.mxu0 0.0
    %497 = vmatprep.subr.mxu0 0.0
    %498 = vmatpush1.msra.mxu0 0.0
    %499 = vmatprep.subr.mxu0 0.0
    %500 = vmatpush1.msra.mxu0 0.0
    %501 = vmatprep.subr.mxu0 0.0
    %502 = vmatpush1.msra.mxu0 0.0
    %503 = vmatprep.subr.mxu0 0.0
    %504 = vmatpush1.msra.mxu0 0.0
    %505 = vmatprep.subr.mxu0 0.0
    %506 = vmatpush1.msra.mxu0 0.0
    %507 = vmatprep.subr.mxu0 0.0
    %508 = vmatpush1.msra.mxu0 0.0
    %509 = vmatprep.subr.mxu0 0.0
    %510 = vmatpush1.msra.mxu0 0.0
    %511 = vmatprep.subr.mxu0 0.0
    %512 = vmatpush1.msra.mxu0 0.0
    %513 = vmatprep.subr.mxu0 0.0
    %514 = vmatpush1.msra.mxu0 0.0
    %515 = vmatprep.subr.mxu0 0.0
    %516 = vmatpush1.msra.mxu0 0.0
    %517 = vmatprep.subr.mxu0 0.0
    %518 = vmatpush1.msra.mxu0 0.0
    %519 = vmatprep.mubr.f32.mxu0 0.0
    %520 = vmatmul.mubr.f32.gmra.mrb[0].mxu0 %v420
    %v521 = vpop.f32.mrb[0].mxu0
    %v522 = vadd.f32 %v418, %v521
    %v523 = vpop.f32.mrb[0].mxu0
    %524 = vmatprep.mubr.f32.mxu0 0.0
    %525 = vmatmul.mubr.f32.gmra.mrb[0].mxu0 %v423
    %v526 = vpop.f32.mrb[0].mxu0
    %v527 = vadd.f32 %v418, %v526
    %v528 = vpop.f32.mrb[0].mxu0
    %529 = vmatprep.mubr.f32.mxu0 0.0
    %530 = vmatmul.mubr.f32.gmra.mrb[0].mxu0 %v426
    %v531 = vpop.f32.mrb[0].mxu0
    %v532 = vadd.f32 %v418, %v531
    %v533 = vpop.f32.mrb[0].mxu0
    %534 = vmatprep.mubr.f32.mxu0 0.0
    %535 = vmatmul.mubr.f32.gmra.mrb[0].mxu0 %v429
    %v536 = vpop.f32.mrb[0].mxu0
    %v537 = vadd.f32 %v418, %v536
    %v538 = vpop.f32.mrb[0].mxu0
    %539 = vmatprep.mubr.f32.mxu0 0.0
    %540 = vmatmul.mubr.f32.gmra.mrb[0].mxu0 %v432
    %v541 = vpop.f32.mrb[0].mxu0
    %v542 = vadd.f32 %v418, %v541
    %v543 = vpop.f32.mrb[0].mxu0
    %544 = vmatprep.mubr.f32.mxu0 0.0
    %545 = vmatmul.mubr.f32.gmra.mrb[0].mxu0 %v435
    %v546 = vpop.f32.mrb[0].mxu0
    %v547 = vadd.f32 %v418, %v546
    %v548 = vpop.f32.mrb[0].mxu0
    %549 = vmatprep.mubr.f32.mxu0 0.0
    %550 = vmatmul.mubr.f32.gmra.mrb[0].mxu0 %v438
    %v551 = vpop.f32.mrb[0].mxu0
    %v552 = vadd.f32 %v418, %v551
    %v553 = vpop.f32.mrb[0].mxu0
    %554 = vmatprep.mubr.f32.mxu0 0.0
    %555 = vmatmul.mubr.f32.gmra.mrb[0].mxu0 %v441
    %v556 = vpop.f32.mrb[0].mxu0
    %v557 = vadd.f32 %v418, %v556
    %v558 = vpop.f32.mrb[0].mxu0
    %559 = vmatprep.mubr.f32.mxu0 0.0
    %560 = vmatmul.mubr.f32.gmra.mrb[0].mxu0 %v444
    %v561 = vpop.f32.mrb[0].mxu0
    %v562 = vadd.f32 %v418, %v561
    %v563 = vpop.f32.mrb[0].mxu0
    %564 = vmatprep.mubr.f32.mxu0 0.0
    %565 = vmatmul.mubr.f32.gmra.mrb[0].mxu0 %v447
    %v566 = vpop.f32.mrb[0].mxu0
    %v567 = vadd.f32 %v418, %v566
    %v568 = vpop.f32.mrb[0].mxu0
    %569 = vmatprep.mubr.f32.mxu0 0.0
    %570 = vmatmul.mubr.f32.gmra.mrb[0].mxu0 %v450
    %v571 = vpop.f32.mrb[0].mxu0
    %v572 = vadd.f32 %v418, %v571
    %v573 = vpop.f32.mrb[0].mxu0
    %574 = vmatprep.mubr.f32.mxu0 0.0
    %575 = vmatmul.mubr.f32.gmra.mrb[0].mxu0 %v453
    %v576 = vpop.f32.mrb[0].mxu0
    %v577 = vadd.f32 %v418, %v576
    %v578 = vpop.f32.mrb[0].mxu0
    %579 = vdwg.mxu0
    %s580 = scalar_lea.vmem [#allocation2], 32
    %v581 = vld [vmem:[%s580] sm:$0xff]
    %v582 = vld [vmem:[%s580 + $0x8] sm:$0xff]
    %v583 = vld [vmem:[%s580 + $0x10] sm:$0xff]
    %v584 = vld [vmem:[%s580 + $0x18] sm:$0xff]
    %v585 = vld [vmem:[%s5 + $0x3] sm:$0x1]
    %v586 = vlaneseq
    %v587 = vshrl.u32 %v586, 7
    %v588 = vsub.s32 0, %v587
    %v589 = vrot.slane %v585, %v588
    %v591 = vsel %vm220, %v170, 0
    %v594 = vsel %vm220, %v171, 0
    %v597 = vsel %vm220, %v172, 0
    %v600 = vsel %vm220, %v173, 0
    %v603 = vsel %vm220, %v174, 0
    %v606 = vsel %vm220, %v175, 0
    %v609 = vsel %vm220, %v176, 0
    %v612 = vsel %vm220, %v177, 0
    %v615 = vsel %vm220, %v178, 0
    %v618 = vsel %vm220, %v179, 0
    %v621 = vsel %vm220, %v180, 0
    %v624 = vsel %vm220, %v181, 0
    %626 = vmatprep.subr.mxu0 0.0
    %627 = vmatpush1.msra.mxu0 %v581
    %628 = vmatprep.subr.mxu0 0.0
    %629 = vmatpush1.msra.mxu0 %v582
    %630 = vmatprep.subr.mxu0 0.0
    %631 = vmatpush1.msra.mxu0 %v583
    %632 = vmatprep.subr.mxu0 0.0
    %633 = vmatpush1.msra.mxu0 %v584
    %634 = vmatprep.subr.mxu0 0.0
    %635 = vmatpush1.msra.mxu0 0.0
    %636 = vmatprep.subr.mxu0 0.0
    %637 = vmatpush1.msra.mxu0 0.0
    %638 = vmatprep.subr.mxu0 0.0
    %639 = vmatpush1.msra.mxu0 0.0
    %640 = vmatprep.subr.mxu0 0.0
    %641 = vmatpush1.msra.mxu0 0.0
    %642 = vmatprep.subr.mxu0 0.0
    %643 = vmatpush1.msra.mxu0 0.0
    %644 = vmatprep.subr.mxu0 0.0
    %645 = vmatpush1.msra.mxu0 0.0
    %646 = vmatprep.subr.mxu0 0.0
    %647 = vmatpush1.msra.mxu0 0.0
    %648 = vmatprep.subr.mxu0 0.0
    %649 = vmatpush1.msra.mxu0 0.0
    %650 = vmatprep.subr.mxu0 0.0
    %651 = vmatpush1.msra.mxu0 0.0
    %652 = vmatprep.subr.mxu0 0.0
    %653 = vmatpush1.msra.mxu0 0.0
    %654 = vmatprep.subr.mxu0 0.0
    %655 = vmatpush1.msra.mxu0 0.0
    %656 = vmatprep.subr.mxu0 0.0
    %657 = vmatpush1.msra.mxu0 0.0
    %658 = vmatprep.subr.mxu0 0.0
    %659 = vmatpush1.msra.mxu0 0.0
    %660 = vmatprep.subr.mxu0 0.0
    %661 = vmatpush1.msra.mxu0 0.0
    %662 = vmatprep.subr.mxu0 0.0
    %663 = vmatpush1.msra.mxu0 0.0
    %664 = vmatprep.subr.mxu0 0.0
    %665 = vmatpush1.msra.mxu0 0.0
    %666 = vmatprep.subr.mxu0 0.0
    %667 = vmatpush1.msra.mxu0 0.0
    %668 = vmatprep.subr.mxu0 0.0
    %669 = vmatpush1.msra.mxu0 0.0
    %670 = vmatprep.subr.mxu0 0.0
    %671 = vmatpush1.msra.mxu0 0.0
    %672 = vmatprep.subr.mxu0 0.0
    %673 = vmatpush1.msra.mxu0 0.0
    %674 = vmatprep.subr.mxu0 0.0
    %675 = vmatpush1.msra.mxu0 0.0
    %676 = vmatprep.subr.mxu0 0.0
    %677 = vmatpush1.msra.mxu0 0.0
    %678 = vmatprep.subr.mxu0 0.0
    %679 = vmatpush1.msra.mxu0 0.0
    %680 = vmatprep.subr.mxu0 0.0
    %681 = vmatpush1.msra.mxu0 0.0
    %682 = vmatprep.subr.mxu0 0.0
    %683 = vmatpush1.msra.mxu0 0.0
    %684 = vmatprep.subr.mxu0 0.0
    %685 = vmatpush1.msra.mxu0 0.0
    %686 = vmatprep.subr.mxu0 0.0
    %687 = vmatpush1.msra.mxu0 0.0
    %688 = vmatprep.subr.mxu0 0.0
    %689 = vmatpush1.msra.mxu0 0.0
    %690 = vmatprep.mubr.f32.mxu0 0.0
    %691 = vmatmul.mubr.f32.gmra.mrb[0].mxu0 %v591
    %v692 = vpop.f32.mrb[0].mxu0
    %v693 = vadd.f32 %v589, %v692
    %v694 = vpop.f32.mrb[0].mxu0
    %695 = vmatprep.mubr.f32.mxu0 0.0
    %696 = vmatmul.mubr.f32.gmra.mrb[0].mxu0 %v594
    %v697 = vpop.f32.mrb[0].mxu0
    %v698 = vadd.f32 %v589, %v697
    %v699 = vpop.f32.mrb[0].mxu0
    %700 = vmatprep.mubr.f32.mxu0 0.0
    %701 = vmatmul.mubr.f32.gmra.mrb[0].mxu0 %v597
    %v702 = vpop.f32.mrb[0].mxu0
    %v703 = vadd.f32 %v589, %v702
    %v704 = vpop.f32.mrb[0].mxu0
    %705 = vmatprep.mubr.f32.mxu0 0.0
    %706 = vmatmul.mubr.f32.gmra.mrb[0].mxu0 %v600
    %v707 = vpop.f32.mrb[0].mxu0
    %v708 = vadd.f32 %v589, %v707
    %v709 = vpop.f32.mrb[0].mxu0
    %710 = vmatprep.mubr.f32.mxu0 0.0
    %711 = vmatmul.mubr.f32.gmra.mrb[0].mxu0 %v603
    %v712 = vpop.f32.mrb[0].mxu0
    %v713 = vadd.f32 %v589, %v712
    %v714 = vpop.f32.mrb[0].mxu0
    %715 = vmatprep.mubr.f32.mxu0 0.0
    %716 = vmatmul.mubr.f32.gmra.mrb[0].mxu0 %v606
    %v717 = vpop.f32.mrb[0].mxu0
    %v718 = vadd.f32 %v589, %v717
    %v719 = vpop.f32.mrb[0].mxu0
    %720 = vmatprep.mubr.f32.mxu0 0.0
    %721 = vmatmul.mubr.f32.gmra.mrb[0].mxu0 %v609
    %v722 = vpop.f32.mrb[0].mxu0
    %v723 = vadd.f32 %v589, %v722
    %v724 = vpop.f32.mrb[0].mxu0
    %725 = vmatprep.mubr.f32.mxu0 0.0
    %726 = vmatmul.mubr.f32.gmra.mrb[0].mxu0 %v612
    %v727 = vpop.f32.mrb[0].mxu0
    %v728 = vadd.f32 %v589, %v727
    %v729 = vpop.f32.mrb[0].mxu0
    %730 = vmatprep.mubr.f32.mxu0 0.0
    %731 = vmatmul.mubr.f32.gmra.mrb[0].mxu0 %v615
    %v732 = vpop.f32.mrb[0].mxu0
    %v733 = vadd.f32 %v589, %v732
    %v734 = vpop.f32.mrb[0].mxu0
    %735 = vmatprep.mubr.f32.mxu0 0.0
    %736 = vmatmul.mubr.f32.gmra.mrb[0].mxu0 %v618
    %v737 = vpop.f32.mrb[0].mxu0
    %v738 = vadd.f32 %v589, %v737
    %v739 = vpop.f32.mrb[0].mxu0
    %740 = vmatprep.mubr.f32.mxu0 0.0
    %741 = vmatmul.mubr.f32.gmra.mrb[0].mxu0 %v621
    %v742 = vpop.f32.mrb[0].mxu0
    %v743 = vadd.f32 %v589, %v742
    %v744 = vpop.f32.mrb[0].mxu0
    %745 = vmatprep.mubr.f32.mxu0 0.0
    %746 = vmatmul.mubr.f32.gmra.mrb[0].mxu0 %v624
    %v747 = vpop.f32.mrb[0].mxu0
    %v748 = vadd.f32 %v589, %v747
    %v749 = vpop.f32.mrb[0].mxu0
    %750 = vdwg.mxu0
    %s751 = scalar_lea.vmem [#allocation2], 64
    %v752 = vld [vmem:[%s751] sm:$0xff]
    %v753 = vld [vmem:[%s751 + $0x8] sm:$0xff]
    %v754 = vld [vmem:[%s751 + $0x10] sm:$0xff]
    %v755 = vld [vmem:[%s751 + $0x18] sm:$0xff]
    %v756 = vld [vmem:[%s5 + $0x4] sm:$0x1]
    %v757 = vlaneseq
    %v758 = vshrl.u32 %v757, 7
    %v759 = vsub.s32 0, %v758
    %v760 = vrot.slane %v756, %v759
    %761 = vmatprep.subr.mxu0 0.0
    %762 = vmatpush1.msra.mxu0 %v752
    %763 = vmatprep.subr.mxu0 0.0
    %764 = vmatpush1.msra.mxu0 %v753
    %765 = vmatprep.subr.mxu0 0.0
    %766 = vmatpush1.msra.mxu0 %v754
    %767 = vmatprep.subr.mxu0 0.0
    %768 = vmatpush1.msra.mxu0 %v755
    %769 = vmatprep.subr.mxu0 0.0
    %770 = vmatpush1.msra.mxu0 0.0
    %771 = vmatprep.subr.mxu0 0.0
    %772 = vmatpush1.msra.mxu0 0.0
    %773 = vmatprep.subr.mxu0 0.0
    %774 = vmatpush1.msra.mxu0 0.0
    %775 = vmatprep.subr.mxu0 0.0
    %776 = vmatpush1.msra.mxu0 0.0
    %777 = vmatprep.subr.mxu0 0.0
    %778 = vmatpush1.msra.mxu0 0.0
    %779 = vmatprep.subr.mxu0 0.0
    %780 = vmatpush1.msra.mxu0 0.0
    %781 = vmatprep.subr.mxu0 0.0
    %782 = vmatpush1.msra.mxu0 0.0
    %783 = vmatprep.subr.mxu0 0.0
    %784 = vmatpush1.msra.mxu0 0.0
    %785 = vmatprep.subr.mxu0 0.0
    %786 = vmatpush1.msra.mxu0 0.0
    %787 = vmatprep.subr.mxu0 0.0
    %788 = vmatpush1.msra.mxu0 0.0
    %789 = vmatprep.subr.mxu0 0.0
    %790 = vmatpush1.msra.mxu0 0.0
    %791 = vmatprep.subr.mxu0 0.0
    %792 = vmatpush1.msra.mxu0 0.0
    %793 = vmatprep.subr.mxu0 0.0
    %794 = vmatpush1.msra.mxu0 0.0
    %795 = vmatprep.subr.mxu0 0.0
    %796 = vmatpush1.msra.mxu0 0.0
    %797 = vmatprep.subr.mxu0 0.0
    %798 = vmatpush1.msra.mxu0 0.0
    %799 = vmatprep.subr.mxu0 0.0
    %800 = vmatpush1.msra.mxu0 0.0
    %801 = vmatprep.subr.mxu0 0.0
    %802 = vmatpush1.msra.mxu0 0.0
    %803 = vmatprep.subr.mxu0 0.0
    %804 = vmatpush1.msra.mxu0 0.0
    %805 = vmatprep.subr.mxu0 0.0
    %806 = vmatpush1.msra.mxu0 0.0
    %807 = vmatprep.subr.mxu0 0.0
    %808 = vmatpush1.msra.mxu0 0.0
    %809 = vmatprep.subr.mxu0 0.0
    %810 = vmatpush1.msra.mxu0 0.0
    %811 = vmatprep.subr.mxu0 0.0
    %812 = vmatpush1.msra.mxu0 0.0
    %813 = vmatprep.subr.mxu0 0.0
    %814 = vmatpush1.msra.mxu0 0.0
    %815 = vmatprep.subr.mxu0 0.0
    %816 = vmatpush1.msra.mxu0 0.0
    %817 = vmatprep.subr.mxu0 0.0
    %818 = vmatpush1.msra.mxu0 0.0
    %819 = vmatprep.subr.mxu0 0.0
    %820 = vmatpush1.msra.mxu0 0.0
    %821 = vmatprep.subr.mxu0 0.0
    %822 = vmatpush1.msra.mxu0 0.0
    %823 = vmatprep.subr.mxu0 0.0
    %824 = vmatpush1.msra.mxu0 0.0
    %825 = vmatprep.mubr.f32.mxu0 0.0
    %826 = vmatmul.mubr.f32.gmra.mrb[0].mxu0 %v591
    %v827 = vpop.f32.mrb[0].mxu0
    %v828 = vadd.f32 %v760, %v827
    %v829 = vpop.f32.mrb[0].mxu0
    %830 = vmatprep.mubr.f32.mxu0 0.0
    %831 = vmatmul.mubr.f32.gmra.mrb[0].mxu0 %v594
    %v832 = vpop.f32.mrb[0].mxu0
    %v833 = vadd.f32 %v760, %v832
    %v834 = vpop.f32.mrb[0].mxu0
    %835 = vmatprep.mubr.f32.mxu0 0.0
    %836 = vmatmul.mubr.f32.gmra.mrb[0].mxu0 %v597
    %v837 = vpop.f32.mrb[0].mxu0
    %v838 = vadd.f32 %v760, %v837
    %v839 = vpop.f32.mrb[0].mxu0
    %840 = vmatprep.mubr.f32.mxu0 0.0
    %841 = vmatmul.mubr.f32.gmra.mrb[0].mxu0 %v600
    %v842 = vpop.f32.mrb[0].mxu0
    %v843 = vadd.f32 %v760, %v842
    %v844 = vpop.f32.mrb[0].mxu0
    %845 = vmatprep.mubr.f32.mxu0 0.0
    %846 = vmatmul.mubr.f32.gmra.mrb[0].mxu0 %v603
    %v847 = vpop.f32.mrb[0].mxu0
    %v848 = vadd.f32 %v760, %v847
    %v849 = vpop.f32.mrb[0].mxu0
    %850 = vmatprep.mubr.f32.mxu0 0.0
    %851 = vmatmul.mubr.f32.gmra.mrb[0].mxu0 %v606
    %v852 = vpop.f32.mrb[0].mxu0
    %v853 = vadd.f32 %v760, %v852
    %v854 = vpop.f32.mrb[0].mxu0
    %855 = vmatprep.mubr.f32.mxu0 0.0
    %856 = vmatmul.mubr.f32.gmra.mrb[0].mxu0 %v609
    %v857 = vpop.f32.mrb[0].mxu0
    %v858 = vadd.f32 %v760, %v857
    %v859 = vpop.f32.mrb[0].mxu0
    %860 = vmatprep.mubr.f32.mxu0 0.0
    %861 = vmatmul.mubr.f32.gmra.mrb[0].mxu0 %v612
    %v862 = vpop.f32.mrb[0].mxu0
    %v863 = vadd.f32 %v760, %v862
    %v864 = vpop.f32.mrb[0].mxu0
    %865 = vmatprep.mubr.f32.mxu0 0.0
    %866 = vmatmul.mubr.f32.gmra.mrb[0].mxu0 %v615
    %v867 = vpop.f32.mrb[0].mxu0
    %v868 = vadd.f32 %v760, %v867
    %v869 = vpop.f32.mrb[0].mxu0
    %870 = vmatprep.mubr.f32.mxu0 0.0
    %871 = vmatmul.mubr.f32.gmra.mrb[0].mxu0 %v618
    %v872 = vpop.f32.mrb[0].mxu0
    %v873 = vadd.f32 %v760, %v872
    %v874 = vpop.f32.mrb[0].mxu0
    %875 = vmatprep.mubr.f32.mxu0 0.0
    %876 = vmatmul.mubr.f32.gmra.mrb[0].mxu0 %v621
    %v877 = vpop.f32.mrb[0].mxu0
    %v878 = vadd.f32 %v760, %v877
    %v879 = vpop.f32.mrb[0].mxu0
    %880 = vmatprep.mubr.f32.mxu0 0.0
    %881 = vmatmul.mubr.f32.gmra.mrb[0].mxu0 %v624
    %v882 = vpop.f32.mrb[0].mxu0
    %v883 = vadd.f32 %v760, %v882
    %v884 = vpop.f32.mrb[0].mxu0
    %885 = vdwg.mxu0
    %v886 = vmul.f32 %v522, %v212
    %v887 = vmul.f32 %v527, %v212
    %v888 = vmul.f32 %v532, %v212
    %v889 = vmul.f32 %v537, %v212
    %v890 = vmul.f32 %v542, %v212
    %v891 = vmul.f32 %v547, %v212
    %v892 = vmul.f32 %v552, %v212
    %v893 = vmul.f32 %v557, %v212
    %v894 = vmul.f32 %v562, %v212
    %v895 = vmul.f32 %v567, %v212
    %v896 = vmul.f32 %v572, %v212
    %v897 = vmul.f32 %v577, %v212
    %v899 = vsel %vm220, %v886, 0
    %v902 = vsel %vm220, %v887, 0
    %v905 = vsel %vm220, %v888, 0
    %v908 = vsel %vm220, %v889, 0
    %v911 = vsel %vm220, %v890, 0
    %v914 = vsel %vm220, %v891, 0
    %v917 = vsel %vm220, %v892, 0
    %v920 = vsel %vm220, %v893, 0
    %v923 = vsel %vm220, %v894, 0
    %v926 = vsel %vm220, %v895, 0
    %v929 = vsel %vm220, %v896, 0
    %v932 = vsel %vm220, %v897, 0
    %v935 = vsel %vm220, %v693, 0
    %v938 = vsel %vm220, %v698, 0
    %v941 = vsel %vm220, %v703, 0
    %v944 = vsel %vm220, %v708, 0
    %v947 = vsel %vm220, %v713, 0
    %v950 = vsel %vm220, %v718, 0
    %v953 = vsel %vm220, %v723, 0
    %v956 = vsel %vm220, %v728, 0
    %v959 = vsel %vm220, %v733, 0
    %v962 = vsel %vm220, %v738, 0
    %v965 = vsel %vm220, %v743, 0
    %v968 = vsel %vm220, %v748, 0
    %970 = vmatprep.subr.mxu0 0.0
    %971 = vmatpush1.xpose.msra.mxu0 %v935
    %972 = vmatprep.subr.mxu0 0.0
    %973 = vmatpush1.xpose.msra.mxu0 %v938
    %974 = vmatprep.subr.mxu0 0.0
    %975 = vmatpush1.xpose.msra.mxu0 %v941
    %976 = vmatprep.subr.mxu0 0.0
    %977 = vmatpush1.xpose.msra.mxu0 %v944
    %978 = vmatprep.subr.mxu0 0.0
    %979 = vmatpush1.xpose.msra.mxu0 %v947
    %980 = vmatprep.subr.mxu0 0.0
    %981 = vmatpush1.xpose.msra.mxu0 %v950
    %982 = vmatprep.subr.mxu0 0.0
    %983 = vmatpush1.xpose.msra.mxu0 %v953
    %984 = vmatprep.subr.mxu0 0.0
    %985 = vmatpush1.xpose.msra.mxu0 %v956
    %986 = vmatprep.subr.mxu0 0.0
    %987 = vmatpush1.xpose.msra.mxu0 %v959
    %988 = vmatprep.subr.mxu0 0.0
    %989 = vmatpush1.xpose.msra.mxu0 %v962
    %990 = vmatprep.subr.mxu0 0.0
    %991 = vmatpush1.xpose.msra.mxu0 %v965
    %992 = vmatprep.subr.mxu0 0.0
    %993 = vmatpush1.xpose.msra.mxu0 %v968
    %994 = vmatprep.subr.mxu0 0.0
    %995 = vmatpush1.xpose.msra.mxu0 0.0
    %996 = vmatprep.subr.mxu0 0.0
    %997 = vmatpush1.xpose.msra.mxu0 0.0
    %998 = vmatprep.subr.mxu0 0.0
    %999 = vmatpush1.xpose.msra.mxu0 0.0
    %1000 = vmatprep.subr.mxu0 0.0
    %1001 = vmatpush1.xpose.msra.mxu0 0.0
    %1002 = vmatprep.subr.mxu0 0.0
    %1003 = vmatpush1.xpose.msra.mxu0 0.0
    %1004 = vmatprep.subr.mxu0 0.0
    %1005 = vmatpush1.xpose.msra.mxu0 0.0
    %1006 = vmatprep.subr.mxu0 0.0
    %1007 = vmatpush1.xpose.msra.mxu0 0.0
    %1008 = vmatprep.subr.mxu0 0.0
    %1009 = vmatpush1.xpose.msra.mxu0 0.0
    %1010 = vmatprep.subr.mxu0 0.0
    %1011 = vmatpush1.xpose.msra.mxu0 0.0
    %1012 = vmatprep.subr.mxu0 0.0
    %1013 = vmatpush1.xpose.msra.mxu0 0.0
    %1014 = vmatprep.subr.mxu0 0.0
    %1015 = vmatpush1.xpose.msra.mxu0 0.0
    %1016 = vmatprep.subr.mxu0 0.0
    %1017 = vmatpush1.xpose.msra.mxu0 0.0
    %1018 = vmatprep.subr.mxu0 0.0
    %1019 = vmatpush1.xpose.msra.mxu0 0.0
    %1020 = vmatprep.subr.mxu0 0.0
    %1021 = vmatpush1.xpose.msra.mxu0 0.0
    %1022 = vmatprep.subr.mxu0 0.0
    %1023 = vmatpush1.xpose.msra.mxu0 0.0
    %1024 = vmatprep.subr.mxu0 0.0
    %1025 = vmatpush1.xpose.msra.mxu0 0.0
    %1026 = vmatprep.subr.mxu0 0.0
    %1027 = vmatpush1.xpose.msra.mxu0 0.0
    %1028 = vmatprep.subr.mxu0 0.0
    %1029 = vmatpush1.xpose.msra.mxu0 0.0
    %1030 = vmatprep.subr.mxu0 0.0
    %1031 = vmatpush1.xpose.msra.mxu0 0.0
    %1032 = vmatprep.subr.mxu0 0.0
    %1033 = vmatpush1.xpose.msra.mxu0 0.0
    %1034 = vmatprep.mubr.f32.mxu0 0.0
    %1035 = vmatmul.mubr.f32.gmra.mrb[0].mxu0 %v899
    %v1036 = vpop.f32.mrb[0].mxu0
    %v1037 = vadd.f32 0.0, %v1036
    %v1038 = vpop.f32.mrb[0].mxu0
    %1039 = vmatprep.mubr.f32.mxu0 0.0
    %1040 = vmatmul.mubr.f32.gmra.mrb[0].mxu0 %v902
    %v1041 = vpop.f32.mrb[0].mxu0
    %v1042 = vadd.f32 0.0, %v1041
    %v1043 = vpop.f32.mrb[0].mxu0
    %1044 = vmatprep.mubr.f32.mxu0 0.0
    %1045 = vmatmul.mubr.f32.gmra.mrb[0].mxu0 %v905
    %v1046 = vpop.f32.mrb[0].mxu0
    %v1047 = vadd.f32 0.0, %v1046
    %v1048 = vpop.f32.mrb[0].mxu0
    %1049 = vmatprep.mubr.f32.mxu0 0.0
    %1050 = vmatmul.mubr.f32.gmra.mrb[0].mxu0 %v908
    %v1051 = vpop.f32.mrb[0].mxu0
    %v1052 = vadd.f32 0.0, %v1051
    %v1053 = vpop.f32.mrb[0].mxu0
    %1054 = vmatprep.mubr.f32.mxu0 0.0
    %1055 = vmatmul.mubr.f32.gmra.mrb[0].mxu0 %v911
    %v1056 = vpop.f32.mrb[0].mxu0
    %v1057 = vadd.f32 0.0, %v1056
    %v1058 = vpop.f32.mrb[0].mxu0
    %1059 = vmatprep.mubr.f32.mxu0 0.0
    %1060 = vmatmul.mubr.f32.gmra.mrb[0].mxu0 %v914
    %v1061 = vpop.f32.mrb[0].mxu0
    %v1062 = vadd.f32 0.0, %v1061
    %v1063 = vpop.f32.mrb[0].mxu0
    %1064 = vmatprep.mubr.f32.mxu0 0.0
    %1065 = vmatmul.mubr.f32.gmra.mrb[0].mxu0 %v917
    %v1066 = vpop.f32.mrb[0].mxu0
    %v1067 = vadd.f32 0.0, %v1066
    %v1068 = vpop.f32.mrb[0].mxu0
    %1069 = vmatprep.mubr.f32.mxu0 0.0
    %1070 = vmatmul.mubr.f32.gmra.mrb[0].mxu0 %v920
    %v1071 = vpop.f32.mrb[0].mxu0
    %v1072 = vadd.f32 0.0, %v1071
    %v1073 = vpop.f32.mrb[0].mxu0
    %1074 = vmatprep.mubr.f32.mxu0 0.0
    %1075 = vmatmul.mubr.f32.gmra.mrb[0].mxu0 %v923
    %v1076 = vpop.f32.mrb[0].mxu0
    %v1077 = vadd.f32 0.0, %v1076
    %v1078 = vpop.f32.mrb[0].mxu0
    %1079 = vmatprep.mubr.f32.mxu0 0.0
    %1080 = vmatmul.mubr.f32.gmra.mrb[0].mxu0 %v926
    %v1081 = vpop.f32.mrb[0].mxu0
    %v1082 = vadd.f32 0.0, %v1081
    %v1083 = vpop.f32.mrb[0].mxu0
    %1084 = vmatprep.mubr.f32.mxu0 0.0
    %1085 = vmatmul.mubr.f32.gmra.mrb[0].mxu0 %v929
    %v1086 = vpop.f32.mrb[0].mxu0
    %v1087 = vadd.f32 0.0, %v1086
    %v1088 = vpop.f32.mrb[0].mxu0
    %1089 = vmatprep.mubr.f32.mxu0 0.0
    %1090 = vmatmul.mubr.f32.gmra.mrb[0].mxu0 %v932
    %v1091 = vpop.f32.mrb[0].mxu0
    %v1092 = vadd.f32 0.0, %v1091
    %v1093 = vpop.f32.mrb[0].mxu0
    %1094 = vdwg.mxu0
    %v1095 = vmul.f32 %v1037, 0.25
    %v1096 = vmul.f32 %v1042, 0.25
    %v1097 = vmul.f32 %v1047, 0.25
    %v1098 = vmul.f32 %v1052, 0.25
    %v1099 = vmul.f32 %v1057, 0.25
    %v1100 = vmul.f32 %v1062, 0.25
    %v1101 = vmul.f32 %v1067, 0.25
    %v1102 = vmul.f32 %v1072, 0.25
    %v1103 = vmul.f32 %v1077, 0.25
    %v1104 = vmul.f32 %v1082, 0.25
    %v1105 = vmul.f32 %v1087, 0.25
    %v1106 = vmul.f32 %v1092, 0.25
    %v1107 = vsel %vm194, %v1095, -1e+09
    %v1108 = vsel %vm195, %v1096, -1e+09
    %v1109 = vsel %vm196, %v1097, -1e+09
    %v1110 = vsel %vm197, %v1098, -1e+09
    %v1111 = vsel %vm198, %v1099, -1e+09
    %v1112 = vsel %vm199, %v1100, -1e+09
    %v1113 = vsel %vm200, %v1101, -1e+09
    %v1114 = vsel %vm201, %v1102, -1e+09
    %v1115 = vsel %vm202, %v1103, -1e+09
    %v1116 = vsel %vm203, %v1104, -1e+09
    %v1117 = vsel %vm204, %v1105, -1e+09
    %v1118 = vsel %vm205, %v1106, -1e+09
    %vm1119 = vcmask 785408
    %v1120 = vsel %vm1119, %v1107, -inf
    %1121 = vmax.xlane.f32.xlu0 %v1120
    %v1122 = vpop.xlane.xlu0 %1121
    %v1123 = vsel %vm1119, %v1108, -inf
    %1124 = vmax.xlane.f32.xlu0 %v1123
    %v1125 = vpop.xlane.xlu0 %1124
    %v1126 = vsel %vm1119, %v1109, -inf
    %1127 = vmax.xlane.f32.xlu0 %v1126
    %v1128 = vpop.xlane.xlu0 %1127
    %v1129 = vsel %vm1119, %v1110, -inf
    %1130 = vmax.xlane.f32.xlu0 %v1129
    %v1131 = vpop.xlane.xlu0 %1130
    %v1132 = vsel %vm1119, %v1111, -inf
    %1133 = vmax.xlane.f32.xlu0 %v1132
    %v1134 = vpop.xlane.xlu0 %1133
    %v1135 = vsel %vm1119, %v1112, -inf
    %1136 = vmax.xlane.f32.xlu0 %v1135
    %v1137 = vpop.xlane.xlu0 %1136
    %v1138 = vsel %vm1119, %v1113, -inf
    %1139 = vmax.xlane.f32.xlu0 %v1138
    %v1140 = vpop.xlane.xlu0 %1139
    %v1141 = vsel %vm1119, %v1114, -inf
    %1142 = vmax.xlane.f32.xlu0 %v1141
    %v1143 = vpop.xlane.xlu0 %1142
    %v1144 = vsel %vm1119, %v1115, -inf
    %1145 = vmax.xlane.f32.xlu0 %v1144
    %v1146 = vpop.xlane.xlu0 %1145
    %v1147 = vsel %vm1119, %v1116, -inf
    %1148 = vmax.xlane.f32.xlu0 %v1147
    %v1149 = vpop.xlane.xlu0 %1148
    %v1150 = vsel %vm1119, %v1117, -inf
    %1151 = vmax.xlane.f32.xlu0 %v1150
    %v1152 = vpop.xlane.xlu0 %1151
    %v1153 = vsel %vm1119, %v1118, -inf
    %1154 = vmax.xlane.f32.xlu0 %v1153
    %v1155 = vpop.xlane.xlu0 %1154
    %v1156 = vsub.f32 %v1107, %v1122
    %v1157 = vsub.f32 %v1108, %v1125
    %v1158 = vsub.f32 %v1109, %v1128
    %v1159 = vsub.f32 %v1110, %v1131
    %v1160 = vsub.f32 %v1111, %v1134
    %v1161 = vsub.f32 %v1112, %v1137
    %v1162 = vsub.f32 %v1113, %v1140
    %v1163 = vsub.f32 %v1114, %v1143
    %v1164 = vsub.f32 %v1115, %v1146
    %v1165 = vsub.f32 %v1116, %v1149
    %v1166 = vsub.f32 %v1117, %v1152
    %v1167 = vsub.f32 %v1118, %v1155
    %v1168 = vmul.f32 %v1156, 1.442695
    %v1169 = vpow.pop %v1168
    %v1170 = vmul.f32 %v1157, 1.442695
    %v1171 = vpow.pop %v1170
    %v1172 = vmul.f32 %v1158, 1.442695
    %v1173 = vpow.pop %v1172
    %v1174 = vmul.f32 %v1159, 1.442695
    %v1175 = vpow.pop %v1174
    %v1176 = vmul.f32 %v1160, 1.442695
    %v1177 = vpow.pop %v1176
    %v1178 = vmul.f32 %v1161, 1.442695
    %v1179 = vpow.pop %v1178
    %v1180 = vmul.f32 %v1162, 1.442695
    %v1181 = vpow.pop %v1180
    %v1182 = vmul.f32 %v1163, 1.442695
    %v1183 = vpow.pop %v1182
    %v1184 = vmul.f32 %v1164, 1.442695
    %v1185 = vpow.pop %v1184
    %v1186 = vmul.f32 %v1165, 1.442695
    %v1187 = vpow.pop %v1186
    %v1188 = vmul.f32 %v1166, 1.442695
    %v1189 = vpow.pop %v1188
    %v1190 = vmul.f32 %v1167, 1.442695
    %v1191 = vpow.pop %v1190
    %v1192 = vsel %vm1119, %v1169, 0.0
    %1193 = vadd.xlane.f32.xlu0 %v1192
    %v1194 = vpop.xlane.xlu0 %1193
    %v1195 = vsel %vm1119, %v1171, 0.0
    %1196 = vadd.xlane.f32.xlu0 %v1195
    %v1197 = vpop.xlane.xlu0 %1196
    %v1198 = vsel %vm1119, %v1173, 0.0
    %1199 = vadd.xlane.f32.xlu0 %v1198
    %v1200 = vpop.xlane.xlu0 %1199
    %v1201 = vsel %vm1119, %v1175, 0.0
    %1202 = vadd.xlane.f32.xlu0 %v1201
    %v1203 = vpop.xlane.xlu0 %1202
    %v1204 = vsel %vm1119, %v1177, 0.0
    %1205 = vadd.xlane.f32.xlu0 %v1204
    %v1206 = vpop.xlane.xlu0 %1205
    %v1207 = vsel %vm1119, %v1179, 0.0
    %1208 = vadd.xlane.f32.xlu0 %v1207
    %v1209 = vpop.xlane.xlu0 %1208
    %v1210 = vsel %vm1119, %v1181, 0.0
    %1211 = vadd.xlane.f32.xlu0 %v1210
    %v1212 = vpop.xlane.xlu0 %1211
    %v1213 = vsel %vm1119, %v1183, 0.0
    %1214 = vadd.xlane.f32.xlu0 %v1213
    %v1215 = vpop.xlane.xlu0 %1214
    %v1216 = vsel %vm1119, %v1185, 0.0
    %1217 = vadd.xlane.f32.xlu0 %v1216
    %v1218 = vpop.xlane.xlu0 %1217
    %v1219 = vsel %vm1119, %v1187, 0.0
    %1220 = vadd.xlane.f32.xlu0 %v1219
    %v1221 = vpop.xlane.xlu0 %1220
    %v1222 = vsel %vm1119, %v1189, 0.0
    %1223 = vadd.xlane.f32.xlu0 %v1222
    %v1224 = vpop.xlane.xlu0 %1223
    %v1225 = vsel %vm1119, %v1191, 0.0
    %1226 = vadd.xlane.f32.xlu0 %v1225
    %v1227 = vpop.xlane.xlu0 %1226
    %v1228 = vrcp.pop %v1194
    %v1229 = vrcp.pop %v1197
    %v1230 = vrcp.pop %v1200
    %v1231 = vrcp.pop %v1203
    %v1232 = vrcp.pop %v1206
    %v1233 = vrcp.pop %v1209
    %v1234 = vrcp.pop %v1212
    %v1235 = vrcp.pop %v1215
    %v1236 = vrcp.pop %v1218
    %v1237 = vrcp.pop %v1221
    %v1238 = vrcp.pop %v1224
    %v1239 = vrcp.pop %v1227
    %v1240 = vmul.f32 %v1169, %v1228
    %v1241 = vmul.f32 %v1171, %v1229
    %v1242 = vmul.f32 %v1173, %v1230
    %v1243 = vmul.f32 %v1175, %v1231
    %v1244 = vmul.f32 %v1177, %v1232
    %v1245 = vmul.f32 %v1179, %v1233
    %v1246 = vmul.f32 %v1181, %v1234
    %v1247 = vmul.f32 %v1183, %v1235
    %v1248 = vmul.f32 %v1185, %v1236
    %v1249 = vmul.f32 %v1187, %v1237
    %v1250 = vmul.f32 %v1189, %v1238
    %v1251 = vmul.f32 %v1191, %v1239
    %v1252 = vmul.f32 %v828, %v212
    %v1253 = vmul.f32 %v833, %v212
    %v1254 = vmul.f32 %v838, %v212
    %v1255 = vmul.f32 %v843, %v212
    %v1256 = vmul.f32 %v848, %v212
    %v1257 = vmul.f32 %v853, %v212
    %v1258 = vmul.f32 %v858, %v212
    %v1259 = vmul.f32 %v863, %v212
    %v1260 = vmul.f32 %v868, %v212
    %v1261 = vmul.f32 %v873, %v212
    %v1262 = vmul.f32 %v878, %v212
    %v1263 = vmul.f32 %v883, %v212
    %v1264 = vmul.f32 %v522, %v217
    %v1265 = vmul.f32 %v527, %v217
    %v1266 = vmul.f32 %v532, %v217
    %v1267 = vmul.f32 %v537, %v217
    %v1268 = vmul.f32 %v542, %v217
    %v1269 = vmul.f32 %v547, %v217
    %v1270 = vmul.f32 %v552, %v217
    %v1271 = vmul.f32 %v557, %v217
    %v1272 = vmul.f32 %v562, %v217
    %v1273 = vmul.f32 %v567, %v217
    %v1274 = vmul.f32 %v572, %v217
    %v1275 = vmul.f32 %v577, %v217
    %v1277 = vsel %vm220, %v1264, 0
    %v1280 = vsel %vm220, %v1265, 0
    %v1283 = vsel %vm220, %v1266, 0
    %v1286 = vsel %vm220, %v1267, 0
    %v1289 = vsel %vm220, %v1268, 0
    %v1292 = vsel %vm220, %v1269, 0
    %v1295 = vsel %vm220, %v1270, 0
    %v1298 = vsel %vm220, %v1271, 0
    %v1301 = vsel %vm220, %v1272, 0
    %v1304 = vsel %vm220, %v1273, 0
    %v1307 = vsel %vm220, %v1274, 0
    %v1310 = vsel %vm220, %v1275, 0
    %1312 = vmatprep.subr.mxu0 0.0
    %1313 = vmatpush1.xpose.msra.mxu0 %v935
    %1314 = vmatprep.subr.mxu0 0.0
    %1315 = vmatpush1.xpose.msra.mxu0 %v938
    %1316 = vmatprep.subr.mxu0 0.0
    %1317 = vmatpush1.xpose.msra.mxu0 %v941
    %1318 = vmatprep.subr.mxu0 0.0
    %1319 = vmatpush1.xpose.msra.mxu0 %v944
    %1320 = vmatprep.subr.mxu0 0.0
    %1321 = vmatpush1.xpose.msra.mxu0 %v947
    %1322 = vmatprep.subr.mxu0 0.0
    %1323 = vmatpush1.xpose.msra.mxu0 %v950
    %1324 = vmatprep.subr.mxu0 0.0
    %1325 = vmatpush1.xpose.msra.mxu0 %v953
    %1326 = vmatprep.subr.mxu0 0.0
    %1327 = vmatpush1.xpose.msra.mxu0 %v956
    %1328 = vmatprep.subr.mxu0 0.0
    %1329 = vmatpush1.xpose.msra.mxu0 %v959
    %1330 = vmatprep.subr.mxu0 0.0
    %1331 = vmatpush1.xpose.msra.mxu0 %v962
    %1332 = vmatprep.subr.mxu0 0.0
    %1333 = vmatpush1.xpose.msra.mxu0 %v965
    %1334 = vmatprep.subr.mxu0 0.0
    %1335 = vmatpush1.xpose.msra.mxu0 %v968
    %1336 = vmatprep.subr.mxu0 0.0
    %1337 = vmatpush1.xpose.msra.mxu0 0.0
    %1338 = vmatprep.subr.mxu0 0.0
    %1339 = vmatpush1.xpose.msra.mxu0 0.0
    %1340 = vmatprep.subr.mxu0 0.0
    %1341 = vmatpush1.xpose.msra.mxu0 0.0
    %1342 = vmatprep.subr.mxu0 0.0
    %1343 = vmatpush1.xpose.msra.mxu0 0.0
    %1344 = vmatprep.subr.mxu0 0.0
    %1345 = vmatpush1.xpose.msra.mxu0 0.0
    %1346 = vmatprep.subr.mxu0 0.0
    %1347 = vmatpush1.xpose.msra.mxu0 0.0
    %1348 = vmatprep.subr.mxu0 0.0
    %1349 = vmatpush1.xpose.msra.mxu0 0.0
    %1350 = vmatprep.subr.mxu0 0.0
    %1351 = vmatpush1.xpose.msra.mxu0 0.0
    %1352 = vmatprep.subr.mxu0 0.0
    %1353 = vmatpush1.xpose.msra.mxu0 0.0
    %1354 = vmatprep.subr.mxu0 0.0
    %1355 = vmatpush1.xpose.msra.mxu0 0.0
    %1356 = vmatprep.subr.mxu0 0.0
    %1357 = vmatpush1.xpose.msra.mxu0 0.0
    %1358 = vmatprep.subr.mxu0 0.0
    %1359 = vmatpush1.xpose.msra.mxu0 0.0
    %1360 = vmatprep.subr.mxu0 0.0
    %1361 = vmatpush1.xpose.msra.mxu0 0.0
    %1362 = vmatprep.subr.mxu0 0.0
    %1363 = vmatpush1.xpose.msra.mxu0 0.0
    %1364 = vmatprep.subr.mxu0 0.0
    %1365 = vmatpush1.xpose.msra.mxu0 0.0
    %1366 = vmatprep.subr.mxu0 0.0
    %1367 = vmatpush1.xpose.msra.mxu0 0.0
    %1368 = vmatprep.subr.mxu0 0.0
    %1369 = vmatpush1.xpose.msra.mxu0 0.0
    %1370 = vmatprep.subr.mxu0 0.0
    %1371 = vmatpush1.xpose.msra.mxu0 0.0
    %1372 = vmatprep.subr.mxu0 0.0
    %1373 = vmatpush1.xpose.msra.mxu0 0.0
    %1374 = vmatprep.subr.mxu0 0.0
    %1375 = vmatpush1.xpose.msra.mxu0 0.0
    %1376 = vmatprep.mubr.f32.mxu0 0.0
    %1377 = vmatmul.mubr.f32.gmra.mrb[0].mxu0 %v1277
    %v1378 = vpop.f32.mrb[0].mxu0
    %v1379 = vadd.f32 0.0, %v1378
    %v1380 = vpop.f32.mrb[0].mxu0
    %1381 = vmatprep.mubr.f32.mxu0 0.0
    %1382 = vmatmul.mubr.f32.gmra.mrb[0].mxu0 %v1280
    %v1383 = vpop.f32.mrb[0].mxu0
    %v1384 = vadd.f32 0.0, %v1383
    %v1385 = vpop.f32.mrb[0].mxu0
    %1386 = vmatprep.mubr.f32.mxu0 0.0
    %1387 = vmatmul.mubr.f32.gmra.mrb[0].mxu0 %v1283
    %v1388 = vpop.f32.mrb[0].mxu0
    %v1389 = vadd.f32 0.0, %v1388
    %v1390 = vpop.f32.mrb[0].mxu0
    %1391 = vmatprep.mubr.f32.mxu0 0.0
    %1392 = vmatmul.mubr.f32.gmra.mrb[0].mxu0 %v1286
    %v1393 = vpop.f32.mrb[0].mxu0
    %v1394 = vadd.f32 0.0, %v1393
    %v1395 = vpop.f32.mrb[0].mxu0
    %1396 = vmatprep.mubr.f32.mxu0 0.0
    %1397 = vmatmul.mubr.f32.gmra.mrb[0].mxu0 %v1289
    %v1398 = vpop.f32.mrb[0].mxu0
    %v1399 = vadd.f32 0.0, %v1398
    %v1400 = vpop.f32.mrb[0].mxu0
    %1401 = vmatprep.mubr.f32.mxu0 0.0
    %1402 = vmatmul.mubr.f32.gmra.mrb[0].mxu0 %v1292
    %v1403 = vpop.f32.mrb[0].mxu0
    %v1404 = vadd.f32 0.0, %v1403
    %v1405 = vpop.f32.mrb[0].mxu0
    %1406 = vmatprep.mubr.f32.mxu0 0.0
    %1407 = vmatmul.mubr.f32.gmra.mrb[0].mxu0 %v1295
    %v1408 = vpop.f32.mrb[0].mxu0
    %v1409 = vadd.f32 0.0, %v1408
    %v1410 = vpop.f32.mrb[0].mxu0
    %1411 = vmatprep.mubr.f32.mxu0 0.0
    %1412 = vmatmul.mubr.f32.gmra.mrb[0].mxu0 %v1298
    %v1413 = vpop.f32.mrb[0].mxu0
    %v1414 = vadd.f32 0.0, %v1413
    %v1415 = vpop.f32.mrb[0].mxu0
    %1416 = vmatprep.mubr.f32.mxu0 0.0
    %1417 = vmatmul.mubr.f32.gmra.mrb[0].mxu0 %v1301
    %v1418 = vpop.f32.mrb[0].mxu0
    %v1419 = vadd.f32 0.0, %v1418
    %v1420 = vpop.f32.mrb[0].mxu0
    %1421 = vmatprep.mubr.f32.mxu0 0.0
    %1422 = vmatmul.mubr.f32.gmra.mrb[0].mxu0 %v1304
    %v1423 = vpop.f32.mrb[0].mxu0
    %v1424 = vadd.f32 0.0, %v1423
    %v1425 = vpop.f32.mrb[0].mxu0
    %1426 = vmatprep.mubr.f32.mxu0 0.0
    %1427 = vmatmul.mubr.f32.gmra.mrb[0].mxu0 %v1307
    %v1428 = vpop.f32.mrb[0].mxu0
    %v1429 = vadd.f32 0.0, %v1428
    %v1430 = vpop.f32.mrb[0].mxu0
    %1431 = vmatprep.mubr.f32.mxu0 0.0
    %1432 = vmatmul.mubr.f32.gmra.mrb[0].mxu0 %v1310
    %v1433 = vpop.f32.mrb[0].mxu0
    %v1434 = vadd.f32 0.0, %v1433
    %v1435 = vpop.f32.mrb[0].mxu0
    %1436 = vdwg.mxu0
    %v1437 = vmul.f32 %v1379, 0.25
    %v1438 = vmul.f32 %v1384, 0.25
    %v1439 = vmul.f32 %v1389, 0.25
    %v1440 = vmul.f32 %v1394, 0.25
    %v1441 = vmul.f32 %v1399, 0.25
    %v1442 = vmul.f32 %v1404, 0.25
    %v1443 = vmul.f32 %v1409, 0.25
    %v1444 = vmul.f32 %v1414, 0.25
    %v1445 = vmul.f32 %v1419, 0.25
    %v1446 = vmul.f32 %v1424, 0.25
    %v1447 = vmul.f32 %v1429, 0.25
    %v1448 = vmul.f32 %v1434, 0.25
    %v1449 = vsel %vm194, %v1437, -1e+09
    %v1450 = vsel %vm195, %v1438, -1e+09
    %v1451 = vsel %vm196, %v1439, -1e+09
    %v1452 = vsel %vm197, %v1440, -1e+09
    %v1453 = vsel %vm198, %v1441, -1e+09
    %v1454 = vsel %vm199, %v1442, -1e+09
    %v1455 = vsel %vm200, %v1443, -1e+09
    %v1456 = vsel %vm201, %v1444, -1e+09
    %v1457 = vsel %vm202, %v1445, -1e+09
    %v1458 = vsel %vm203, %v1446, -1e+09
    %v1459 = vsel %vm204, %v1447, -1e+09
    %v1460 = vsel %vm205, %v1448, -1e+09
    %v1461 = vsel %vm1119, %v1449, -inf
    %1462 = vmax.xlane.f32.xlu0 %v1461
    %v1463 = vpop.xlane.xlu0 %1462
    %v1464 = vsel %vm1119, %v1450, -inf
    %1465 = vmax.xlane.f32.xlu0 %v1464
    %v1466 = vpop.xlane.xlu0 %1465
    %v1467 = vsel %vm1119, %v1451, -inf
    %1468 = vmax.xlane.f32.xlu0 %v1467
    %v1469 = vpop.xlane.xlu0 %1468
    %v1470 = vsel %vm1119, %v1452, -inf
    %1471 = vmax.xlane.f32.xlu0 %v1470
    %v1472 = vpop.xlane.xlu0 %1471
    %v1473 = vsel %vm1119, %v1453, -inf
    %1474 = vmax.xlane.f32.xlu0 %v1473
    %v1475 = vpop.xlane.xlu0 %1474
    %v1476 = vsel %vm1119, %v1454, -inf
    %1477 = vmax.xlane.f32.xlu0 %v1476
    %v1478 = vpop.xlane.xlu0 %1477
    %v1479 = vsel %vm1119, %v1455, -inf
    %1480 = vmax.xlane.f32.xlu0 %v1479
    %v1481 = vpop.xlane.xlu0 %1480
    %v1482 = vsel %vm1119, %v1456, -inf
    %1483 = vmax.xlane.f32.xlu0 %v1482
    %v1484 = vpop.xlane.xlu0 %1483
    %v1485 = vsel %vm1119, %v1457, -inf
    %1486 = vmax.xlane.f32.xlu0 %v1485
    %v1487 = vpop.xlane.xlu0 %1486
    %v1488 = vsel %vm1119, %v1458, -inf
    %1489 = vmax.xlane.f32.xlu0 %v1488
    %v1490 = vpop.xlane.xlu0 %1489
    %v1491 = vsel %vm1119, %v1459, -inf
    %1492 = vmax.xlane.f32.xlu0 %v1491
    %v1493 = vpop.xlane.xlu0 %1492
    %v1494 = vsel %vm1119, %v1460, -inf
    %1495 = vmax.xlane.f32.xlu0 %v1494
    %v1496 = vpop.xlane.xlu0 %1495
    %v1497 = vsub.f32 %v1449, %v1463
    %v1498 = vsub.f32 %v1450, %v1466
    %v1499 = vsub.f32 %v1451, %v1469
    %v1500 = vsub.f32 %v1452, %v1472
    %v1501 = vsub.f32 %v1453, %v1475
    %v1502 = vsub.f32 %v1454, %v1478
    %v1503 = vsub.f32 %v1455, %v1481
    %v1504 = vsub.f32 %v1456, %v1484
    %v1505 = vsub.f32 %v1457, %v1487
    %v1506 = vsub.f32 %v1458, %v1490
    %v1507 = vsub.f32 %v1459, %v1493
    %v1508 = vsub.f32 %v1460, %v1496
    %v1509 = vmul.f32 %v1497, 1.442695
    %v1510 = vpow.pop %v1509
    %v1511 = vmul.f32 %v1498, 1.442695
    %v1512 = vpow.pop %v1511
    %v1513 = vmul.f32 %v1499, 1.442695
    %v1514 = vpow.pop %v1513
    %v1515 = vmul.f32 %v1500, 1.442695
    %v1516 = vpow.pop %v1515
    %v1517 = vmul.f32 %v1501, 1.442695
    %v1518 = vpow.pop %v1517
    %v1519 = vmul.f32 %v1502, 1.442695
    %v1520 = vpow.pop %v1519
    %v1521 = vmul.f32 %v1503, 1.442695
    %v1522 = vpow.pop %v1521
    %v1523 = vmul.f32 %v1504, 1.442695
    %v1524 = vpow.pop %v1523
    %v1525 = vmul.f32 %v1505, 1.442695
    %v1526 = vpow.pop %v1525
    %v1527 = vmul.f32 %v1506, 1.442695
    %v1528 = vpow.pop %v1527
    %v1529 = vmul.f32 %v1507, 1.442695
    %v1530 = vpow.pop %v1529
    %v1531 = vmul.f32 %v1508, 1.442695
    %v1532 = vpow.pop %v1531
    %v1533 = vsel %vm1119, %v1510, 0.0
    %1534 = vadd.xlane.f32.xlu0 %v1533
    %v1535 = vpop.xlane.xlu0 %1534
    %v1536 = vsel %vm1119, %v1512, 0.0
    %1537 = vadd.xlane.f32.xlu0 %v1536
    %v1538 = vpop.xlane.xlu0 %1537
    %v1539 = vsel %vm1119, %v1514, 0.0
    %1540 = vadd.xlane.f32.xlu0 %v1539
    %v1541 = vpop.xlane.xlu0 %1540
    %v1542 = vsel %vm1119, %v1516, 0.0
    %1543 = vadd.xlane.f32.xlu0 %v1542
    %v1544 = vpop.xlane.xlu0 %1543
    %v1545 = vsel %vm1119, %v1518, 0.0
    %1546 = vadd.xlane.f32.xlu0 %v1545
    %v1547 = vpop.xlane.xlu0 %1546
    %v1548 = vsel %vm1119, %v1520, 0.0
    %1549 = vadd.xlane.f32.xlu0 %v1548
    %v1550 = vpop.xlane.xlu0 %1549
    %v1551 = vsel %vm1119, %v1522, 0.0
    %1552 = vadd.xlane.f32.xlu0 %v1551
    %v1553 = vpop.xlane.xlu0 %1552
    %v1554 = vsel %vm1119, %v1524, 0.0
    %1555 = vadd.xlane.f32.xlu0 %v1554
    %v1556 = vpop.xlane.xlu0 %1555
    %v1557 = vsel %vm1119, %v1526, 0.0
    %1558 = vadd.xlane.f32.xlu0 %v1557
    %v1559 = vpop.xlane.xlu0 %1558
    %v1560 = vsel %vm1119, %v1528, 0.0
    %1561 = vadd.xlane.f32.xlu0 %v1560
    %v1562 = vpop.xlane.xlu0 %1561
    %v1563 = vsel %vm1119, %v1530, 0.0
    %1564 = vadd.xlane.f32.xlu0 %v1563
    %v1565 = vpop.xlane.xlu0 %1564
    %v1566 = vsel %vm1119, %v1532, 0.0
    %1567 = vadd.xlane.f32.xlu0 %v1566
    %v1568 = vpop.xlane.xlu0 %1567
    %v1569 = vrcp.pop %v1535
    %v1570 = vrcp.pop %v1538
    %v1571 = vrcp.pop %v1541
    %v1572 = vrcp.pop %v1544
    %v1573 = vrcp.pop %v1547
    %v1574 = vrcp.pop %v1550
    %v1575 = vrcp.pop %v1553
    %v1576 = vrcp.pop %v1556
    %v1577 = vrcp.pop %v1559
    %v1578 = vrcp.pop %v1562
    %v1579 = vrcp.pop %v1565
    %v1580 = vrcp.pop %v1568
    %v1581 = vmul.f32 %v1510, %v1569
    %v1582 = vmul.f32 %v1512, %v1570
    %v1583 = vmul.f32 %v1514, %v1571
    %v1584 = vmul.f32 %v1516, %v1572
    %v1585 = vmul.f32 %v1518, %v1573
    %v1586 = vmul.f32 %v1520, %v1574
    %v1587 = vmul.f32 %v1522, %v1575
    %v1588 = vmul.f32 %v1524, %v1576
    %v1589 = vmul.f32 %v1526, %v1577
    %v1590 = vmul.f32 %v1528, %v1578
    %v1591 = vmul.f32 %v1530, %v1579
    %v1592 = vmul.f32 %v1532, %v1580
    %v1593 = vmul.f32 %v828, %v217
    %v1594 = vmul.f32 %v833, %v217
    %v1595 = vmul.f32 %v838, %v217
    %v1596 = vmul.f32 %v843, %v217
    %v1597 = vmul.f32 %v848, %v217
    %v1598 = vmul.f32 %v853, %v217
    %v1599 = vmul.f32 %v858, %v217
    %v1600 = vmul.f32 %v863, %v217
    %v1601 = vmul.f32 %v868, %v217
    %v1602 = vmul.f32 %v873, %v217
    %v1603 = vmul.f32 %v878, %v217
    %v1604 = vmul.f32 %v883, %v217
    %v1606 = vsel %vm1119, %v1581, 0
    %v1609 = vsel %vm1119, %v1582, 0
    %v1612 = vsel %vm1119, %v1583, 0
    %v1615 = vsel %vm1119, %v1584, 0
    %v1618 = vsel %vm1119, %v1585, 0
    %v1621 = vsel %vm1119, %v1586, 0
    %v1624 = vsel %vm1119, %v1587, 0
    %v1627 = vsel %vm1119, %v1588, 0
    %v1630 = vsel %vm1119, %v1589, 0
    %v1633 = vsel %vm1119, %v1590, 0
    %v1636 = vsel %vm1119, %v1591, 0
    %v1639 = vsel %vm1119, %v1592, 0
    %1641 = vmatprep.subr.mxu0 0.0
    %1642 = vmatpush1.msra.mxu0 %v1593
    %1643 = vmatprep.subr.mxu0 0.0
    %1644 = vmatpush1.msra.mxu0 %v1594
    %1645 = vmatprep.subr.mxu0 0.0
    %1646 = vmatpush1.msra.mxu0 %v1595
    %1647 = vmatprep.subr.mxu0 0.0
    %1648 = vmatpush1.msra.mxu0 %v1596
    %1649 = vmatprep.subr.mxu0 0.0
    %1650 = vmatpush1.msra.mxu0 %v1597
    %1651 = vmatprep.subr.mxu0 0.0
    %1652 = vmatpush1.msra.mxu0 %v1598
    %1653 = vmatprep.subr.mxu0 0.0
    %1654 = vmatpush1.msra.mxu0 %v1599
    %1655 = vmatprep.subr.mxu0 0.0
    %1656 = vmatpush1.msra.mxu0 %v1600
    %1657 = vmatprep.subr.mxu0 0.0
    %1658 = vmatpush1.msra.mxu0 %v1601
    %1659 = vmatprep.subr.mxu0 0.0
    %1660 = vmatpush1.msra.mxu0 %v1602
    %1661 = vmatprep.subr.mxu0 0.0
    %1662 = vmatpush1.msra.mxu0 %v1603
    %1663 = vmatprep.subr.mxu0 0.0
    %1664 = vmatpush1.msra.mxu0 %v1604
    %1665 = vmatprep.subr.mxu0 0.0
    %1666 = vmatpush1.msra.mxu0 0.0
    %1667 = vmatprep.subr.mxu0 0.0
    %1668 = vmatpush1.msra.mxu0 0.0
    %1669 = vmatprep.subr.mxu0 0.0
    %1670 = vmatpush1.msra.mxu0 0.0
    %1671 = vmatprep.subr.mxu0 0.0
    %1672 = vmatpush1.msra.mxu0 0.0
    %1673 = vmatprep.subr.mxu0 0.0
    %1674 = vmatpush1.msra.mxu0 0.0
    %1675 = vmatprep.subr.mxu0 0.0
    %1676 = vmatpush1.msra.mxu0 0.0
    %1677 = vmatprep.subr.mxu0 0.0
    %1678 = vmatpush1.msra.mxu0 0.0
    %1679 = vmatprep.subr.mxu0 0.0
    %1680 = vmatpush1.msra.mxu0 0.0
    %1681 = vmatprep.subr.mxu0 0.0
    %1682 = vmatpush1.msra.mxu0 0.0
    %1683 = vmatprep.subr.mxu0 0.0
    %1684 = vmatpush1.msra.mxu0 0.0
    %1685 = vmatprep.subr.mxu0 0.0
    %1686 = vmatpush1.msra.mxu0 0.0
    %1687 = vmatprep.subr.mxu0 0.0
    %1688 = vmatpush1.msra.mxu0 0.0
    %1689 = vmatprep.subr.mxu0 0.0
    %1690 = vmatpush1.msra.mxu0 0.0
    %1691 = vmatprep.subr.mxu0 0.0
    %1692 = vmatpush1.msra.mxu0 0.0
    %1693 = vmatprep.subr.mxu0 0.0
    %1694 = vmatpush1.msra.mxu0 0.0
    %1695 = vmatprep.subr.mxu0 0.0
    %1696 = vmatpush1.msra.mxu0 0.0
    %1697 = vmatprep.subr.mxu0 0.0
    %1698 = vmatpush1.msra.mxu0 0.0
    %1699 = vmatprep.subr.mxu0 0.0
    %1700 = vmatpush1.msra.mxu0 0.0
    %1701 = vmatprep.subr.mxu0 0.0
    %1702 = vmatpush1.msra.mxu0 0.0
    %1703 = vmatprep.subr.mxu0 0.0
    %1704 = vmatpush1.msra.mxu0 0.0
    %1705 = vmatprep.mubr.f32.mxu0 0.0
    %1706 = vmatmul.mubr.f32.gmra.mrb[0].mxu0 %v1606
    %v1707 = vpop.f32.mrb[0].mxu0
    %v1708 = vadd.f32 0.0, %v1707
    %v1709 = vpop.f32.mrb[0].mxu0
    %1710 = vmatprep.mubr.f32.mxu0 0.0
    %1711 = vmatmul.mubr.f32.gmra.mrb[0].mxu0 %v1609
    %v1712 = vpop.f32.mrb[0].mxu0
    %v1713 = vadd.f32 0.0, %v1712
    %v1714 = vpop.f32.mrb[0].mxu0
    %1715 = vmatprep.mubr.f32.mxu0 0.0
    %1716 = vmatmul.mubr.f32.gmra.mrb[0].mxu0 %v1612
    %v1717 = vpop.f32.mrb[0].mxu0
    %v1718 = vadd.f32 0.0, %v1717
    %v1719 = vpop.f32.mrb[0].mxu0
    %1720 = vmatprep.mubr.f32.mxu0 0.0
    %1721 = vmatmul.mubr.f32.gmra.mrb[0].mxu0 %v1615
    %v1722 = vpop.f32.mrb[0].mxu0
    %v1723 = vadd.f32 0.0, %v1722
    %v1724 = vpop.f32.mrb[0].mxu0
    %1725 = vmatprep.mubr.f32.mxu0 0.0
    %1726 = vmatmul.mubr.f32.gmra.mrb[0].mxu0 %v1618
    %v1727 = vpop.f32.mrb[0].mxu0
    %v1728 = vadd.f32 0.0, %v1727
    %v1729 = vpop.f32.mrb[0].mxu0
    %1730 = vmatprep.mubr.f32.mxu0 0.0
    %1731 = vmatmul.mubr.f32.gmra.mrb[0].mxu0 %v1621
    %v1732 = vpop.f32.mrb[0].mxu0
    %v1733 = vadd.f32 0.0, %v1732
    %v1734 = vpop.f32.mrb[0].mxu0
    %1735 = vmatprep.mubr.f32.mxu0 0.0
    %1736 = vmatmul.mubr.f32.gmra.mrb[0].mxu0 %v1624
    %v1737 = vpop.f32.mrb[0].mxu0
    %v1738 = vadd.f32 0.0, %v1737
    %v1739 = vpop.f32.mrb[0].mxu0
    %1740 = vmatprep.mubr.f32.mxu0 0.0
    %1741 = vmatmul.mubr.f32.gmra.mrb[0].mxu0 %v1627
    %v1742 = vpop.f32.mrb[0].mxu0
    %v1743 = vadd.f32 0.0, %v1742
    %v1744 = vpop.f32.mrb[0].mxu0
    %1745 = vmatprep.mubr.f32.mxu0 0.0
    %1746 = vmatmul.mubr.f32.gmra.mrb[0].mxu0 %v1630
    %v1747 = vpop.f32.mrb[0].mxu0
    %v1748 = vadd.f32 0.0, %v1747
    %v1749 = vpop.f32.mrb[0].mxu0
    %1750 = vmatprep.mubr.f32.mxu0 0.0
    %1751 = vmatmul.mubr.f32.gmra.mrb[0].mxu0 %v1633
    %v1752 = vpop.f32.mrb[0].mxu0
    %v1753 = vadd.f32 0.0, %v1752
    %v1754 = vpop.f32.mrb[0].mxu0
    %1755 = vmatprep.mubr.f32.mxu0 0.0
    %1756 = vmatmul.mubr.f32.gmra.mrb[0].mxu0 %v1636
    %v1757 = vpop.f32.mrb[0].mxu0
    %v1758 = vadd.f32 0.0, %v1757
    %v1759 = vpop.f32.mrb[0].mxu0
    %1760 = vmatprep.mubr.f32.mxu0 0.0
    %1761 = vmatmul.mubr.f32.gmra.mrb[0].mxu0 %v1639
    %v1762 = vpop.f32.mrb[0].mxu0
    %v1763 = vadd.f32 0.0, %v1762
    %v1764 = vpop.f32.mrb[0].mxu0
    %1765 = vdwg.mxu0
    %v1767 = vsel %vm1119, %v1240, 0
    %v1770 = vsel %vm1119, %v1241, 0
    %v1773 = vsel %vm1119, %v1242, 0
    %v1776 = vsel %vm1119, %v1243, 0
    %v1779 = vsel %vm1119, %v1244, 0
    %v1782 = vsel %vm1119, %v1245, 0
    %v1785 = vsel %vm1119, %v1246, 0
    %v1788 = vsel %vm1119, %v1247, 0
    %v1791 = vsel %vm1119, %v1248, 0
    %v1794 = vsel %vm1119, %v1249, 0
    %v1797 = vsel %vm1119, %v1250, 0
    %v1800 = vsel %vm1119, %v1251, 0
    %1802 = vmatprep.subr.mxu0 0.0
    %1803 = vmatpush1.msra.mxu0 %v1252
    %1804 = vmatprep.subr.mxu0 0.0
    %1805 = vmatpush1.msra.mxu0 %v1253
    %1806 = vmatprep.subr.mxu0 0.0
    %1807 = vmatpush1.msra.mxu0 %v1254
    %1808 = vmatprep.subr.mxu0 0.0
    %1809 = vmatpush1.msra.mxu0 %v1255
    %1810 = vmatprep.subr.mxu0 0.0
    %1811 = vmatpush1.msra.mxu0 %v1256
    %1812 = vmatprep.subr.mxu0 0.0
    %1813 = vmatpush1.msra.mxu0 %v1257
    %1814 = vmatprep.subr.mxu0 0.0
    %1815 = vmatpush1.msra.mxu0 %v1258
    %1816 = vmatprep.subr.mxu0 0.0
    %1817 = vmatpush1.msra.mxu0 %v1259
    %1818 = vmatprep.subr.mxu0 0.0
    %1819 = vmatpush1.msra.mxu0 %v1260
    %1820 = vmatprep.subr.mxu0 0.0
    %1821 = vmatpush1.msra.mxu0 %v1261
    %1822 = vmatprep.subr.mxu0 0.0
    %1823 = vmatpush1.msra.mxu0 %v1262
    %1824 = vmatprep.subr.mxu0 0.0
    %1825 = vmatpush1.msra.mxu0 %v1263
    %1826 = vmatprep.subr.mxu0 0.0
    %1827 = vmatpush1.msra.mxu0 0.0
    %1828 = vmatprep.subr.mxu0 0.0
    %1829 = vmatpush1.msra.mxu0 0.0
    %1830 = vmatprep.subr.mxu0 0.0
    %1831 = vmatpush1.msra.mxu0 0.0
    %1832 = vmatprep.subr.mxu0 0.0
    %1833 = vmatpush1.msra.mxu0 0.0
    %1834 = vmatprep.subr.mxu0 0.0
    %1835 = vmatpush1.msra.mxu0 0.0
    %1836 = vmatprep.subr.mxu0 0.0
    %1837 = vmatpush1.msra.mxu0 0.0
    %1838 = vmatprep.subr.mxu0 0.0
    %1839 = vmatpush1.msra.mxu0 0.0
    %1840 = vmatprep.subr.mxu0 0.0
    %1841 = vmatpush1.msra.mxu0 0.0
    %1842 = vmatprep.subr.mxu0 0.0
    %1843 = vmatpush1.msra.mxu0 0.0
    %1844 = vmatprep.subr.mxu0 0.0
    %1845 = vmatpush1.msra.mxu0 0.0
    %1846 = vmatprep.subr.mxu0 0.0
    %1847 = vmatpush1.msra.mxu0 0.0
    %1848 = vmatprep.subr.mxu0 0.0
    %1849 = vmatpush1.msra.mxu0 0.0
    %1850 = vmatprep.subr.mxu0 0.0
    %1851 = vmatpush1.msra.mxu0 0.0
    %1852 = vmatprep.subr.mxu0 0.0
    %1853 = vmatpush1.msra.mxu0 0.0
    %1854 = vmatprep.subr.mxu0 0.0
    %1855 = vmatpush1.msra.mxu0 0.0
    %1856 = vmatprep.subr.mxu0 0.0
    %1857 = vmatpush1.msra.mxu0 0.0
    %1858 = vmatprep.subr.mxu0 0.0
    %1859 = vmatpush1.msra.mxu0 0.0
    %1860 = vmatprep.subr.mxu0 0.0
    %1861 = vmatpush1.msra.mxu0 0.0
    %1862 = vmatprep.subr.mxu0 0.0
    %1863 = vmatpush1.msra.mxu0 0.0
    %1864 = vmatprep.subr.mxu0 0.0
    %1865 = vmatpush1.msra.mxu0 0.0
    %1866 = vmatprep.mubr.f32.mxu0 0.0
    %1867 = vmatmul.mubr.f32.gmra.mrb[0].mxu0 %v1767
    %v1868 = vpop.f32.mrb[0].mxu0
    %v1869 = vadd.f32 %v1708, %v1868
    %v1870 = vpop.f32.mrb[0].mxu0
    %1871 = vmatprep.mubr.f32.mxu0 0.0
    %1872 = vmatmul.mubr.f32.gmra.mrb[0].mxu0 %v1770
    %v1873 = vpop.f32.mrb[0].mxu0
    %v1874 = vadd.f32 %v1713, %v1873
    %v1875 = vpop.f32.mrb[0].mxu0
    %1876 = vmatprep.mubr.f32.mxu0 0.0
    %1877 = vmatmul.mubr.f32.gmra.mrb[0].mxu0 %v1773
    %v1878 = vpop.f32.mrb[0].mxu0
    %v1879 = vadd.f32 %v1718, %v1878
    %v1880 = vpop.f32.mrb[0].mxu0
    %1881 = vmatprep.mubr.f32.mxu0 0.0
    %1882 = vmatmul.mubr.f32.gmra.mrb[0].mxu0 %v1776
    %v1883 = vpop.f32.mrb[0].mxu0
    %v1884 = vadd.f32 %v1723, %v1883
    %v1885 = vpop.f32.mrb[0].mxu0
    %1886 = vmatprep.mubr.f32.mxu0 0.0
    %1887 = vmatmul.mubr.f32.gmra.mrb[0].mxu0 %v1779
    %v1888 = vpop.f32.mrb[0].mxu0
    %v1889 = vadd.f32 %v1728, %v1888
    %v1890 = vpop.f32.mrb[0].mxu0
    %1891 = vmatprep.mubr.f32.mxu0 0.0
    %1892 = vmatmul.mubr.f32.gmra.mrb[0].mxu0 %v1782
    %v1893 = vpop.f32.mrb[0].mxu0
    %v1894 = vadd.f32 %v1733, %v1893
    %v1895 = vpop.f32.mrb[0].mxu0
    %1896 = vmatprep.mubr.f32.mxu0 0.0
    %1897 = vmatmul.mubr.f32.gmra.mrb[0].mxu0 %v1785
    %v1898 = vpop.f32.mrb[0].mxu0
    %v1899 = vadd.f32 %v1738, %v1898
    %v1900 = vpop.f32.mrb[0].mxu0
    %1901 = vmatprep.mubr.f32.mxu0 0.0
    %1902 = vmatmul.mubr.f32.gmra.mrb[0].mxu0 %v1788
    %v1903 = vpop.f32.mrb[0].mxu0
    %v1904 = vadd.f32 %v1743, %v1903
    %v1905 = vpop.f32.mrb[0].mxu0
    %1906 = vmatprep.mubr.f32.mxu0 0.0
    %1907 = vmatmul.mubr.f32.gmra.mrb[0].mxu0 %v1791
    %v1908 = vpop.f32.mrb[0].mxu0
    %v1909 = vadd.f32 %v1748, %v1908
    %v1910 = vpop.f32.mrb[0].mxu0
    %1911 = vmatprep.mubr.f32.mxu0 0.0
    %1912 = vmatmul.mubr.f32.gmra.mrb[0].mxu0 %v1794
    %v1913 = vpop.f32.mrb[0].mxu0
    %v1914 = vadd.f32 %v1753, %v1913
    %v1915 = vpop.f32.mrb[0].mxu0
    %1916 = vmatprep.mubr.f32.mxu0 0.0
    %1917 = vmatmul.mubr.f32.gmra.mrb[0].mxu0 %v1797
    %v1918 = vpop.f32.mrb[0].mxu0
    %v1919 = vadd.f32 %v1758, %v1918
    %v1920 = vpop.f32.mrb[0].mxu0
    %1921 = vmatprep.mubr.f32.mxu0 0.0
    %1922 = vmatmul.mubr.f32.gmra.mrb[0].mxu0 %v1800
    %v1923 = vpop.f32.mrb[0].mxu0
    %v1924 = vadd.f32 %v1763, %v1923
    %v1925 = vpop.f32.mrb[0].mxu0
    %1926 = vdwg.mxu0
    %s1927 = scalar_lea.vmem [#allocation2], 96
    %v1928 = vld [vmem:[%s1927] sm:$0xff]
    %v1929 = vld [vmem:[%s1927 + $0x8] sm:$0xff]
    %v1930 = vld [vmem:[%s1927 + $0x10] sm:$0xff]
    %v1931 = vld [vmem:[%s1927 + $0x18] sm:$0xff]
    %v1932 = vld [vmem:[%s5 + $0x5] sm:$0x1]
    %v1933 = vlaneseq
    %v1934 = vshrl.u32 %v1933, 7
    %v1935 = vsub.s32 0, %v1934
    %v1936 = vrot.slane %v1932, %v1935
    %v1938 = vsel %vm220, %v1869, 0
    %v1941 = vsel %vm220, %v1874, 0
    %v1944 = vsel %vm220, %v1879, 0
    %v1947 = vsel %vm220, %v1884, 0
    %v1950 = vsel %vm220, %v1889, 0
    %v1953 = vsel %vm220, %v1894, 0
    %v1956 = vsel %vm220, %v1899, 0
    %v1959 = vsel %vm220, %v1904, 0
    %v1962 = vsel %vm220, %v1909, 0
    %v1965 = vsel %vm220, %v1914, 0
    %v1968 = vsel %vm220, %v1919, 0
    %v1971 = vsel %vm220, %v1924, 0
    %1973 = vmatprep.subr.mxu0 0.0
    %1974 = vmatpush1.msra.mxu0 %v1928
    %1975 = vmatprep.subr.mxu0 0.0
    %1976 = vmatpush1.msra.mxu0 %v1929
    %1977 = vmatprep.subr.mxu0 0.0
    %1978 = vmatpush1.msra.mxu0 %v1930
    %1979 = vmatprep.subr.mxu0 0.0
    %1980 = vmatpush1.msra.mxu0 %v1931
    %1981 = vmatprep.subr.mxu0 0.0
    %1982 = vmatpush1.msra.mxu0 0.0
    %1983 = vmatprep.subr.mxu0 0.0
    %1984 = vmatpush1.msra.mxu0 0.0
    %1985 = vmatprep.subr.mxu0 0.0
    %1986 = vmatpush1.msra.mxu0 0.0
    %1987 = vmatprep.subr.mxu0 0.0
    %1988 = vmatpush1.msra.mxu0 0.0
    %1989 = vmatprep.subr.mxu0 0.0
    %1990 = vmatpush1.msra.mxu0 0.0
    %1991 = vmatprep.subr.mxu0 0.0
    %1992 = vmatpush1.msra.mxu0 0.0
    %1993 = vmatprep.subr.mxu0 0.0
    %1994 = vmatpush1.msra.mxu0 0.0
    %1995 = vmatprep.subr.mxu0 0.0
    %1996 = vmatpush1.msra.mxu0 0.0
    %1997 = vmatprep.subr.mxu0 0.0
    %1998 = vmatpush1.msra.mxu0 0.0
    %1999 = vmatprep.subr.mxu0 0.0
    %2000 = vmatpush1.msra.mxu0 0.0
    %2001 = vmatprep.subr.mxu0 0.0
    %2002 = vmatpush1.msra.mxu0 0.0
    %2003 = vmatprep.subr.mxu0 0.0
    %2004 = vmatpush1.msra.mxu0 0.0
    %2005 = vmatprep.subr.mxu0 0.0
    %2006 = vmatpush1.msra.mxu0 0.0
    %2007 = vmatprep.subr.mxu0 0.0
    %2008 = vmatpush1.msra.mxu0 0.0
    %2009 = vmatprep.subr.mxu0 0.0
    %2010 = vmatpush1.msra.mxu0 0.0
    %2011 = vmatprep.subr.mxu0 0.0
    %2012 = vmatpush1.msra.mxu0 0.0
    %2013 = vmatprep.subr.mxu0 0.0
    %2014 = vmatpush1.msra.mxu0 0.0
    %2015 = vmatprep.subr.mxu0 0.0
    %2016 = vmatpush1.msra.mxu0 0.0
    %2017 = vmatprep.subr.mxu0 0.0
    %2018 = vmatpush1.msra.mxu0 0.0
    %2019 = vmatprep.subr.mxu0 0.0
    %2020 = vmatpush1.msra.mxu0 0.0
    %2021 = vmatprep.subr.mxu0 0.0
    %2022 = vmatpush1.msra.mxu0 0.0
    %2023 = vmatprep.subr.mxu0 0.0
    %2024 = vmatpush1.msra.mxu0 0.0
    %2025 = vmatprep.subr.mxu0 0.0
    %2026 = vmatpush1.msra.mxu0 0.0
    %2027 = vmatprep.subr.mxu0 0.0
    %2028 = vmatpush1.msra.mxu0 0.0
    %2029 = vmatprep.subr.mxu0 0.0
    %2030 = vmatpush1.msra.mxu0 0.0
    %2031 = vmatprep.subr.mxu0 0.0
    %2032 = vmatpush1.msra.mxu0 0.0
    %2033 = vmatprep.subr.mxu0 0.0
    %2034 = vmatpush1.msra.mxu0 0.0
    %2035 = vmatprep.subr.mxu0 0.0
    %2036 = vmatpush1.msra.mxu0 0.0
    %2037 = vmatprep.mubr.f32.mxu0 0.0
    %2038 = vmatmul.mubr.f32.gmra.mrb[0].mxu0 %v1938
    %v2039 = vpop.f32.mrb[0].mxu0
    %v2040 = vadd.f32 %v1936, %v2039
    %v2041 = vpop.f32.mrb[0].mxu0
    %2042 = vmatprep.mubr.f32.mxu0 0.0
    %2043 = vmatmul.mubr.f32.gmra.mrb[0].mxu0 %v1941
    %v2044 = vpop.f32.mrb[0].mxu0
    %v2045 = vadd.f32 %v1936, %v2044
    %v2046 = vpop.f32.mrb[0].mxu0
    %2047 = vmatprep.mubr.f32.mxu0 0.0
    %2048 = vmatmul.mubr.f32.gmra.mrb[0].mxu0 %v1944
    %v2049 = vpop.f32.mrb[0].mxu0
    %v2050 = vadd.f32 %v1936, %v2049
    %v2051 = vpop.f32.mrb[0].mxu0
    %2052 = vmatprep.mubr.f32.mxu0 0.0
    %2053 = vmatmul.mubr.f32.gmra.mrb[0].mxu0 %v1947
    %v2054 = vpop.f32.mrb[0].mxu0
    %v2055 = vadd.f32 %v1936, %v2054
    %v2056 = vpop.f32.mrb[0].mxu0
    %2057 = vmatprep.mubr.f32.mxu0 0.0
    %2058 = vmatmul.mubr.f32.gmra.mrb[0].mxu0 %v1950
    %v2059 = vpop.f32.mrb[0].mxu0
    %v2060 = vadd.f32 %v1936, %v2059
    %v2061 = vpop.f32.mrb[0].mxu0
    %2062 = vmatprep.mubr.f32.mxu0 0.0
    %2063 = vmatmul.mubr.f32.gmra.mrb[0].mxu0 %v1953
    %v2064 = vpop.f32.mrb[0].mxu0
    %v2065 = vadd.f32 %v1936, %v2064
    %v2066 = vpop.f32.mrb[0].mxu0
    %2067 = vmatprep.mubr.f32.mxu0 0.0
    %2068 = vmatmul.mubr.f32.gmra.mrb[0].mxu0 %v1956
    %v2069 = vpop.f32.mrb[0].mxu0
    %v2070 = vadd.f32 %v1936, %v2069
    %v2071 = vpop.f32.mrb[0].mxu0
    %2072 = vmatprep.mubr.f32.mxu0 0.0
    %2073 = vmatmul.mubr.f32.gmra.mrb[0].mxu0 %v1959
    %v2074 = vpop.f32.mrb[0].mxu0
    %v2075 = vadd.f32 %v1936, %v2074
    %v2076 = vpop.f32.mrb[0].mxu0
    %2077 = vmatprep.mubr.f32.mxu0 0.0
    %2078 = vmatmul.mubr.f32.gmra.mrb[0].mxu0 %v1962
    %v2079 = vpop.f32.mrb[0].mxu0
    %v2080 = vadd.f32 %v1936, %v2079
    %v2081 = vpop.f32.mrb[0].mxu0
    %2082 = vmatprep.mubr.f32.mxu0 0.0
    %2083 = vmatmul.mubr.f32.gmra.mrb[0].mxu0 %v1965
    %v2084 = vpop.f32.mrb[0].mxu0
    %v2085 = vadd.f32 %v1936, %v2084
    %v2086 = vpop.f32.mrb[0].mxu0
    %2087 = vmatprep.mubr.f32.mxu0 0.0
    %2088 = vmatmul.mubr.f32.gmra.mrb[0].mxu0 %v1968
    %v2089 = vpop.f32.mrb[0].mxu0
    %v2090 = vadd.f32 %v1936, %v2089
    %v2091 = vpop.f32.mrb[0].mxu0
    %2092 = vmatprep.mubr.f32.mxu0 0.0
    %2093 = vmatmul.mubr.f32.gmra.mrb[0].mxu0 %v1971
    %v2094 = vpop.f32.mrb[0].mxu0
    %v2095 = vadd.f32 %v1936, %v2094
    %v2096 = vpop.f32.mrb[0].mxu0
    %2097 = vdwg.mxu0
    %v2098 = vadd.f32 %v398, %v2040
    %v2099 = vadd.f32 %v399, %v2045
    %v2100 = vadd.f32 %v400, %v2050
    %v2101 = vadd.f32 %v401, %v2055
    %v2102 = vadd.f32 %v402, %v2060
    %v2103 = vadd.f32 %v403, %v2065
    %v2104 = vadd.f32 %v404, %v2070
    %v2105 = vadd.f32 %v405, %v2075
    %v2106 = vadd.f32 %v406, %v2080
    %v2107 = vadd.f32 %v407, %v2085
    %v2108 = vadd.f32 %v408, %v2090
    %v2109 = vadd.f32 %v409, %v2095
    %v2110 = vld [vmem:[%s5 + $0x6] sm:$0x1]
    %v2111 = vld [vmem:[%s5 + $0x7] sm:$0x1]
    %v2112 = vsel %vm220, %v2098, 0.0
    %2113 = vadd.xlane.f32.xlu0 %v2112
    %v2114 = vpop.xlane.xlu0 %2113
    %v2115 = vsel %vm220, %v2099, 0.0
    %2116 = vadd.xlane.f32.xlu0 %v2115
    %v2117 = vpop.xlane.xlu0 %2116
    %v2118 = vsel %vm220, %v2100, 0.0
    %2119 = vadd.xlane.f32.xlu0 %v2118
    %v2120 = vpop.xlane.xlu0 %2119
    %v2121 = vsel %vm220, %v2101, 0.0
    %2122 = vadd.xlane.f32.xlu0 %v2121
    %v2123 = vpop.xlane.xlu0 %2122
    %v2124 = vsel %vm220, %v2102, 0.0
    %2125 = vadd.xlane.f32.xlu0 %v2124
    %v2126 = vpop.xlane.xlu0 %2125
    %v2127 = vsel %vm220, %v2103, 0.0
    %2128 = vadd.xlane.f32.xlu0 %v2127
    %v2129 = vpop.xlane.xlu0 %2128
    %v2130 = vsel %vm220, %v2104, 0.0
    %2131 = vadd.xlane.f32.xlu0 %v2130
    %v2132 = vpop.xlane.xlu0 %2131
    %v2133 = vsel %vm220, %v2105, 0.0
    %2134 = vadd.xlane.f32.xlu0 %v2133
    %v2135 = vpop.xlane.xlu0 %2134
    %v2136 = vsel %vm220, %v2106, 0.0
    %2137 = vadd.xlane.f32.xlu0 %v2136
    %v2138 = vpop.xlane.xlu0 %2137
    %v2139 = vsel %vm220, %v2107, 0.0
    %2140 = vadd.xlane.f32.xlu0 %v2139
    %v2141 = vpop.xlane.xlu0 %2140
    %v2142 = vsel %vm220, %v2108, 0.0
    %2143 = vadd.xlane.f32.xlu0 %v2142
    %v2144 = vpop.xlane.xlu0 %2143
    %v2145 = vsel %vm220, %v2109, 0.0
    %2146 = vadd.xlane.f32.xlu0 %v2145
    %v2147 = vpop.xlane.xlu0 %2146
    %v2148 = vmul.f32 %v2114, %v257
    %v2149 = vmul.f32 %v2117, %v257
    %v2150 = vmul.f32 %v2120, %v257
    %v2151 = vmul.f32 %v2123, %v257
    %v2152 = vmul.f32 %v2126, %v257
    %v2153 = vmul.f32 %v2129, %v257
    %v2154 = vmul.f32 %v2132, %v257
    %v2155 = vmul.f32 %v2135, %v257
    %v2156 = vmul.f32 %v2138, %v257
    %v2157 = vmul.f32 %v2141, %v257
    %v2158 = vmul.f32 %v2144, %v257
    %v2159 = vmul.f32 %v2147, %v257
    %v2160 = vsub.f32 %v2098, %v2148
    %v2161 = vsub.f32 %v2099, %v2149
    %v2162 = vsub.f32 %v2100, %v2150
    %v2163 = vsub.f32 %v2101, %v2151
    %v2164 = vsub.f32 %v2102, %v2152
    %v2165 = vsub.f32 %v2103, %v2153
    %v2166 = vsub.f32 %v2104, %v2154
    %v2167 = vsub.f32 %v2105, %v2155
    %v2168 = vsub.f32 %v2106, %v2156
    %v2169 = vsub.f32 %v2107, %v2157
    %v2170 = vsub.f32 %v2108, %v2158
    %v2171 = vsub.f32 %v2109, %v2159
    %v2172 = vmul.f32 %v2160, %v2160
    %v2173 = vmul.f32 %v2161, %v2161
    %v2174 = vmul.f32 %v2162, %v2162
    %v2175 = vmul.f32 %v2163, %v2163
    %v2176 = vmul.f32 %v2164, %v2164
    %v2177 = vmul.f32 %v2165, %v2165
    %v2178 = vmul.f32 %v2166, %v2166
    %v2179 = vmul.f32 %v2167, %v2167
    %v2180 = vmul.f32 %v2168, %v2168
    %v2181 = vmul.f32 %v2169, %v2169
    %v2182 = vmul.f32 %v2170, %v2170
    %v2183 = vmul.f32 %v2171, %v2171
    %v2184 = vsel %vm220, %v2172, 0.0
    %2185 = vadd.xlane.f32.xlu0 %v2184
    %v2186 = vpop.xlane.xlu0 %2185
    %v2187 = vsel %vm220, %v2173, 0.0
    %2188 = vadd.xlane.f32.xlu0 %v2187
    %v2189 = vpop.xlane.xlu0 %2188
    %v2190 = vsel %vm220, %v2174, 0.0
    %2191 = vadd.xlane.f32.xlu0 %v2190
    %v2192 = vpop.xlane.xlu0 %2191
    %v2193 = vsel %vm220, %v2175, 0.0
    %2194 = vadd.xlane.f32.xlu0 %v2193
    %v2195 = vpop.xlane.xlu0 %2194
    %v2196 = vsel %vm220, %v2176, 0.0
    %2197 = vadd.xlane.f32.xlu0 %v2196
    %v2198 = vpop.xlane.xlu0 %2197
    %v2199 = vsel %vm220, %v2177, 0.0
    %2200 = vadd.xlane.f32.xlu0 %v2199
    %v2201 = vpop.xlane.xlu0 %2200
    %v2202 = vsel %vm220, %v2178, 0.0
    %2203 = vadd.xlane.f32.xlu0 %v2202
    %v2204 = vpop.xlane.xlu0 %2203
    %v2205 = vsel %vm220, %v2179, 0.0
    %2206 = vadd.xlane.f32.xlu0 %v2205
    %v2207 = vpop.xlane.xlu0 %2206
    %v2208 = vsel %vm220, %v2180, 0.0
    %2209 = vadd.xlane.f32.xlu0 %v2208
    %v2210 = vpop.xlane.xlu0 %2209
    %v2211 = vsel %vm220, %v2181, 0.0
    %2212 = vadd.xlane.f32.xlu0 %v2211
    %v2213 = vpop.xlane.xlu0 %2212
    %v2214 = vsel %vm220, %v2182, 0.0
    %2215 = vadd.xlane.f32.xlu0 %v2214
    %v2216 = vpop.xlane.xlu0 %2215
    %v2217 = vsel %vm220, %v2183, 0.0
    %2218 = vadd.xlane.f32.xlu0 %v2217
    %v2219 = vpop.xlane.xlu0 %2218
    %v2220 = vmul.f32 %v2186, %v257
    %v2221 = vmul.f32 %v2189, %v257
    %v2222 = vmul.f32 %v2192, %v257
    %v2223 = vmul.f32 %v2195, %v257
    %v2224 = vmul.f32 %v2198, %v257
    %v2225 = vmul.f32 %v2201, %v257
    %v2226 = vmul.f32 %v2204, %v257
    %v2227 = vmul.f32 %v2207, %v257
    %v2228 = vmul.f32 %v2210, %v257
    %v2229 = vmul.f32 %v2213, %v257
    %v2230 = vmul.f32 %v2216, %v257
    %v2231 = vmul.f32 %v2219, %v257
    %v2232 = vadd.f32 %v2220, 1e-08
    %v2233 = vadd.f32 %v2221, 1e-08
    %v2234 = vadd.f32 %v2222, 1e-08
    %v2235 = vadd.f32 %v2223, 1e-08
    %v2236 = vadd.f32 %v2224, 1e-08
    %v2237 = vadd.f32 %v2225, 1e-08
    %v2238 = vadd.f32 %v2226, 1e-08
    %v2239 = vadd.f32 %v2227, 1e-08
    %v2240 = vadd.f32 %v2228, 1e-08
    %v2241 = vadd.f32 %v2229, 1e-08
    %v2242 = vadd.f32 %v2230, 1e-08
    %v2243 = vadd.f32 %v2231, 1e-08
    %v2244 = vrsqrt.pop %v2232
    %v2245 = vrsqrt.pop %v2233
    %v2246 = vrsqrt.pop %v2234
    %v2247 = vrsqrt.pop %v2235
    %v2248 = vrsqrt.pop %v2236
    %v2249 = vrsqrt.pop %v2237
    %v2250 = vrsqrt.pop %v2238
    %v2251 = vrsqrt.pop %v2239
    %v2252 = vrsqrt.pop %v2240
    %v2253 = vrsqrt.pop %v2241
    %v2254 = vrsqrt.pop %v2242
    %v2255 = vrsqrt.pop %v2243
    %v2256 = vmul.f32 %v2160, %v2244
    %v2257 = vmul.f32 %v2161, %v2245
    %v2258 = vmul.f32 %v2162, %v2246
    %v2259 = vmul.f32 %v2163, %v2247
    %v2260 = vmul.f32 %v2164, %v2248
    %v2261 = vmul.f32 %v2165, %v2249
    %v2262 = vmul.f32 %v2166, %v2250
    %v2263 = vmul.f32 %v2167, %v2251
    %v2264 = vmul.f32 %v2168, %v2252
    %v2265 = vmul.f32 %v2169, %v2253
    %v2266 = vmul.f32 %v2170, %v2254
    %v2267 = vmul.f32 %v2171, %v2255
    %v2268 = vlaneseq
    %v2269 = vshrl.u32 %v2268, 7
    %v2270 = vsub.s32 0, %v2269
    %v2271 = vrot.slane %v2110, %v2270
    %v2272 = vmul.f32 %v2256, %v2271
    %v2273 = vmul.f32 %v2257, %v2271
    %v2274 = vmul.f32 %v2258, %v2271
    %v2275 = vmul.f32 %v2259, %v2271
    %v2276 = vmul.f32 %v2260, %v2271
    %v2277 = vmul.f32 %v2261, %v2271
    %v2278 = vmul.f32 %v2262, %v2271
    %v2279 = vmul.f32 %v2263, %v2271
    %v2280 = vmul.f32 %v2264, %v2271
    %v2281 = vmul.f32 %v2265, %v2271
    %v2282 = vmul.f32 %v2266, %v2271
    %v2283 = vmul.f32 %v2267, %v2271
    %v2284 = vlaneseq
    %v2285 = vshrl.u32 %v2284, 7
    %v2286 = vsub.s32 0, %v2285
    %v2287 = vrot.slane %v2111, %v2286
    %v2288 = vadd.f32 %v2272, %v2287
    %v2289 = vadd.f32 %v2273, %v2287
    %v2290 = vadd.f32 %v2274, %v2287
    %v2291 = vadd.f32 %v2275, %v2287
    %v2292 = vadd.f32 %v2276, %v2287
    %v2293 = vadd.f32 %v2277, %v2287
    %v2294 = vadd.f32 %v2278, %v2287
    %v2295 = vadd.f32 %v2279, %v2287
    %v2296 = vadd.f32 %v2280, %v2287
    %v2297 = vadd.f32 %v2281, %v2287
    %v2298 = vadd.f32 %v2282, %v2287
    %v2299 = vadd.f32 %v2283, %v2287
    %s2300 = scalar_lea.vmem [#allocation2], 128
    %v2301 = vld [vmem:[%s2300] sm:$0xff]
    %v2302 = vld [vmem:[%s2300 + $0x8] sm:$0xff]
    %v2303 = vld [vmem:[%s2300 + $0x10] sm:$0xff]
    %v2304 = vld [vmem:[%s2300 + $0x18] sm:$0xff]
    %v2305 = vld [vmem:[%s5 + $0x8] sm:$0x1]
    %v2306 = vlaneseq
    %v2307 = vshrl.u32 %v2306, 7
    %v2308 = vsub.s32 0, %v2307
    %v2309 = vrot.slane %v2305, %v2308
    %v2311 = vsel %vm220, %v2288, 0
    %v2314 = vsel %vm220, %v2289, 0
    %v2317 = vsel %vm220, %v2290, 0
    %v2320 = vsel %vm220, %v2291, 0
    %v2323 = vsel %vm220, %v2292, 0
    %v2326 = vsel %vm220, %v2293, 0
    %v2329 = vsel %vm220, %v2294, 0
    %v2332 = vsel %vm220, %v2295, 0
    %v2335 = vsel %vm220, %v2296, 0
    %v2338 = vsel %vm220, %v2297, 0
    %v2341 = vsel %vm220, %v2298, 0
    %v2344 = vsel %vm220, %v2299, 0
    %2346 = vmatprep.subr.mxu0 0.0
    %2347 = vmatpush1.msra.mxu0 %v2301
    %2348 = vmatprep.subr.mxu0 0.0
    %2349 = vmatpush1.msra.mxu0 %v2302
    %2350 = vmatprep.subr.mxu0 0.0
    %2351 = vmatpush1.msra.mxu0 %v2303
    %2352 = vmatprep.subr.mxu0 0.0
    %2353 = vmatpush1.msra.mxu0 %v2304
    %2354 = vmatprep.subr.mxu0 0.0
    %2355 = vmatpush1.msra.mxu0 0.0
    %2356 = vmatprep.subr.mxu0 0.0
    %2357 = vmatpush1.msra.mxu0 0.0
    %2358 = vmatprep.subr.mxu0 0.0
    %2359 = vmatpush1.msra.mxu0 0.0
    %2360 = vmatprep.subr.mxu0 0.0
    %2361 = vmatpush1.msra.mxu0 0.0
    %2362 = vmatprep.subr.mxu0 0.0
    %2363 = vmatpush1.msra.mxu0 0.0
    %2364 = vmatprep.subr.mxu0 0.0
    %2365 = vmatpush1.msra.mxu0 0.0
    %2366 = vmatprep.subr.mxu0 0.0
    %2367 = vmatpush1.msra.mxu0 0.0
    %2368 = vmatprep.subr.mxu0 0.0
    %2369 = vmatpush1.msra.mxu0 0.0
    %2370 = vmatprep.subr.mxu0 0.0
    %2371 = vmatpush1.msra.mxu0 0.0
    %2372 = vmatprep.subr.mxu0 0.0
    %2373 = vmatpush1.msra.mxu0 0.0
    %2374 = vmatprep.subr.mxu0 0.0
    %2375 = vmatpush1.msra.mxu0 0.0
    %2376 = vmatprep.subr.mxu0 0.0
    %2377 = vmatpush1.msra.mxu0 0.0
    %2378 = vmatprep.subr.mxu0 0.0
    %2379 = vmatpush1.msra.mxu0 0.0
    %2380 = vmatprep.subr.mxu0 0.0
    %2381 = vmatpush1.msra.mxu0 0.0
    %2382 = vmatprep.subr.mxu0 0.0
    %2383 = vmatpush1.msra.mxu0 0.0
    %2384 = vmatprep.subr.mxu0 0.0
    %2385 = vmatpush1.msra.mxu0 0.0
    %2386 = vmatprep.subr.mxu0 0.0
    %2387 = vmatpush1.msra.mxu0 0.0
    %2388 = vmatprep.subr.mxu0 0.0
    %2389 = vmatpush1.msra.mxu0 0.0
    %2390 = vmatprep.subr.mxu0 0.0
    %2391 = vmatpush1.msra.mxu0 0.0
    %2392 = vmatprep.subr.mxu0 0.0
    %2393 = vmatpush1.msra.mxu0 0.0
    %2394 = vmatprep.subr.mxu0 0.0
    %2395 = vmatpush1.msra.mxu0 0.0
    %2396 = vmatprep.subr.mxu0 0.0
    %2397 = vmatpush1.msra.mxu0 0.0
    %2398 = vmatprep.subr.mxu0 0.0
    %2399 = vmatpush1.msra.mxu0 0.0
    %2400 = vmatprep.subr.mxu0 0.0
    %2401 = vmatpush1.msra.mxu0 0.0
    %2402 = vmatprep.subr.mxu0 0.0
    %2403 = vmatpush1.msra.mxu0 0.0
    %2404 = vmatprep.subr.mxu0 0.0
    %2405 = vmatpush1.msra.mxu0 0.0
    %2406 = vmatprep.subr.mxu0 0.0
    %2407 = vmatpush1.msra.mxu0 0.0
    %2408 = vmatprep.subr.mxu0 0.0
    %2409 = vmatpush1.msra.mxu0 0.0
    %2410 = vmatprep.mubr.f32.mxu0 0.0
    %2411 = vmatmul.mubr.f32.gmra.mrb[0].mxu0 %v2311
    %v2412 = vpop.f32.mrb[0].mxu0
    %v2413 = vadd.f32 %v2309, %v2412
    %v2414 = vpop.f32.mrb[0].mxu0
    %2415 = vmatprep.mubr.f32.mxu0 0.0
    %2416 = vmatmul.mubr.f32.gmra.mrb[0].mxu0 %v2314
    %v2417 = vpop.f32.mrb[0].mxu0
    %v2418 = vadd.f32 %v2309, %v2417
    %v2419 = vpop.f32.mrb[0].mxu0
    %2420 = vmatprep.mubr.f32.mxu0 0.0
    %2421 = vmatmul.mubr.f32.gmra.mrb[0].mxu0 %v2317
    %v2422 = vpop.f32.mrb[0].mxu0
    %v2423 = vadd.f32 %v2309, %v2422
    %v2424 = vpop.f32.mrb[0].mxu0
    %2425 = vmatprep.mubr.f32.mxu0 0.0
    %2426 = vmatmul.mubr.f32.gmra.mrb[0].mxu0 %v2320
    %v2427 = vpop.f32.mrb[0].mxu0
    %v2428 = vadd.f32 %v2309, %v2427
    %v2429 = vpop.f32.mrb[0].mxu0
    %2430 = vmatprep.mubr.f32.mxu0 0.0
    %2431 = vmatmul.mubr.f32.gmra.mrb[0].mxu0 %v2323
    %v2432 = vpop.f32.mrb[0].mxu0
    %v2433 = vadd.f32 %v2309, %v2432
    %v2434 = vpop.f32.mrb[0].mxu0
    %2435 = vmatprep.mubr.f32.mxu0 0.0
    %2436 = vmatmul.mubr.f32.gmra.mrb[0].mxu0 %v2326
    %v2437 = vpop.f32.mrb[0].mxu0
    %v2438 = vadd.f32 %v2309, %v2437
    %v2439 = vpop.f32.mrb[0].mxu0
    %2440 = vmatprep.mubr.f32.mxu0 0.0
    %2441 = vmatmul.mubr.f32.gmra.mrb[0].mxu0 %v2329
    %v2442 = vpop.f32.mrb[0].mxu0
    %v2443 = vadd.f32 %v2309, %v2442
    %v2444 = vpop.f32.mrb[0].mxu0
    %2445 = vmatprep.mubr.f32.mxu0 0.0
    %2446 = vmatmul.mubr.f32.gmra.mrb[0].mxu0 %v2332
    %v2447 = vpop.f32.mrb[0].mxu0
    %v2448 = vadd.f32 %v2309, %v2447
    %v2449 = vpop.f32.mrb[0].mxu0
    %2450 = vmatprep.mubr.f32.mxu0 0.0
    %2451 = vmatmul.mubr.f32.gmra.mrb[0].mxu0 %v2335
    %v2452 = vpop.f32.mrb[0].mxu0
    %v2453 = vadd.f32 %v2309, %v2452
    %v2454 = vpop.f32.mrb[0].mxu0
    %2455 = vmatprep.mubr.f32.mxu0 0.0
    %2456 = vmatmul.mubr.f32.gmra.mrb[0].mxu0 %v2338
    %v2457 = vpop.f32.mrb[0].mxu0
    %v2458 = vadd.f32 %v2309, %v2457
    %v2459 = vpop.f32.mrb[0].mxu0
    %2460 = vmatprep.mubr.f32.mxu0 0.0
    %2461 = vmatmul.mubr.f32.gmra.mrb[0].mxu0 %v2341
    %v2462 = vpop.f32.mrb[0].mxu0
    %v2463 = vadd.f32 %v2309, %v2462
    %v2464 = vpop.f32.mrb[0].mxu0
    %2465 = vmatprep.mubr.f32.mxu0 0.0
    %2466 = vmatmul.mubr.f32.gmra.mrb[0].mxu0 %v2344
    %v2467 = vpop.f32.mrb[0].mxu0
    %v2468 = vadd.f32 %v2309, %v2467
    %v2469 = vpop.f32.mrb[0].mxu0
    %2470 = vdwg.mxu0
    %v2471 = vmax.f32 %v2413, 0.0
    %v2472 = vmax.f32 %v2418, 0.0
    %v2473 = vmax.f32 %v2423, 0.0
    %v2474 = vmax.f32 %v2428, 0.0
    %v2475 = vmax.f32 %v2433, 0.0
    %v2476 = vmax.f32 %v2438, 0.0
    %v2477 = vmax.f32 %v2443, 0.0
    %v2478 = vmax.f32 %v2448, 0.0
    %v2479 = vmax.f32 %v2453, 0.0
    %v2480 = vmax.f32 %v2458, 0.0
    %v2481 = vmax.f32 %v2463, 0.0
    %v2482 = vmax.f32 %v2468, 0.0
    %s2483 = scalar_lea.vmem [#allocation2], 160
    %v2484 = vld [vmem:[%s2483] sm:$0xff]
    %v2485 = vld [vmem:[%s2483 + $0x8] sm:$0xff]
    %v2486 = vld [vmem:[%s2483 + $0x10] sm:$0xff]
    %v2487 = vld [vmem:[%s2483 + $0x18] sm:$0xff]
    %v2488 = vld [vmem:[%s5 + $0x9] sm:$0x1]
    %v2489 = vlaneseq
    %v2490 = vshrl.u32 %v2489, 7
    %v2491 = vsub.s32 0, %v2490
    %v2492 = vrot.slane %v2488, %v2491
    %v2494 = vsel %vm220, %v2471, 0
    %v2497 = vsel %vm220, %v2472, 0
    %v2500 = vsel %vm220, %v2473, 0
    %v2503 = vsel %vm220, %v2474, 0
    %v2506 = vsel %vm220, %v2475, 0
    %v2509 = vsel %vm220, %v2476, 0
    %v2512 = vsel %vm220, %v2477, 0
    %v2515 = vsel %vm220, %v2478, 0
    %v2518 = vsel %vm220, %v2479, 0
    %v2521 = vsel %vm220, %v2480, 0
    %v2524 = vsel %vm220, %v2481, 0
    %v2527 = vsel %vm220, %v2482, 0
    %2529 = vmatprep.subr.mxu0 0.0
    %2530 = vmatpush1.msra.mxu0 %v2484
    %2531 = vmatprep.subr.mxu0 0.0
    %2532 = vmatpush1.msra.mxu0 %v2485
    %2533 = vmatprep.subr.mxu0 0.0
    %2534 = vmatpush1.msra.mxu0 %v2486
    %2535 = vmatprep.subr.mxu0 0.0
    %2536 = vmatpush1.msra.mxu0 %v2487
    %2537 = vmatprep.subr.mxu0 0.0
    %2538 = vmatpush1.msra.mxu0 0.0
    %2539 = vmatprep.subr.mxu0 0.0
    %2540 = vmatpush1.msra.mxu0 0.0
    %2541 = vmatprep.subr.mxu0 0.0
    %2542 = vmatpush1.msra.mxu0 0.0
    %2543 = vmatprep.subr.mxu0 0.0
    %2544 = vmatpush1.msra.mxu0 0.0
    %2545 = vmatprep.subr.mxu0 0.0
    %2546 = vmatpush1.msra.mxu0 0.0
    %2547 = vmatprep.subr.mxu0 0.0
    %2548 = vmatpush1.msra.mxu0 0.0
    %2549 = vmatprep.subr.mxu0 0.0
    %2550 = vmatpush1.msra.mxu0 0.0
    %2551 = vmatprep.subr.mxu0 0.0
    %2552 = vmatpush1.msra.mxu0 0.0
    %2553 = vmatprep.subr.mxu0 0.0
    %2554 = vmatpush1.msra.mxu0 0.0
    %2555 = vmatprep.subr.mxu0 0.0
    %2556 = vmatpush1.msra.mxu0 0.0
    %2557 = vmatprep.subr.mxu0 0.0
    %2558 = vmatpush1.msra.mxu0 0.0
    %2559 = vmatprep.subr.mxu0 0.0
    %2560 = vmatpush1.msra.mxu0 0.0
    %2561 = vmatprep.subr.mxu0 0.0
    %2562 = vmatpush1.msra.mxu0 0.0
    %2563 = vmatprep.subr.mxu0 0.0
    %2564 = vmatpush1.msra.mxu0 0.0
    %2565 = vmatprep.subr.mxu0 0.0
    %2566 = vmatpush1.msra.mxu0 0.0
    %2567 = vmatprep.subr.mxu0 0.0
    %2568 = vmatpush1.msra.mxu0 0.0
    %2569 = vmatprep.subr.mxu0 0.0
    %2570 = vmatpush1.msra.mxu0 0.0
    %2571 = vmatprep.subr.mxu0 0.0
    %2572 = vmatpush1.msra.mxu0 0.0
    %2573 = vmatprep.subr.mxu0 0.0
    %2574 = vmatpush1.msra.mxu0 0.0
    %2575 = vmatprep.subr.mxu0 0.0
    %2576 = vmatpush1.msra.mxu0 0.0
    %2577 = vmatprep.subr.mxu0 0.0
    %2578 = vmatpush1.msra.mxu0 0.0
    %2579 = vmatprep.subr.mxu0 0.0
    %2580 = vmatpush1.msra.mxu0 0.0
    %2581 = vmatprep.subr.mxu0 0.0
    %2582 = vmatpush1.msra.mxu0 0.0
    %2583 = vmatprep.subr.mxu0 0.0
    %2584 = vmatpush1.msra.mxu0 0.0
    %2585 = vmatprep.subr.mxu0 0.0
    %2586 = vmatpush1.msra.mxu0 0.0
    %2587 = vmatprep.subr.mxu0 0.0
    %2588 = vmatpush1.msra.mxu0 0.0
    %2589 = vmatprep.subr.mxu0 0.0
    %2590 = vmatpush1.msra.mxu0 0.0
    %2591 = vmatprep.subr.mxu0 0.0
    %2592 = vmatpush1.msra.mxu0 0.0
    %2593 = vmatprep.mubr.f32.mxu0 0.0
    %2594 = vmatmul.mubr.f32.gmra.mrb[0].mxu0 %v2494
    %v2595 = vpop.f32.mrb[0].mxu0
    %v2596 = vadd.f32 %v2492, %v2595
    %v2597 = vpop.f32.mrb[0].mxu0
    %2598 = vmatprep.mubr.f32.mxu0 0.0
    %2599 = vmatmul.mubr.f32.gmra.mrb[0].mxu0 %v2497
    %v2600 = vpop.f32.mrb[0].mxu0
    %v2601 = vadd.f32 %v2492, %v2600
    %v2602 = vpop.f32.mrb[0].mxu0
    %2603 = vmatprep.mubr.f32.mxu0 0.0
    %2604 = vmatmul.mubr.f32.gmra.mrb[0].mxu0 %v2500
    %v2605 = vpop.f32.mrb[0].mxu0
    %v2606 = vadd.f32 %v2492, %v2605
    %v2607 = vpop.f32.mrb[0].mxu0
    %2608 = vmatprep.mubr.f32.mxu0 0.0
    %2609 = vmatmul.mubr.f32.gmra.mrb[0].mxu0 %v2503
    %v2610 = vpop.f32.mrb[0].mxu0
    %v2611 = vadd.f32 %v2492, %v2610
    %v2612 = vpop.f32.mrb[0].mxu0
    %2613 = vmatprep.mubr.f32.mxu0 0.0
    %2614 = vmatmul.mubr.f32.gmra.mrb[0].mxu0 %v2506
    %v2615 = vpop.f32.mrb[0].mxu0
    %v2616 = vadd.f32 %v2492, %v2615
    %v2617 = vpop.f32.mrb[0].mxu0
    %2618 = vmatprep.mubr.f32.mxu0 0.0
    %2619 = vmatmul.mubr.f32.gmra.mrb[0].mxu0 %v2509
    %v2620 = vpop.f32.mrb[0].mxu0
    %v2621 = vadd.f32 %v2492, %v2620
    %v2622 = vpop.f32.mrb[0].mxu0
    %2623 = vmatprep.mubr.f32.mxu0 0.0
    %2624 = vmatmul.mubr.f32.gmra.mrb[0].mxu0 %v2512
    %v2625 = vpop.f32.mrb[0].mxu0
    %v2626 = vadd.f32 %v2492, %v2625
    %v2627 = vpop.f32.mrb[0].mxu0
    %2628 = vmatprep.mubr.f32.mxu0 0.0
    %2629 = vmatmul.mubr.f32.gmra.mrb[0].mxu0 %v2515
    %v2630 = vpop.f32.mrb[0].mxu0
    %v2631 = vadd.f32 %v2492, %v2630
    %v2632 = vpop.f32.mrb[0].mxu0
    %2633 = vmatprep.mubr.f32.mxu0 0.0
    %2634 = vmatmul.mubr.f32.gmra.mrb[0].mxu0 %v2518
    %v2635 = vpop.f32.mrb[0].mxu0
    %v2636 = vadd.f32 %v2492, %v2635
    %v2637 = vpop.f32.mrb[0].mxu0
    %2638 = vmatprep.mubr.f32.mxu0 0.0
    %2639 = vmatmul.mubr.f32.gmra.mrb[0].mxu0 %v2521
    %v2640 = vpop.f32.mrb[0].mxu0
    %v2641 = vadd.f32 %v2492, %v2640
    %v2642 = vpop.f32.mrb[0].mxu0
    %2643 = vmatprep.mubr.f32.mxu0 0.0
    %2644 = vmatmul.mubr.f32.gmra.mrb[0].mxu0 %v2524
    %v2645 = vpop.f32.mrb[0].mxu0
    %v2646 = vadd.f32 %v2492, %v2645
    %v2647 = vpop.f32.mrb[0].mxu0
    %2648 = vmatprep.mubr.f32.mxu0 0.0
    %2649 = vmatmul.mubr.f32.gmra.mrb[0].mxu0 %v2527
    %v2650 = vpop.f32.mrb[0].mxu0
    %v2651 = vadd.f32 %v2492, %v2650
    %v2652 = vpop.f32.mrb[0].mxu0
    %2653 = vdwg.mxu0
    %v2654 = vadd.f32 %v2288, %v2596
    %v2655 = vadd.f32 %v2289, %v2601
    %v2656 = vadd.f32 %v2290, %v2606
    %v2657 = vadd.f32 %v2291, %v2611
    %v2658 = vadd.f32 %v2292, %v2616
    %v2659 = vadd.f32 %v2293, %v2621
    %v2660 = vadd.f32 %v2294, %v2626
    %v2661 = vadd.f32 %v2295, %v2631
    %v2662 = vadd.f32 %v2296, %v2636
    %v2663 = vadd.f32 %v2297, %v2641
    %v2664 = vadd.f32 %v2298, %v2646
    %v2665 = vadd.f32 %v2299, %v2651
    %v2666 = vmul.f32 %v2654, %v113
    %v2667 = vmul.f32 %v2655, %v118
    %v2668 = vmul.f32 %v2656, %v123
    %v2669 = vmul.f32 %v2657, %v128
    %v2670 = vmul.f32 %v2658, %v133
    %v2671 = vmul.f32 %v2659, %v138
    %v2672 = vmul.f32 %v2660, %v143
    %v2673 = vmul.f32 %v2661, %v148
    %v2674 = vmul.f32 %v2662, %v153
    %v2675 = vmul.f32 %v2663, %v158
    %v2676 = vmul.f32 %v2664, %v163
    %v2677 = vmul.f32 %v2665, %v168
    %v2678 = vld [vmem:[%s5 + $0xa] sm:$0x1]
    %v2679 = vld [vmem:[%s5 + $0xb] sm:$0x1]
    %v2680 = vsel %vm220, %v2666, 0.0
    %2681 = vadd.xlane.f32.xlu0 %v2680
    %v2682 = vpop.xlane.xlu0 %2681
    %v2683 = vsel %vm220, %v2667, 0.0
    %2684 = vadd.xlane.f32.xlu0 %v2683
    %v2685 = vpop.xlane.xlu0 %2684
    %v2686 = vsel %vm220, %v2668, 0.0
    %2687 = vadd.xlane.f32.xlu0 %v2686
    %v2688 = vpop.xlane.xlu0 %2687
    %v2689 = vsel %vm220, %v2669, 0.0
    %2690 = vadd.xlane.f32.xlu0 %v2689
    %v2691 = vpop.xlane.xlu0 %2690
    %v2692 = vsel %vm220, %v2670, 0.0
    %2693 = vadd.xlane.f32.xlu0 %v2692
    %v2694 = vpop.xlane.xlu0 %2693
    %v2695 = vsel %vm220, %v2671, 0.0
    %2696 = vadd.xlane.f32.xlu0 %v2695
    %v2697 = vpop.xlane.xlu0 %2696
    %v2698 = vsel %vm220, %v2672, 0.0
    %2699 = vadd.xlane.f32.xlu0 %v2698
    %v2700 = vpop.xlane.xlu0 %2699
    %v2701 = vsel %vm220, %v2673, 0.0
    %2702 = vadd.xlane.f32.xlu0 %v2701
    %v2703 = vpop.xlane.xlu0 %2702
    %v2704 = vsel %vm220, %v2674, 0.0
    %2705 = vadd.xlane.f32.xlu0 %v2704
    %v2706 = vpop.xlane.xlu0 %2705
    %v2707 = vsel %vm220, %v2675, 0.0
    %2708 = vadd.xlane.f32.xlu0 %v2707
    %v2709 = vpop.xlane.xlu0 %2708
    %v2710 = vsel %vm220, %v2676, 0.0
    %2711 = vadd.xlane.f32.xlu0 %v2710
    %v2712 = vpop.xlane.xlu0 %2711
    %v2713 = vsel %vm220, %v2677, 0.0
    %2714 = vadd.xlane.f32.xlu0 %v2713
    %v2715 = vpop.xlane.xlu0 %2714
    %v2716 = vmul.f32 %v2682, %v257
    %v2717 = vmul.f32 %v2685, %v257
    %v2718 = vmul.f32 %v2688, %v257
    %v2719 = vmul.f32 %v2691, %v257
    %v2720 = vmul.f32 %v2694, %v257
    %v2721 = vmul.f32 %v2697, %v257
    %v2722 = vmul.f32 %v2700, %v257
    %v2723 = vmul.f32 %v2703, %v257
    %v2724 = vmul.f32 %v2706, %v257
    %v2725 = vmul.f32 %v2709, %v257
    %v2726 = vmul.f32 %v2712, %v257
    %v2727 = vmul.f32 %v2715, %v257
    %v2728 = vsub.f32 %v2666, %v2716
    %v2729 = vsub.f32 %v2667, %v2717
    %v2730 = vsub.f32 %v2668, %v2718
    %v2731 = vsub.f32 %v2669, %v2719
    %v2732 = vsub.f32 %v2670, %v2720
    %v2733 = vsub.f32 %v2671, %v2721
    %v2734 = vsub.f32 %v2672, %v2722
    %v2735 = vsub.f32 %v2673, %v2723
    %v2736 = vsub.f32 %v2674, %v2724
    %v2737 = vsub.f32 %v2675, %v2725
    %v2738 = vsub.f32 %v2676, %v2726
    %v2739 = vsub.f32 %v2677, %v2727
    %v2740 = vmul.f32 %v2728, %v2728
    %v2741 = vmul.f32 %v2729, %v2729
    %v2742 = vmul.f32 %v2730, %v2730
    %v2743 = vmul.f32 %v2731, %v2731
    %v2744 = vmul.f32 %v2732, %v2732
    %v2745 = vmul.f32 %v2733, %v2733
    %v2746 = vmul.f32 %v2734, %v2734
    %v2747 = vmul.f32 %v2735, %v2735
    %v2748 = vmul.f32 %v2736, %v2736
    %v2749 = vmul.f32 %v2737, %v2737
    %v2750 = vmul.f32 %v2738, %v2738
    %v2751 = vmul.f32 %v2739, %v2739
    %v2752 = vsel %vm220, %v2740, 0.0
    %2753 = vadd.xlane.f32.xlu0 %v2752
    %v2754 = vpop.xlane.xlu0 %2753
    %v2755 = vsel %vm220, %v2741, 0.0
    %2756 = vadd.xlane.f32.xlu0 %v2755
    %v2757 = vpop.xlane.xlu0 %2756
    %v2758 = vsel %vm220, %v2742, 0.0
    %2759 = vadd.xlane.f32.xlu0 %v2758
    %v2760 = vpop.xlane.xlu0 %2759
    %v2761 = vsel %vm220, %v2743, 0.0
    %2762 = vadd.xlane.f32.xlu0 %v2761
    %v2763 = vpop.xlane.xlu0 %2762
    %v2764 = vsel %vm220, %v2744, 0.0
    %2765 = vadd.xlane.f32.xlu0 %v2764
    %v2766 = vpop.xlane.xlu0 %2765
    %v2767 = vsel %vm220, %v2745, 0.0
    %2768 = vadd.xlane.f32.xlu0 %v2767
    %v2769 = vpop.xlane.xlu0 %2768
    %v2770 = vsel %vm220, %v2746, 0.0
    %2771 = vadd.xlane.f32.xlu0 %v2770
    %v2772 = vpop.xlane.xlu0 %2771
    %v2773 = vsel %vm220, %v2747, 0.0
    %2774 = vadd.xlane.f32.xlu0 %v2773
    %v2775 = vpop.xlane.xlu0 %2774
    %v2776 = vsel %vm220, %v2748, 0.0
    %2777 = vadd.xlane.f32.xlu0 %v2776
    %v2778 = vpop.xlane.xlu0 %2777
    %v2779 = vsel %vm220, %v2749, 0.0
    %2780 = vadd.xlane.f32.xlu0 %v2779
    %v2781 = vpop.xlane.xlu0 %2780
    %v2782 = vsel %vm220, %v2750, 0.0
    %2783 = vadd.xlane.f32.xlu0 %v2782
    %v2784 = vpop.xlane.xlu0 %2783
    %v2785 = vsel %vm220, %v2751, 0.0
    %2786 = vadd.xlane.f32.xlu0 %v2785
    %v2787 = vpop.xlane.xlu0 %2786
    %v2788 = vmul.f32 %v2754, %v257
    %v2789 = vmul.f32 %v2757, %v257
    %v2790 = vmul.f32 %v2760, %v257
    %v2791 = vmul.f32 %v2763, %v257
    %v2792 = vmul.f32 %v2766, %v257
    %v2793 = vmul.f32 %v2769, %v257
    %v2794 = vmul.f32 %v2772, %v257
    %v2795 = vmul.f32 %v2775, %v257
    %v2796 = vmul.f32 %v2778, %v257
    %v2797 = vmul.f32 %v2781, %v257
    %v2798 = vmul.f32 %v2784, %v257
    %v2799 = vmul.f32 %v2787, %v257
    %v2800 = vadd.f32 %v2788, 1e-08
    %v2801 = vadd.f32 %v2789, 1e-08
    %v2802 = vadd.f32 %v2790, 1e-08
    %v2803 = vadd.f32 %v2791, 1e-08
    %v2804 = vadd.f32 %v2792, 1e-08
    %v2805 = vadd.f32 %v2793, 1e-08
    %v2806 = vadd.f32 %v2794, 1e-08
    %v2807 = vadd.f32 %v2795, 1e-08
    %v2808 = vadd.f32 %v2796, 1e-08
    %v2809 = vadd.f32 %v2797, 1e-08
    %v2810 = vadd.f32 %v2798, 1e-08
    %v2811 = vadd.f32 %v2799, 1e-08
    %v2812 = vrsqrt.pop %v2800
    %v2813 = vrsqrt.pop %v2801
    %v2814 = vrsqrt.pop %v2802
    %v2815 = vrsqrt.pop %v2803
    %v2816 = vrsqrt.pop %v2804
    %v2817 = vrsqrt.pop %v2805
    %v2818 = vrsqrt.pop %v2806
    %v2819 = vrsqrt.pop %v2807
    %v2820 = vrsqrt.pop %v2808
    %v2821 = vrsqrt.pop %v2809
    %v2822 = vrsqrt.pop %v2810
    %v2823 = vrsqrt.pop %v2811
    %v2824 = vmul.f32 %v2728, %v2812
    %v2825 = vmul.f32 %v2729, %v2813
    %v2826 = vmul.f32 %v2730, %v2814
    %v2827 = vmul.f32 %v2731, %v2815
    %v2828 = vmul.f32 %v2732, %v2816
    %v2829 = vmul.f32 %v2733, %v2817
    %v2830 = vmul.f32 %v2734, %v2818
    %v2831 = vmul.f32 %v2735, %v2819
    %v2832 = vmul.f32 %v2736, %v2820
    %v2833 = vmul.f32 %v2737, %v2821
    %v2834 = vmul.f32 %v2738, %v2822
    %v2835 = vmul.f32 %v2739, %v2823
    %v2836 = vlaneseq
    %v2837 = vshrl.u32 %v2836, 7
    %v2838 = vsub.s32 0, %v2837
    %v2839 = vrot.slane %v2678, %v2838
    %v2840 = vmul.f32 %v2824, %v2839
    %v2841 = vmul.f32 %v2825, %v2839
    %v2842 = vmul.f32 %v2826, %v2839
    %v2843 = vmul.f32 %v2827, %v2839
    %v2844 = vmul.f32 %v2828, %v2839
    %v2845 = vmul.f32 %v2829, %v2839
    %v2846 = vmul.f32 %v2830, %v2839
    %v2847 = vmul.f32 %v2831, %v2839
    %v2848 = vmul.f32 %v2832, %v2839
    %v2849 = vmul.f32 %v2833, %v2839
    %v2850 = vmul.f32 %v2834, %v2839
    %v2851 = vmul.f32 %v2835, %v2839
    %v2852 = vlaneseq
    %v2853 = vshrl.u32 %v2852, 7
    %v2854 = vsub.s32 0, %v2853
    %v2855 = vrot.slane %v2679, %v2854
    %v2856 = vadd.f32 %v2840, %v2855
    %v2857 = vadd.f32 %v2841, %v2855
    %v2858 = vadd.f32 %v2842, %v2855
    %v2859 = vadd.f32 %v2843, %v2855
    %v2860 = vadd.f32 %v2844, %v2855
    %v2861 = vadd.f32 %v2845, %v2855
    %v2862 = vadd.f32 %v2846, %v2855
    %v2863 = vadd.f32 %v2847, %v2855
    %v2864 = vadd.f32 %v2848, %v2855
    %v2865 = vadd.f32 %v2849, %v2855
    %v2866 = vadd.f32 %v2850, %v2855
    %v2867 = vadd.f32 %v2851, %v2855
    %s2868 = scalar_lea.vmem [#allocation2], 192
    %v2869 = vld [vmem:[%s2868] sm:$0xff]
    %v2870 = vld [vmem:[%s2868 + $0x8] sm:$0xff]
    %v2871 = vld [vmem:[%s2868 + $0x10] sm:$0xff]
    %v2872 = vld [vmem:[%s2868 + $0x18] sm:$0xff]
    %v2873 = vld [vmem:[%s5 + $0xc] sm:$0x1]
    %v2874 = vlaneseq
    %v2875 = vshrl.u32 %v2874, 7
    %v2876 = vsub.s32 0, %v2875
    %v2877 = vrot.slane %v2873, %v2876
    %v2879 = vsel %vm220, %v2856, 0
    %v2882 = vsel %vm220, %v2857, 0
    %v2885 = vsel %vm220, %v2858, 0
    %v2888 = vsel %vm220, %v2859, 0
    %v2891 = vsel %vm220, %v2860, 0
    %v2894 = vsel %vm220, %v2861, 0
    %v2897 = vsel %vm220, %v2862, 0
    %v2900 = vsel %vm220, %v2863, 0
    %v2903 = vsel %vm220, %v2864, 0
    %v2906 = vsel %vm220, %v2865, 0
    %v2909 = vsel %vm220, %v2866, 0
    %v2912 = vsel %vm220, %v2867, 0
    %2914 = vmatprep.subr.mxu0 0.0
    %2915 = vmatpush1.msra.mxu0 %v2869
    %2916 = vmatprep.subr.mxu0 0.0
    %2917 = vmatpush1.msra.mxu0 %v2870
    %2918 = vmatprep.subr.mxu0 0.0
    %2919 = vmatpush1.msra.mxu0 %v2871
    %2920 = vmatprep.subr.mxu0 0.0
    %2921 = vmatpush1.msra.mxu0 %v2872
    %2922 = vmatprep.subr.mxu0 0.0
    %2923 = vmatpush1.msra.mxu0 0.0
    %2924 = vmatprep.subr.mxu0 0.0
    %2925 = vmatpush1.msra.mxu0 0.0
    %2926 = vmatprep.subr.mxu0 0.0
    %2927 = vmatpush1.msra.mxu0 0.0
    %2928 = vmatprep.subr.mxu0 0.0
    %2929 = vmatpush1.msra.mxu0 0.0
    %2930 = vmatprep.subr.mxu0 0.0
    %2931 = vmatpush1.msra.mxu0 0.0
    %2932 = vmatprep.subr.mxu0 0.0
    %2933 = vmatpush1.msra.mxu0 0.0
    %2934 = vmatprep.subr.mxu0 0.0
    %2935 = vmatpush1.msra.mxu0 0.0
    %2936 = vmatprep.subr.mxu0 0.0
    %2937 = vmatpush1.msra.mxu0 0.0
    %2938 = vmatprep.subr.mxu0 0.0
    %2939 = vmatpush1.msra.mxu0 0.0
    %2940 = vmatprep.subr.mxu0 0.0
    %2941 = vmatpush1.msra.mxu0 0.0
    %2942 = vmatprep.subr.mxu0 0.0
    %2943 = vmatpush1.msra.mxu0 0.0
    %2944 = vmatprep.subr.mxu0 0.0
    %2945 = vmatpush1.msra.mxu0 0.0
    %2946 = vmatprep.subr.mxu0 0.0
    %2947 = vmatpush1.msra.mxu0 0.0
    %2948 = vmatprep.subr.mxu0 0.0
    %2949 = vmatpush1.msra.mxu0 0.0
    %2950 = vmatprep.subr.mxu0 0.0
    %2951 = vmatpush1.msra.mxu0 0.0
    %2952 = vmatprep.subr.mxu0 0.0
    %2953 = vmatpush1.msra.mxu0 0.0
    %2954 = vmatprep.subr.mxu0 0.0
    %2955 = vmatpush1.msra.mxu0 0.0
    %2956 = vmatprep.subr.mxu0 0.0
    %2957 = vmatpush1.msra.mxu0 0.0
    %2958 = vmatprep.subr.mxu0 0.0
    %2959 = vmatpush1.msra.mxu0 0.0
    %2960 = vmatprep.subr.mxu0 0.0
    %2961 = vmatpush1.msra.mxu0 0.0
    %2962 = vmatprep.subr.mxu0 0.0
    %2963 = vmatpush1.msra.mxu0 0.0
    %2964 = vmatprep.subr.mxu0 0.0
    %2965 = vmatpush1.msra.mxu0 0.0
    %2966 = vmatprep.subr.mxu0 0.0
    %2967 = vmatpush1.msra.mxu0 0.0
    %2968 = vmatprep.subr.mxu0 0.0
    %2969 = vmatpush1.msra.mxu0 0.0
    %2970 = vmatprep.subr.mxu0 0.0
    %2971 = vmatpush1.msra.mxu0 0.0
    %2972 = vmatprep.subr.mxu0 0.0
    %2973 = vmatpush1.msra.mxu0 0.0
    %2974 = vmatprep.subr.mxu0 0.0
    %2975 = vmatpush1.msra.mxu0 0.0
    %2976 = vmatprep.subr.mxu0 0.0
    %2977 = vmatpush1.msra.mxu0 0.0
    %2978 = vmatprep.mubr.f32.mxu0 0.0
    %2979 = vmatmul.mubr.f32.gmra.mrb[0].mxu0 %v2879
    %v2980 = vpop.f32.mrb[0].mxu0
    %v2981 = vadd.f32 %v2877, %v2980
    %v2982 = vpop.f32.mrb[0].mxu0
    %2983 = vmatprep.mubr.f32.mxu0 0.0
    %2984 = vmatmul.mubr.f32.gmra.mrb[0].mxu0 %v2882
    %v2985 = vpop.f32.mrb[0].mxu0
    %v2986 = vadd.f32 %v2877, %v2985
    %v2987 = vpop.f32.mrb[0].mxu0
    %2988 = vmatprep.mubr.f32.mxu0 0.0
    %2989 = vmatmul.mubr.f32.gmra.mrb[0].mxu0 %v2885
    %v2990 = vpop.f32.mrb[0].mxu0
    %v2991 = vadd.f32 %v2877, %v2990
    %v2992 = vpop.f32.mrb[0].mxu0
    %2993 = vmatprep.mubr.f32.mxu0 0.0
    %2994 = vmatmul.mubr.f32.gmra.mrb[0].mxu0 %v2888
    %v2995 = vpop.f32.mrb[0].mxu0
    %v2996 = vadd.f32 %v2877, %v2995
    %v2997 = vpop.f32.mrb[0].mxu0
    %2998 = vmatprep.mubr.f32.mxu0 0.0
    %2999 = vmatmul.mubr.f32.gmra.mrb[0].mxu0 %v2891
    %v3000 = vpop.f32.mrb[0].mxu0
    %v3001 = vadd.f32 %v2877, %v3000
    %v3002 = vpop.f32.mrb[0].mxu0
    %3003 = vmatprep.mubr.f32.mxu0 0.0
    %3004 = vmatmul.mubr.f32.gmra.mrb[0].mxu0 %v2894
    %v3005 = vpop.f32.mrb[0].mxu0
    %v3006 = vadd.f32 %v2877, %v3005
    %v3007 = vpop.f32.mrb[0].mxu0
    %3008 = vmatprep.mubr.f32.mxu0 0.0
    %3009 = vmatmul.mubr.f32.gmra.mrb[0].mxu0 %v2897
    %v3010 = vpop.f32.mrb[0].mxu0
    %v3011 = vadd.f32 %v2877, %v3010
    %v3012 = vpop.f32.mrb[0].mxu0
    %3013 = vmatprep.mubr.f32.mxu0 0.0
    %3014 = vmatmul.mubr.f32.gmra.mrb[0].mxu0 %v2900
    %v3015 = vpop.f32.mrb[0].mxu0
    %v3016 = vadd.f32 %v2877, %v3015
    %v3017 = vpop.f32.mrb[0].mxu0
    %3018 = vmatprep.mubr.f32.mxu0 0.0
    %3019 = vmatmul.mubr.f32.gmra.mrb[0].mxu0 %v2903
    %v3020 = vpop.f32.mrb[0].mxu0
    %v3021 = vadd.f32 %v2877, %v3020
    %v3022 = vpop.f32.mrb[0].mxu0
    %3023 = vmatprep.mubr.f32.mxu0 0.0
    %3024 = vmatmul.mubr.f32.gmra.mrb[0].mxu0 %v2906
    %v3025 = vpop.f32.mrb[0].mxu0
    %v3026 = vadd.f32 %v2877, %v3025
    %v3027 = vpop.f32.mrb[0].mxu0
    %3028 = vmatprep.mubr.f32.mxu0 0.0
    %3029 = vmatmul.mubr.f32.gmra.mrb[0].mxu0 %v2909
    %v3030 = vpop.f32.mrb[0].mxu0
    %v3031 = vadd.f32 %v2877, %v3030
    %v3032 = vpop.f32.mrb[0].mxu0
    %3033 = vmatprep.mubr.f32.mxu0 0.0
    %3034 = vmatmul.mubr.f32.gmra.mrb[0].mxu0 %v2912
    %v3035 = vpop.f32.mrb[0].mxu0
    %v3036 = vadd.f32 %v2877, %v3035
    %v3037 = vpop.f32.mrb[0].mxu0
    %3038 = vdwg.mxu0
    %s3039 = scalar_lea.vmem [#allocation2], 224
    %v3040 = vld [vmem:[%s3039] sm:$0xff]
    %v3041 = vld [vmem:[%s3039 + $0x8] sm:$0xff]
    %v3042 = vld [vmem:[%s3039 + $0x10] sm:$0xff]
    %v3043 = vld [vmem:[%s3039 + $0x18] sm:$0xff]
    %v3044 = vld [vmem:[%s5 + $0xd] sm:$0x1]
    %v3045 = vlaneseq
    %v3046 = vshrl.u32 %v3045, 7
    %v3047 = vsub.s32 0, %v3046
    %v3048 = vrot.slane %v3044, %v3047
    %v3050 = vsel %vm220, %v2666, 0
    %v3053 = vsel %vm220, %v2667, 0
    %v3056 = vsel %vm220, %v2668, 0
    %v3059 = vsel %vm220, %v2669, 0
    %v3062 = vsel %vm220, %v2670, 0
    %v3065 = vsel %vm220, %v2671, 0
    %v3068 = vsel %vm220, %v2672, 0
    %v3071 = vsel %vm220, %v2673, 0
    %v3074 = vsel %vm220, %v2674, 0
    %v3077 = vsel %vm220, %v2675, 0
    %v3080 = vsel %vm220, %v2676, 0
    %v3083 = vsel %vm220, %v2677, 0
    %3085 = vmatprep.subr.mxu0 0.0
    %3086 = vmatpush1.msra.mxu0 %v3040
    %3087 = vmatprep.subr.mxu0 0.0
    %3088 = vmatpush1.msra.mxu0 %v3041
    %3089 = vmatprep.subr.mxu0 0.0
    %3090 = vmatpush1.msra.mxu0 %v3042
    %3091 = vmatprep.subr.mxu0 0.0
    %3092 = vmatpush1.msra.mxu0 %v3043
    %3093 = vmatprep.subr.mxu0 0.0
    %3094 = vmatpush1.msra.mxu0 0.0
    %3095 = vmatprep.subr.mxu0 0.0
    %3096 = vmatpush1.msra.mxu0 0.0
    %3097 = vmatprep.subr.mxu0 0.0
    %3098 = vmatpush1.msra.mxu0 0.0
    %3099 = vmatprep.subr.mxu0 0.0
    %3100 = vmatpush1.msra.mxu0 0.0
    %3101 = vmatprep.subr.mxu0 0.0
    %3102 = vmatpush1.msra.mxu0 0.0
    %3103 = vmatprep.subr.mxu0 0.0
    %3104 = vmatpush1.msra.mxu0 0.0
    %3105 = vmatprep.subr.mxu0 0.0
    %3106 = vmatpush1.msra.mxu0 0.0
    %3107 = vmatprep.subr.mxu0 0.0
    %3108 = vmatpush1.msra.mxu0 0.0
    %3109 = vmatprep.subr.mxu0 0.0
    %3110 = vmatpush1.msra.mxu0 0.0
    %3111 = vmatprep.subr.mxu0 0.0
    %3112 = vmatpush1.msra.mxu0 0.0
    %3113 = vmatprep.subr.mxu0 0.0
    %3114 = vmatpush1.msra.mxu0 0.0
    %3115 = vmatprep.subr.mxu0 0.0
    %3116 = vmatpush1.msra.mxu0 0.0
    %3117 = vmatprep.subr.mxu0 0.0
    %3118 = vmatpush1.msra.mxu0 0.0
    %3119 = vmatprep.subr.mxu0 0.0
    %3120 = vmatpush1.msra.mxu0 0.0
    %3121 = vmatprep.subr.mxu0 0.0
    %3122 = vmatpush1.msra.mxu0 0.0
    %3123 = vmatprep.subr.mxu0 0.0
    %3124 = vmatpush1.msra.mxu0 0.0
    %3125 = vmatprep.subr.mxu0 0.0
    %3126 = vmatpush1.msra.mxu0 0.0
    %3127 = vmatprep.subr.mxu0 0.0
    %3128 = vmatpush1.msra.mxu0 0.0
    %3129 = vmatprep.subr.mxu0 0.0
    %3130 = vmatpush1.msra.mxu0 0.0
    %3131 = vmatprep.subr.mxu0 0.0
    %3132 = vmatpush1.msra.mxu0 0.0
    %3133 = vmatprep.subr.mxu0 0.0
    %3134 = vmatpush1.msra.mxu0 0.0
    %3135 = vmatprep.subr.mxu0 0.0
    %3136 = vmatpush1.msra.mxu0 0.0
    %3137 = vmatprep.subr.mxu0 0.0
    %3138 = vmatpush1.msra.mxu0 0.0
    %3139 = vmatprep.subr.mxu0 0.0
    %3140 = vmatpush1.msra.mxu0 0.0
    %3141 = vmatprep.subr.mxu0 0.0
    %3142 = vmatpush1.msra.mxu0 0.0
    %3143 = vmatprep.subr.mxu0 0.0
    %3144 = vmatpush1.msra.mxu0 0.0
    %3145 = vmatprep.subr.mxu0 0.0
    %3146 = vmatpush1.msra.mxu0 0.0
    %3147 = vmatprep.subr.mxu0 0.0
    %3148 = vmatpush1.msra.mxu0 0.0
    %3149 = vmatprep.mubr.f32.mxu0 0.0
    %3150 = vmatmul.mubr.f32.gmra.mrb[0].mxu0 %v3050
    %v3151 = vpop.f32.mrb[0].mxu0
    %v3152 = vadd.f32 %v3048, %v3151
    %v3153 = vpop.f32.mrb[0].mxu0
    %3154 = vmatprep.mubr.f32.mxu0 0.0
    %3155 = vmatmul.mubr.f32.gmra.mrb[0].mxu0 %v3053
    %v3156 = vpop.f32.mrb[0].mxu0
    %v3157 = vadd.f32 %v3048, %v3156
    %v3158 = vpop.f32.mrb[0].mxu0
    %3159 = vmatprep.mubr.f32.mxu0 0.0
    %3160 = vmatmul.mubr.f32.gmra.mrb[0].mxu0 %v3056
    %v3161 = vpop.f32.mrb[0].mxu0
    %v3162 = vadd.f32 %v3048, %v3161
    %v3163 = vpop.f32.mrb[0].mxu0
    %3164 = vmatprep.mubr.f32.mxu0 0.0
    %3165 = vmatmul.mubr.f32.gmra.mrb[0].mxu0 %v3059
    %v3166 = vpop.f32.mrb[0].mxu0
    %v3167 = vadd.f32 %v3048, %v3166
    %v3168 = vpop.f32.mrb[0].mxu0
    %3169 = vmatprep.mubr.f32.mxu0 0.0
    %3170 = vmatmul.mubr.f32.gmra.mrb[0].mxu0 %v3062
    %v3171 = vpop.f32.mrb[0].mxu0
    %v3172 = vadd.f32 %v3048, %v3171
    %v3173 = vpop.f32.mrb[0].mxu0
    %3174 = vmatprep.mubr.f32.mxu0 0.0
    %3175 = vmatmul.mubr.f32.gmra.mrb[0].mxu0 %v3065
    %v3176 = vpop.f32.mrb[0].mxu0
    %v3177 = vadd.f32 %v3048, %v3176
    %v3178 = vpop.f32.mrb[0].mxu0
    %3179 = vmatprep.mubr.f32.mxu0 0.0
    %3180 = vmatmul.mubr.f32.gmra.mrb[0].mxu0 %v3068
    %v3181 = vpop.f32.mrb[0].mxu0
    %v3182 = vadd.f32 %v3048, %v3181
    %v3183 = vpop.f32.mrb[0].mxu0
    %3184 = vmatprep.mubr.f32.mxu0 0.0
    %3185 = vmatmul.mubr.f32.gmra.mrb[0].mxu0 %v3071
    %v3186 = vpop.f32.mrb[0].mxu0
    %v3187 = vadd.f32 %v3048, %v3186
    %v3188 = vpop.f32.mrb[0].mxu0
    %3189 = vmatprep.mubr.f32.mxu0 0.0
    %3190 = vmatmul.mubr.f32.gmra.mrb[0].mxu0 %v3074
    %v3191 = vpop.f32.mrb[0].mxu0
    %v3192 = vadd.f32 %v3048, %v3191
    %v3193 = vpop.f32.mrb[0].mxu0
    %3194 = vmatprep.mubr.f32.mxu0 0.0
    %3195 = vmatmul.mubr.f32.gmra.mrb[0].mxu0 %v3077
    %v3196 = vpop.f32.mrb[0].mxu0
    %v3197 = vadd.f32 %v3048, %v3196
    %v3198 = vpop.f32.mrb[0].mxu0
    %3199 = vmatprep.mubr.f32.mxu0 0.0
    %3200 = vmatmul.mubr.f32.gmra.mrb[0].mxu0 %v3080
    %v3201 = vpop.f32.mrb[0].mxu0
    %v3202 = vadd.f32 %v3048, %v3201
    %v3203 = vpop.f32.mrb[0].mxu0
    %3204 = vmatprep.mubr.f32.mxu0 0.0
    %3205 = vmatmul.mubr.f32.gmra.mrb[0].mxu0 %v3083
    %v3206 = vpop.f32.mrb[0].mxu0
    %v3207 = vadd.f32 %v3048, %v3206
    %v3208 = vpop.f32.mrb[0].mxu0
    %3209 = vdwg.mxu0
    %s3210 = scalar_lea.vmem [#allocation2], 256
    %v3211 = vld [vmem:[%s3210] sm:$0xff]
    %v3212 = vld [vmem:[%s3210 + $0x8] sm:$0xff]
    %v3213 = vld [vmem:[%s3210 + $0x10] sm:$0xff]
    %v3214 = vld [vmem:[%s3210 + $0x18] sm:$0xff]
    %v3215 = vld [vmem:[%s5 + $0xe] sm:$0x1]
    %v3216 = vlaneseq
    %v3217 = vshrl.u32 %v3216, 7
    %v3218 = vsub.s32 0, %v3217
    %v3219 = vrot.slane %v3215, %v3218
    %3220 = vmatprep.subr.mxu0 0.0
    %3221 = vmatpush1.msra.mxu0 %v3211
    %3222 = vmatprep.subr.mxu0 0.0
    %3223 = vmatpush1.msra.mxu0 %v3212
    %3224 = vmatprep.subr.mxu0 0.0
    %3225 = vmatpush1.msra.mxu0 %v3213
    %3226 = vmatprep.subr.mxu0 0.0
    %3227 = vmatpush1.msra.mxu0 %v3214
    %3228 = vmatprep.subr.mxu0 0.0
    %3229 = vmatpush1.msra.mxu0 0.0
    %3230 = vmatprep.subr.mxu0 0.0
    %3231 = vmatpush1.msra.mxu0 0.0
    %3232 = vmatprep.subr.mxu0 0.0
    %3233 = vmatpush1.msra.mxu0 0.0
    %3234 = vmatprep.subr.mxu0 0.0
    %3235 = vmatpush1.msra.mxu0 0.0
    %3236 = vmatprep.subr.mxu0 0.0
    %3237 = vmatpush1.msra.mxu0 0.0
    %3238 = vmatprep.subr.mxu0 0.0
    %3239 = vmatpush1.msra.mxu0 0.0
    %3240 = vmatprep.subr.mxu0 0.0
    %3241 = vmatpush1.msra.mxu0 0.0
    %3242 = vmatprep.subr.mxu0 0.0
    %3243 = vmatpush1.msra.mxu0 0.0
    %3244 = vmatprep.subr.mxu0 0.0
    %3245 = vmatpush1.msra.mxu0 0.0
    %3246 = vmatprep.subr.mxu0 0.0
    %3247 = vmatpush1.msra.mxu0 0.0
    %3248 = vmatprep.subr.mxu0 0.0
    %3249 = vmatpush1.msra.mxu0 0.0
    %3250 = vmatprep.subr.mxu0 0.0
    %3251 = vmatpush1.msra.mxu0 0.0
    %3252 = vmatprep.subr.mxu0 0.0
    %3253 = vmatpush1.msra.mxu0 0.0
    %3254 = vmatprep.subr.mxu0 0.0
    %3255 = vmatpush1.msra.mxu0 0.0
    %3256 = vmatprep.subr.mxu0 0.0
    %3257 = vmatpush1.msra.mxu0 0.0
    %3258 = vmatprep.subr.mxu0 0.0
    %3259 = vmatpush1.msra.mxu0 0.0
    %3260 = vmatprep.subr.mxu0 0.0
    %3261 = vmatpush1.msra.mxu0 0.0
    %3262 = vmatprep.subr.mxu0 0.0
    %3263 = vmatpush1.msra.mxu0 0.0
    %3264 = vmatprep.subr.mxu0 0.0
    %3265 = vmatpush1.msra.mxu0 0.0
    %3266 = vmatprep.subr.mxu0 0.0
    %3267 = vmatpush1.msra.mxu0 0.0
    %3268 = vmatprep.subr.mxu0 0.0
    %3269 = vmatpush1.msra.mxu0 0.0
    %3270 = vmatprep.subr.mxu0 0.0
    %3271 = vmatpush1.msra.mxu0 0.0
    %3272 = vmatprep.subr.mxu0 0.0
    %3273 = vmatpush1.msra.mxu0 0.0
    %3274 = vmatprep.subr.mxu0 0.0
    %3275 = vmatpush1.msra.mxu0 0.0
    %3276 = vmatprep.subr.mxu0 0.0
    %3277 = vmatpush1.msra.mxu0 0.0
    %3278 = vmatprep.subr.mxu0 0.0
    %3279 = vmatpush1.msra.mxu0 0.0
    %3280 = vmatprep.subr.mxu0 0.0
    %3281 = vmatpush1.msra.mxu0 0.0
    %3282 = vmatprep.subr.mxu0 0.0
    %3283 = vmatpush1.msra.mxu0 0.0
    %3284 = vmatprep.mubr.f32.mxu0 0.0
    %3285 = vmatmul.mubr.f32.gmra.mrb[0].mxu0 %v3050
    %v3286 = vpop.f32.mrb[0].mxu0
    %v3287 = vadd.f32 %v3219, %v3286
    %v3288 = vpop.f32.mrb[0].mxu0
    %3289 = vmatprep.mubr.f32.mxu0 0.0
    %3290 = vmatmul.mubr.f32.gmra.mrb[0].mxu0 %v3053
    %v3291 = vpop.f32.mrb[0].mxu0
    %v3292 = vadd.f32 %v3219, %v3291
    %v3293 = vpop.f32.mrb[0].mxu0
    %3294 = vmatprep.mubr.f32.mxu0 0.0
    %3295 = vmatmul.mubr.f32.gmra.mrb[0].mxu0 %v3056
    %v3296 = vpop.f32.mrb[0].mxu0
    %v3297 = vadd.f32 %v3219, %v3296
    %v3298 = vpop.f32.mrb[0].mxu0
    %3299 = vmatprep.mubr.f32.mxu0 0.0
    %3300 = vmatmul.mubr.f32.gmra.mrb[0].mxu0 %v3059
    %v3301 = vpop.f32.mrb[0].mxu0
    %v3302 = vadd.f32 %v3219, %v3301
    %v3303 = vpop.f32.mrb[0].mxu0
    %3304 = vmatprep.mubr.f32.mxu0 0.0
    %3305 = vmatmul.mubr.f32.gmra.mrb[0].mxu0 %v3062
    %v3306 = vpop.f32.mrb[0].mxu0
    %v3307 = vadd.f32 %v3219, %v3306
    %v3308 = vpop.f32.mrb[0].mxu0
    %3309 = vmatprep.mubr.f32.mxu0 0.0
    %3310 = vmatmul.mubr.f32.gmra.mrb[0].mxu0 %v3065
    %v3311 = vpop.f32.mrb[0].mxu0
    %v3312 = vadd.f32 %v3219, %v3311
    %v3313 = vpop.f32.mrb[0].mxu0
    %3314 = vmatprep.mubr.f32.mxu0 0.0
    %3315 = vmatmul.mubr.f32.gmra.mrb[0].mxu0 %v3068
    %v3316 = vpop.f32.mrb[0].mxu0
    %v3317 = vadd.f32 %v3219, %v3316
    %v3318 = vpop.f32.mrb[0].mxu0
    %3319 = vmatprep.mubr.f32.mxu0 0.0
    %3320 = vmatmul.mubr.f32.gmra.mrb[0].mxu0 %v3071
    %v3321 = vpop.f32.mrb[0].mxu0
    %v3322 = vadd.f32 %v3219, %v3321
    %v3323 = vpop.f32.mrb[0].mxu0
    %3324 = vmatprep.mubr.f32.mxu0 0.0
    %3325 = vmatmul.mubr.f32.gmra.mrb[0].mxu0 %v3074
    %v3326 = vpop.f32.mrb[0].mxu0
    %v3327 = vadd.f32 %v3219, %v3326
    %v3328 = vpop.f32.mrb[0].mxu0
    %3329 = vmatprep.mubr.f32.mxu0 0.0
    %3330 = vmatmul.mubr.f32.gmra.mrb[0].mxu0 %v3077
    %v3331 = vpop.f32.mrb[0].mxu0
    %v3332 = vadd.f32 %v3219, %v3331
    %v3333 = vpop.f32.mrb[0].mxu0
    %3334 = vmatprep.mubr.f32.mxu0 0.0
    %3335 = vmatmul.mubr.f32.gmra.mrb[0].mxu0 %v3080
    %v3336 = vpop.f32.mrb[0].mxu0
    %v3337 = vadd.f32 %v3219, %v3336
    %v3338 = vpop.f32.mrb[0].mxu0
    %3339 = vmatprep.mubr.f32.mxu0 0.0
    %3340 = vmatmul.mubr.f32.gmra.mrb[0].mxu0 %v3083
    %v3341 = vpop.f32.mrb[0].mxu0
    %v3342 = vadd.f32 %v3219, %v3341
    %v3343 = vpop.f32.mrb[0].mxu0
    %3344 = vdwg.mxu0
    %v3345 = vmul.f32 %v2981, %v212
    %v3346 = vmul.f32 %v2986, %v212
    %v3347 = vmul.f32 %v2991, %v212
    %v3348 = vmul.f32 %v2996, %v212
    %v3349 = vmul.f32 %v3001, %v212
    %v3350 = vmul.f32 %v3006, %v212
    %v3351 = vmul.f32 %v3011, %v212
    %v3352 = vmul.f32 %v3016, %v212
    %v3353 = vmul.f32 %v3021, %v212
    %v3354 = vmul.f32 %v3026, %v212
    %v3355 = vmul.f32 %v3031, %v212
    %v3356 = vmul.f32 %v3036, %v212
    %v3358 = vsel %vm220, %v3345, 0
    %v3361 = vsel %vm220, %v3346, 0
    %v3364 = vsel %vm220, %v3347, 0
    %v3367 = vsel %vm220, %v3348, 0
    %v3370 = vsel %vm220, %v3349, 0
    %v3373 = vsel %vm220, %v3350, 0
    %v3376 = vsel %vm220, %v3351, 0
    %v3379 = vsel %vm220, %v3352, 0
    %v3382 = vsel %vm220, %v3353, 0
    %v3385 = vsel %vm220, %v3354, 0
    %v3388 = vsel %vm220, %v3355, 0
    %v3391 = vsel %vm220, %v3356, 0
    %v3394 = vsel %vm220, %v3152, 0
    %v3397 = vsel %vm220, %v3157, 0
    %v3400 = vsel %vm220, %v3162, 0
    %v3403 = vsel %vm220, %v3167, 0
    %v3406 = vsel %vm220, %v3172, 0
    %v3409 = vsel %vm220, %v3177, 0
    %v3412 = vsel %vm220, %v3182, 0
    %v3415 = vsel %vm220, %v3187, 0
    %v3418 = vsel %vm220, %v3192, 0
    %v3421 = vsel %vm220, %v3197, 0
    %v3424 = vsel %vm220, %v3202, 0
    %v3427 = vsel %vm220, %v3207, 0
    %3429 = vmatprep.subr.mxu0 0.0
    %3430 = vmatpush1.xpose.msra.mxu0 %v3394
    %3431 = vmatprep.subr.mxu0 0.0
    %3432 = vmatpush1.xpose.msra.mxu0 %v3397
    %3433 = vmatprep.subr.mxu0 0.0
    %3434 = vmatpush1.xpose.msra.mxu0 %v3400
    %3435 = vmatprep.subr.mxu0 0.0
    %3436 = vmatpush1.xpose.msra.mxu0 %v3403
    %3437 = vmatprep.subr.mxu0 0.0
    %3438 = vmatpush1.xpose.msra.mxu0 %v3406
    %3439 = vmatprep.subr.mxu0 0.0
    %3440 = vmatpush1.xpose.msra.mxu0 %v3409
    %3441 = vmatprep.subr.mxu0 0.0
    %3442 = vmatpush1.xpose.msra.mxu0 %v3412
    %3443 = vmatprep.subr.mxu0 0.0
    %3444 = vmatpush1.xpose.msra.mxu0 %v3415
    %3445 = vmatprep.subr.mxu0 0.0
    %3446 = vmatpush1.xpose.msra.mxu0 %v3418
    %3447 = vmatprep.subr.mxu0 0.0
    %3448 = vmatpush1.xpose.msra.mxu0 %v3421
    %3449 = vmatprep.subr.mxu0 0.0
    %3450 = vmatpush1.xpose.msra.mxu0 %v3424
    %3451 = vmatprep.subr.mxu0 0.0
    %3452 = vmatpush1.xpose.msra.mxu0 %v3427
    %3453 = vmatprep.subr.mxu0 0.0
    %3454 = vmatpush1.xpose.msra.mxu0 0.0
    %3455 = vmatprep.subr.mxu0 0.0
    %3456 = vmatpush1.xpose.msra.mxu0 0.0
    %3457 = vmatprep.subr.mxu0 0.0
    %3458 = vmatpush1.xpose.msra.mxu0 0.0
    %3459 = vmatprep.subr.mxu0 0.0
    %3460 = vmatpush1.xpose.msra.mxu0 0.0
    %3461 = vmatprep.subr.mxu0 0.0
    %3462 = vmatpush1.xpose.msra.mxu0 0.0
    %3463 = vmatprep.subr.mxu0 0.0
    %3464 = vmatpush1.xpose.msra.mxu0 0.0
    %3465 = vmatprep.subr.mxu0 0.0
    %3466 = vmatpush1.xpose.msra.mxu0 0.0
    %3467 = vmatprep.subr.mxu0 0.0
    %3468 = vmatpush1.xpose.msra.mxu0 0.0
    %3469 = vmatprep.subr.mxu0 0.0
    %3470 = vmatpush1.xpose.msra.mxu0 0.0
    %3471 = vmatprep.subr.mxu0 0.0
    %3472 = vmatpush1.xpose.msra.mxu0 0.0
    %3473 = vmatprep.subr.mxu0 0.0
    %3474 = vmatpush1.xpose.msra.mxu0 0.0
    %3475 = vmatprep.subr.mxu0 0.0
    %3476 = vmatpush1.xpose.msra.mxu0 0.0
    %3477 = vmatprep.subr.mxu0 0.0
    %3478 = vmatpush1.xpose.msra.mxu0 0.0
    %3479 = vmatprep.subr.mxu0 0.0
    %3480 = vmatpush1.xpose.msra.mxu0 0.0
    %3481 = vmatprep.subr.mxu0 0.0
    %3482 = vmatpush1.xpose.msra.mxu0 0.0
    %3483 = vmatprep.subr.mxu0 0.0
    %3484 = vmatpush1.xpose.msra.mxu0 0.0
    %3485 = vmatprep.subr.mxu0 0.0
    %3486 = vmatpush1.xpose.msra.mxu0 0.0
    %3487 = vmatprep.subr.mxu0 0.0
    %3488 = vmatpush1.xpose.msra.mxu0 0.0
    %3489 = vmatprep.subr.mxu0 0.0
    %3490 = vmatpush1.xpose.msra.mxu0 0.0
    %3491 = vmatprep.subr.mxu0 0.0
    %3492 = vmatpush1.xpose.msra.mxu0 0.0
    %3493 = vmatprep.mubr.f32.mxu0 0.0
    %3494 = vmatmul.mubr.f32.gmra.mrb[0].mxu0 %v3358
    %v3495 = vpop.f32.mrb[0].mxu0
    %v3496 = vadd.f32 0.0, %v3495
    %v3497 = vpop.f32.mrb[0].mxu0
    %3498 = vmatprep.mubr.f32.mxu0 0.0
    %3499 = vmatmul.mubr.f32.gmra.mrb[0].mxu0 %v3361
    %v3500 = vpop.f32.mrb[0].mxu0
    %v3501 = vadd.f32 0.0, %v3500
    %v3502 = vpop.f32.mrb[0].mxu0
    %3503 = vmatprep.mubr.f32.mxu0 0.0
    %3504 = vmatmul.mubr.f32.gmra.mrb[0].mxu0 %v3364
    %v3505 = vpop.f32.mrb[0].mxu0
    %v3506 = vadd.f32 0.0, %v3505
    %v3507 = vpop.f32.mrb[0].mxu0
    %3508 = vmatprep.mubr.f32.mxu0 0.0
    %3509 = vmatmul.mubr.f32.gmra.mrb[0].mxu0 %v3367
    %v3510 = vpop.f32.mrb[0].mxu0
    %v3511 = vadd.f32 0.0, %v3510
    %v3512 = vpop.f32.mrb[0].mxu0
    %3513 = vmatprep.mubr.f32.mxu0 0.0
    %3514 = vmatmul.mubr.f32.gmra.mrb[0].mxu0 %v3370
    %v3515 = vpop.f32.mrb[0].mxu0
    %v3516 = vadd.f32 0.0, %v3515
    %v3517 = vpop.f32.mrb[0].mxu0
    %3518 = vmatprep.mubr.f32.mxu0 0.0
    %3519 = vmatmul.mubr.f32.gmra.mrb[0].mxu0 %v3373
    %v3520 = vpop.f32.mrb[0].mxu0
    %v3521 = vadd.f32 0.0, %v3520
    %v3522 = vpop.f32.mrb[0].mxu0
    %3523 = vmatprep.mubr.f32.mxu0 0.0
    %3524 = vmatmul.mubr.f32.gmra.mrb[0].mxu0 %v3376
    %v3525 = vpop.f32.mrb[0].mxu0
    %v3526 = vadd.f32 0.0, %v3525
    %v3527 = vpop.f32.mrb[0].mxu0
    %3528 = vmatprep.mubr.f32.mxu0 0.0
    %3529 = vmatmul.mubr.f32.gmra.mrb[0].mxu0 %v3379
    %v3530 = vpop.f32.mrb[0].mxu0
    %v3531 = vadd.f32 0.0, %v3530
    %v3532 = vpop.f32.mrb[0].mxu0
    %3533 = vmatprep.mubr.f32.mxu0 0.0
    %3534 = vmatmul.mubr.f32.gmra.mrb[0].mxu0 %v3382
    %v3535 = vpop.f32.mrb[0].mxu0
    %v3536 = vadd.f32 0.0, %v3535
    %v3537 = vpop.f32.mrb[0].mxu0
    %3538 = vmatprep.mubr.f32.mxu0 0.0
    %3539 = vmatmul.mubr.f32.gmra.mrb[0].mxu0 %v3385
    %v3540 = vpop.f32.mrb[0].mxu0
    %v3541 = vadd.f32 0.0, %v3540
    %v3542 = vpop.f32.mrb[0].mxu0
    %3543 = vmatprep.mubr.f32.mxu0 0.0
    %3544 = vmatmul.mubr.f32.gmra.mrb[0].mxu0 %v3388
    %v3545 = vpop.f32.mrb[0].mxu0
    %v3546 = vadd.f32 0.0, %v3545
    %v3547 = vpop.f32.mrb[0].mxu0
    %3548 = vmatprep.mubr.f32.mxu0 0.0
    %3549 = vmatmul.mubr.f32.gmra.mrb[0].mxu0 %v3391
    %v3550 = vpop.f32.mrb[0].mxu0
    %v3551 = vadd.f32 0.0, %v3550
    %v3552 = vpop.f32.mrb[0].mxu0
    %3553 = vdwg.mxu0
    %v3554 = vmul.f32 %v3496, 0.25
    %v3555 = vmul.f32 %v3501, 0.25
    %v3556 = vmul.f32 %v3506, 0.25
    %v3557 = vmul.f32 %v3511, 0.25
    %v3558 = vmul.f32 %v3516, 0.25
    %v3559 = vmul.f32 %v3521, 0.25
    %v3560 = vmul.f32 %v3526, 0.25
    %v3561 = vmul.f32 %v3531, 0.25
    %v3562 = vmul.f32 %v3536, 0.25
    %v3563 = vmul.f32 %v3541, 0.25
    %v3564 = vmul.f32 %v3546, 0.25
    %v3565 = vmul.f32 %v3551, 0.25
    %v3566 = vsel %vm194, %v3554, -1e+09
    %v3567 = vsel %vm195, %v3555, -1e+09
    %v3568 = vsel %vm196, %v3556, -1e+09
    %v3569 = vsel %vm197, %v3557, -1e+09
    %v3570 = vsel %vm198, %v3558, -1e+09
    %v3571 = vsel %vm199, %v3559, -1e+09
    %v3572 = vsel %vm200, %v3560, -1e+09
    %v3573 = vsel %vm201, %v3561, -1e+09
    %v3574 = vsel %vm202, %v3562, -1e+09
    %v3575 = vsel %vm203, %v3563, -1e+09
    %v3576 = vsel %vm204, %v3564, -1e+09
    %v3577 = vsel %vm205, %v3565, -1e+09
    %v3578 = vsel %vm1119, %v3566, -inf
    %3579 = vmax.xlane.f32.xlu0 %v3578
    %v3580 = vpop.xlane.xlu0 %3579
    %v3581 = vsel %vm1119, %v3567, -inf
    %3582 = vmax.xlane.f32.xlu0 %v3581
    %v3583 = vpop.xlane.xlu0 %3582
    %v3584 = vsel %vm1119, %v3568, -inf
    %3585 = vmax.xlane.f32.xlu0 %v3584
    %v3586 = vpop.xlane.xlu0 %3585
    %v3587 = vsel %vm1119, %v3569, -inf
    %3588 = vmax.xlane.f32.xlu0 %v3587
    %v3589 = vpop.xlane.xlu0 %3588
    %v3590 = vsel %vm1119, %v3570, -inf
    %3591 = vmax.xlane.f32.xlu0 %v3590
    %v3592 = vpop.xlane.xlu0 %3591
    %v3593 = vsel %vm1119, %v3571, -inf
    %3594 = vmax.xlane.f32.xlu0 %v3593
    %v3595 = vpop.xlane.xlu0 %3594
    %v3596 = vsel %vm1119, %v3572, -inf
    %3597 = vmax.xlane.f32.xlu0 %v3596
    %v3598 = vpop.xlane.xlu0 %3597
    %v3599 = vsel %vm1119, %v3573, -inf
    %3600 = vmax.xlane.f32.xlu0 %v3599
    %v3601 = vpop.xlane.xlu0 %3600
    %v3602 = vsel %vm1119, %v3574, -inf
    %3603 = vmax.xlane.f32.xlu0 %v3602
    %v3604 = vpop.xlane.xlu0 %3603
    %v3605 = vsel %vm1119, %v3575, -inf
    %3606 = vmax.xlane.f32.xlu0 %v3605
    %v3607 = vpop.xlane.xlu0 %3606
    %v3608 = vsel %vm1119, %v3576, -inf
    %3609 = vmax.xlane.f32.xlu0 %v3608
    %v3610 = vpop.xlane.xlu0 %3609
    %v3611 = vsel %vm1119, %v3577, -inf
    %3612 = vmax.xlane.f32.xlu0 %v3611
    %v3613 = vpop.xlane.xlu0 %3612
    %v3614 = vsub.f32 %v3566, %v3580
    %v3615 = vsub.f32 %v3567, %v3583
    %v3616 = vsub.f32 %v3568, %v3586
    %v3617 = vsub.f32 %v3569, %v3589
    %v3618 = vsub.f32 %v3570, %v3592
    %v3619 = vsub.f32 %v3571, %v3595
    %v3620 = vsub.f32 %v3572, %v3598
    %v3621 = vsub.f32 %v3573, %v3601
    %v3622 = vsub.f32 %v3574, %v3604
    %v3623 = vsub.f32 %v3575, %v3607
    %v3624 = vsub.f32 %v3576, %v3610
    %v3625 = vsub.f32 %v3577, %v3613
    %v3626 = vmul.f32 %v3614, 1.442695
    %v3627 = vpow.pop %v3626
    %v3628 = vmul.f32 %v3615, 1.442695
    %v3629 = vpow.pop %v3628
    %v3630 = vmul.f32 %v3616, 1.442695
    %v3631 = vpow.pop %v3630
    %v3632 = vmul.f32 %v3617, 1.442695
    %v3633 = vpow.pop %v3632
    %v3634 = vmul.f32 %v3618, 1.442695
    %v3635 = vpow.pop %v3634
    %v3636 = vmul.f32 %v3619, 1.442695
    %v3637 = vpow.pop %v3636
    %v3638 = vmul.f32 %v3620, 1.442695
    %v3639 = vpow.pop %v3638
    %v3640 = vmul.f32 %v3621, 1.442695
    %v3641 = vpow.pop %v3640
    %v3642 = vmul.f32 %v3622, 1.442695
    %v3643 = vpow.pop %v3642
    %v3644 = vmul.f32 %v3623, 1.442695
    %v3645 = vpow.pop %v3644
    %v3646 = vmul.f32 %v3624, 1.442695
    %v3647 = vpow.pop %v3646
    %v3648 = vmul.f32 %v3625, 1.442695
    %v3649 = vpow.pop %v3648
    %v3650 = vsel %vm1119, %v3627, 0.0
    %3651 = vadd.xlane.f32.xlu0 %v3650
    %v3652 = vpop.xlane.xlu0 %3651
    %v3653 = vsel %vm1119, %v3629, 0.0
    %3654 = vadd.xlane.f32.xlu0 %v3653
    %v3655 = vpop.xlane.xlu0 %3654
    %v3656 = vsel %vm1119, %v3631, 0.0
    %3657 = vadd.xlane.f32.xlu0 %v3656
    %v3658 = vpop.xlane.xlu0 %3657
    %v3659 = vsel %vm1119, %v3633, 0.0
    %3660 = vadd.xlane.f32.xlu0 %v3659
    %v3661 = vpop.xlane.xlu0 %3660
    %v3662 = vsel %vm1119, %v3635, 0.0
    %3663 = vadd.xlane.f32.xlu0 %v3662
    %v3664 = vpop.xlane.xlu0 %3663
    %v3665 = vsel %vm1119, %v3637, 0.0
    %3666 = vadd.xlane.f32.xlu0 %v3665
    %v3667 = vpop.xlane.xlu0 %3666
    %v3668 = vsel %vm1119, %v3639, 0.0
    %3669 = vadd.xlane.f32.xlu0 %v3668
    %v3670 = vpop.xlane.xlu0 %3669
    %v3671 = vsel %vm1119, %v3641, 0.0
    %3672 = vadd.xlane.f32.xlu0 %v3671
    %v3673 = vpop.xlane.xlu0 %3672
    %v3674 = vsel %vm1119, %v3643, 0.0
    %3675 = vadd.xlane.f32.xlu0 %v3674
    %v3676 = vpop.xlane.xlu0 %3675
    %v3677 = vsel %vm1119, %v3645, 0.0
    %3678 = vadd.xlane.f32.xlu0 %v3677
    %v3679 = vpop.xlane.xlu0 %3678
    %v3680 = vsel %vm1119, %v3647, 0.0
    %3681 = vadd.xlane.f32.xlu0 %v3680
    %v3682 = vpop.xlane.xlu0 %3681
    %v3683 = vsel %vm1119, %v3649, 0.0
    %3684 = vadd.xlane.f32.xlu0 %v3683
    %v3685 = vpop.xlane.xlu0 %3684
    %v3686 = vrcp.pop %v3652
    %v3687 = vrcp.pop %v3655
    %v3688 = vrcp.pop %v3658
    %v3689 = vrcp.pop %v3661
    %v3690 = vrcp.pop %v3664
    %v3691 = vrcp.pop %v3667
    %v3692 = vrcp.pop %v3670
    %v3693 = vrcp.pop %v3673
    %v3694 = vrcp.pop %v3676
    %v3695 = vrcp.pop %v3679
    %v3696 = vrcp.pop %v3682
    %v3697 = vrcp.pop %v3685
    %v3698 = vmul.f32 %v3627, %v3686
    %v3699 = vmul.f32 %v3629, %v3687
    %v3700 = vmul.f32 %v3631, %v3688
    %v3701 = vmul.f32 %v3633, %v3689
    %v3702 = vmul.f32 %v3635, %v3690
    %v3703 = vmul.f32 %v3637, %v3691
    %v3704 = vmul.f32 %v3639, %v3692
    %v3705 = vmul.f32 %v3641, %v3693
    %v3706 = vmul.f32 %v3643, %v3694
    %v3707 = vmul.f32 %v3645, %v3695
    %v3708 = vmul.f32 %v3647, %v3696
    %v3709 = vmul.f32 %v3649, %v3697
    %v3710 = vmul.f32 %v3287, %v212
    %v3711 = vmul.f32 %v3292, %v212
    %v3712 = vmul.f32 %v3297, %v212
    %v3713 = vmul.f32 %v3302, %v212
    %v3714 = vmul.f32 %v3307, %v212
    %v3715 = vmul.f32 %v3312, %v212
    %v3716 = vmul.f32 %v3317, %v212
    %v3717 = vmul.f32 %v3322, %v212
    %v3718 = vmul.f32 %v3327, %v212
    %v3719 = vmul.f32 %v3332, %v212
    %v3720 = vmul.f32 %v3337, %v212
    %v3721 = vmul.f32 %v3342, %v212
    %v3722 = vmul.f32 %v2981, %v217
    %v3723 = vmul.f32 %v2986, %v217
    %v3724 = vmul.f32 %v2991, %v217
    %v3725 = vmul.f32 %v2996, %v217
    %v3726 = vmul.f32 %v3001, %v217
    %v3727 = vmul.f32 %v3006, %v217
    %v3728 = vmul.f32 %v3011, %v217
    %v3729 = vmul.f32 %v3016, %v217
    %v3730 = vmul.f32 %v3021, %v217
    %v3731 = vmul.f32 %v3026, %v217
    %v3732 = vmul.f32 %v3031, %v217
    %v3733 = vmul.f32 %v3036, %v217
    %v3735 = vsel %vm220, %v3722, 0
    %v3738 = vsel %vm220, %v3723, 0
    %v3741 = vsel %vm220, %v3724, 0
    %v3744 = vsel %vm220, %v3725, 0
    %v3747 = vsel %vm220, %v3726, 0
    %v3750 = vsel %vm220, %v3727, 0
    %v3753 = vsel %vm220, %v3728, 0
    %v3756 = vsel %vm220, %v3729, 0
    %v3759 = vsel %vm220, %v3730, 0
    %v3762 = vsel %vm220, %v3731, 0
    %v3765 = vsel %vm220, %v3732, 0
    %v3768 = vsel %vm220, %v3733, 0
    %3770 = vmatprep.subr.mxu0 0.0
    %3771 = vmatpush1.xpose.msra.mxu0 %v3394
    %3772 = vmatprep.subr.mxu0 0.0
    %3773 = vmatpush1.xpose.msra.mxu0 %v3397
    %3774 = vmatprep.subr.mxu0 0.0
    %3775 = vmatpush1.xpose.msra.mxu0 %v3400
    %3776 = vmatprep.subr.mxu0 0.0
    %3777 = vmatpush1.xpose.msra.mxu0 %v3403
    %3778 = vmatprep.subr.mxu0 0.0
    %3779 = vmatpush1.xpose.msra.mxu0 %v3406
    %3780 = vmatprep.subr.mxu0 0.0
    %3781 = vmatpush1.xpose.msra.mxu0 %v3409
    %3782 = vmatprep.subr.mxu0 0.0
    %3783 = vmatpush1.xpose.msra.mxu0 %v3412
    %3784 = vmatprep.subr.mxu0 0.0
    %3785 = vmatpush1.xpose.msra.mxu0 %v3415
    %3786 = vmatprep.subr.mxu0 0.0
    %3787 = vmatpush1.xpose.msra.mxu0 %v3418
    %3788 = vmatprep.subr.mxu0 0.0
    %3789 = vmatpush1.xpose.msra.mxu0 %v3421
    %3790 = vmatprep.subr.mxu0 0.0
    %3791 = vmatpush1.xpose.msra.mxu0 %v3424
    %3792 = vmatprep.subr.mxu0 0.0
    %3793 = vmatpush1.xpose.msra.mxu0 %v3427
    %3794 = vmatprep.subr.mxu0 0.0
    %3795 = vmatpush1.xpose.msra.mxu0 0.0
    %3796 = vmatprep.subr.mxu0 0.0
    %3797 = vmatpush1.xpose.msra.mxu0 0.0
    %3798 = vmatprep.subr.mxu0 0.0
    %3799 = vmatpush1.xpose.msra.mxu0 0.0
    %3800 = vmatprep.subr.mxu0 0.0
    %3801 = vmatpush1.xpose.msra.mxu0 0.0
    %3802 = vmatprep.subr.mxu0 0.0
    %3803 = vmatpush1.xpose.msra.mxu0 0.0
    %3804 = vmatprep.subr.mxu0 0.0
    %3805 = vmatpush1.xpose.msra.mxu0 0.0
    %3806 = vmatprep.subr.mxu0 0.0
    %3807 = vmatpush1.xpose.msra.mxu0 0.0
    %3808 = vmatprep.subr.mxu0 0.0
    %3809 = vmatpush1.xpose.msra.mxu0 0.0
    %3810 = vmatprep.subr.mxu0 0.0
    %3811 = vmatpush1.xpose.msra.mxu0 0.0
    %3812 = vmatprep.subr.mxu0 0.0
    %3813 = vmatpush1.xpose.msra.mxu0 0.0
    %3814 = vmatprep.subr.mxu0 0.0
    %3815 = vmatpush1.xpose.msra.mxu0 0.0
    %3816 = vmatprep.subr.mxu0 0.0
    %3817 = vmatpush1.xpose.msra.mxu0 0.0
    %3818 = vmatprep.subr.mxu0 0.0
    %3819 = vmatpush1.xpose.msra.mxu0 0.0
    %3820 = vmatprep.subr.mxu0 0.0
    %3821 = vmatpush1.xpose.msra.mxu0 0.0
    %3822 = vmatprep.subr.mxu0 0.0
    %3823 = vmatpush1.xpose.msra.mxu0 0.0
    %3824 = vmatprep.subr.mxu0 0.0
    %3825 = vmatpush1.xpose.msra.mxu0 0.0
    %3826 = vmatprep.subr.mxu0 0.0
    %3827 = vmatpush1.xpose.msra.mxu0 0.0
    %3828 = vmatprep.subr.mxu0 0.0
    %3829 = vmatpush1.xpose.msra.mxu0 0.0
    %3830 = vmatprep.subr.mxu0 0.0
    %3831 = vmatpush1.xpose.msra.mxu0 0.0
    %3832 = vmatprep.subr.mxu0 0.0
    %3833 = vmatpush1.xpose.msra.mxu0 0.0
    %3834 = vmatprep.mubr.f32.mxu0 0.0
    %3835 = vmatmul.mubr.f32.gmra.mrb[0].mxu0 %v3735
    %v3836 = vpop.f32.mrb[0].mxu0
    %v3837 = vadd.f32 0.0, %v3836
    %v3838 = vpop.f32.mrb[0].mxu0
    %3839 = vmatprep.mubr.f32.mxu0 0.0
    %3840 = vmatmul.mubr.f32.gmra.mrb[0].mxu0 %v3738
    %v3841 = vpop.f32.mrb[0].mxu0
    %v3842 = vadd.f32 0.0, %v3841
    %v3843 = vpop.f32.mrb[0].mxu0
    %3844 = vmatprep.mubr.f32.mxu0 0.0
    %3845 = vmatmul.mubr.f32.gmra.mrb[0].mxu0 %v3741
    %v3846 = vpop.f32.mrb[0].mxu0
    %v3847 = vadd.f32 0.0, %v3846
    %v3848 = vpop.f32.mrb[0].mxu0
    %3849 = vmatprep.mubr.f32.mxu0 0.0
    %3850 = vmatmul.mubr.f32.gmra.mrb[0].mxu0 %v3744
    %v3851 = vpop.f32.mrb[0].mxu0
    %v3852 = vadd.f32 0.0, %v3851
    %v3853 = vpop.f32.mrb[0].mxu0
    %3854 = vmatprep.mubr.f32.mxu0 0.0
    %3855 = vmatmul.mubr.f32.gmra.mrb[0].mxu0 %v3747
    %v3856 = vpop.f32.mrb[0].mxu0
    %v3857 = vadd.f32 0.0, %v3856
    %v3858 = vpop.f32.mrb[0].mxu0
    %3859 = vmatprep.mubr.f32.mxu0 0.0
    %3860 = vmatmul.mubr.f32.gmra.mrb[0].mxu0 %v3750
    %v3861 = vpop.f32.mrb[0].mxu0
    %v3862 = vadd.f32 0.0, %v3861
    %v3863 = vpop.f32.mrb[0].mxu0
    %3864 = vmatprep.mubr.f32.mxu0 0.0
    %3865 = vmatmul.mubr.f32.gmra.mrb[0].mxu0 %v3753
    %v3866 = vpop.f32.mrb[0].mxu0
    %v3867 = vadd.f32 0.0, %v3866
    %v3868 = vpop.f32.mrb[0].mxu0
    %3869 = vmatprep.mubr.f32.mxu0 0.0
    %3870 = vmatmul.mubr.f32.gmra.mrb[0].mxu0 %v3756
    %v3871 = vpop.f32.mrb[0].mxu0
    %v3872 = vadd.f32 0.0, %v3871
    %v3873 = vpop.f32.mrb[0].mxu0
    %3874 = vmatprep.mubr.f32.mxu0 0.0
    %3875 = vmatmul.mubr.f32.gmra.mrb[0].mxu0 %v3759
    %v3876 = vpop.f32.mrb[0].mxu0
    %v3877 = vadd.f32 0.0, %v3876
    %v3878 = vpop.f32.mrb[0].mxu0
    %3879 = vmatprep.mubr.f32.mxu0 0.0
    %3880 = vmatmul.mubr.f32.gmra.mrb[0].mxu0 %v3762
    %v3881 = vpop.f32.mrb[0].mxu0
    %v3882 = vadd.f32 0.0, %v3881
    %v3883 = vpop.f32.mrb[0].mxu0
    %3884 = vmatprep.mubr.f32.mxu0 0.0
    %3885 = vmatmul.mubr.f32.gmra.mrb[0].mxu0 %v3765
    %v3886 = vpop.f32.mrb[0].mxu0
    %v3887 = vadd.f32 0.0, %v3886
    %v3888 = vpop.f32.mrb[0].mxu0
    %3889 = vmatprep.mubr.f32.mxu0 0.0
    %3890 = vmatmul.mubr.f32.gmra.mrb[0].mxu0 %v3768
    %v3891 = vpop.f32.mrb[0].mxu0
    %v3892 = vadd.f32 0.0, %v3891
    %v3893 = vpop.f32.mrb[0].mxu0
    %3894 = vdwg.mxu0
    %v3895 = vmul.f32 %v3837, 0.25
    %v3896 = vmul.f32 %v3842, 0.25
    %v3897 = vmul.f32 %v3847, 0.25
    %v3898 = vmul.f32 %v3852, 0.25
    %v3899 = vmul.f32 %v3857, 0.25
    %v3900 = vmul.f32 %v3862, 0.25
    %v3901 = vmul.f32 %v3867, 0.25
    %v3902 = vmul.f32 %v3872, 0.25
    %v3903 = vmul.f32 %v3877, 0.25
    %v3904 = vmul.f32 %v3882, 0.25
    %v3905 = vmul.f32 %v3887, 0.25
    %v3906 = vmul.f32 %v3892, 0.25
    %v3907 = vsel %vm194, %v3895, -1e+09
    %v3908 = vsel %vm195, %v3896, -1e+09
    %v3909 = vsel %vm196, %v3897, -1e+09
    %v3910 = vsel %vm197, %v3898, -1e+09
    %v3911 = vsel %vm198, %v3899, -1e+09
    %v3912 = vsel %vm199, %v3900, -1e+09
    %v3913 = vsel %vm200, %v3901, -1e+09
    %v3914 = vsel %vm201, %v3902, -1e+09
    %v3915 = vsel %vm202, %v3903, -1e+09
    %v3916 = vsel %vm203, %v3904, -1e+09
    %v3917 = vsel %vm204, %v3905, -1e+09
    %v3918 = vsel %vm205, %v3906, -1e+09
    %v3919 = vsel %vm1119, %v3907, -inf
    %3920 = vmax.xlane.f32.xlu0 %v3919
    %v3921 = vpop.xlane.xlu0 %3920
    %v3922 = vsel %vm1119, %v3908, -inf
    %3923 = vmax.xlane.f32.xlu0 %v3922
    %v3924 = vpop.xlane.xlu0 %3923
    %v3925 = vsel %vm1119, %v3909, -inf
    %3926 = vmax.xlane.f32.xlu0 %v3925
    %v3927 = vpop.xlane.xlu0 %3926
    %v3928 = vsel %vm1119, %v3910, -inf
    %3929 = vmax.xlane.f32.xlu0 %v3928
    %v3930 = vpop.xlane.xlu0 %3929
    %v3931 = vsel %vm1119, %v3911, -inf
    %3932 = vmax.xlane.f32.xlu0 %v3931
    %v3933 = vpop.xlane.xlu0 %3932
    %v3934 = vsel %vm1119, %v3912, -inf
    %3935 = vmax.xlane.f32.xlu0 %v3934
    %v3936 = vpop.xlane.xlu0 %3935
    %v3937 = vsel %vm1119, %v3913, -inf
    %3938 = vmax.xlane.f32.xlu0 %v3937
    %v3939 = vpop.xlane.xlu0 %3938
    %v3940 = vsel %vm1119, %v3914, -inf
    %3941 = vmax.xlane.f32.xlu0 %v3940
    %v3942 = vpop.xlane.xlu0 %3941
    %v3943 = vsel %vm1119, %v3915, -inf
    %3944 = vmax.xlane.f32.xlu0 %v3943
    %v3945 = vpop.xlane.xlu0 %3944
    %v3946 = vsel %vm1119, %v3916, -inf
    %3947 = vmax.xlane.f32.xlu0 %v3946
    %v3948 = vpop.xlane.xlu0 %3947
    %v3949 = vsel %vm1119, %v3917, -inf
    %3950 = vmax.xlane.f32.xlu0 %v3949
    %v3951 = vpop.xlane.xlu0 %3950
    %v3952 = vsel %vm1119, %v3918, -inf
    %3953 = vmax.xlane.f32.xlu0 %v3952
    %v3954 = vpop.xlane.xlu0 %3953
    %v3955 = vsub.f32 %v3907, %v3921
    %v3956 = vsub.f32 %v3908, %v3924
    %v3957 = vsub.f32 %v3909, %v3927
    %v3958 = vsub.f32 %v3910, %v3930
    %v3959 = vsub.f32 %v3911, %v3933
    %v3960 = vsub.f32 %v3912, %v3936
    %v3961 = vsub.f32 %v3913, %v3939
    %v3962 = vsub.f32 %v3914, %v3942
    %v3963 = vsub.f32 %v3915, %v3945
    %v3964 = vsub.f32 %v3916, %v3948
    %v3965 = vsub.f32 %v3917, %v3951
    %v3966 = vsub.f32 %v3918, %v3954
    %v3967 = vmul.f32 %v3955, 1.442695
    %v3968 = vpow.pop %v3967
    %v3969 = vmul.f32 %v3956, 1.442695
    %v3970 = vpow.pop %v3969
    %v3971 = vmul.f32 %v3957, 1.442695
    %v3972 = vpow.pop %v3971
    %v3973 = vmul.f32 %v3958, 1.442695
    %v3974 = vpow.pop %v3973
    %v3975 = vmul.f32 %v3959, 1.442695
    %v3976 = vpow.pop %v3975
    %v3977 = vmul.f32 %v3960, 1.442695
    %v3978 = vpow.pop %v3977
    %v3979 = vmul.f32 %v3961, 1.442695
    %v3980 = vpow.pop %v3979
    %v3981 = vmul.f32 %v3962, 1.442695
    %v3982 = vpow.pop %v3981
    %v3983 = vmul.f32 %v3963, 1.442695
    %v3984 = vpow.pop %v3983
    %v3985 = vmul.f32 %v3964, 1.442695
    %v3986 = vpow.pop %v3985
    %v3987 = vmul.f32 %v3965, 1.442695
    %v3988 = vpow.pop %v3987
    %v3989 = vmul.f32 %v3966, 1.442695
    %v3990 = vpow.pop %v3989
    %v3991 = vsel %vm1119, %v3968, 0.0
    %3992 = vadd.xlane.f32.xlu0 %v3991
    %v3993 = vpop.xlane.xlu0 %3992
    %v3994 = vsel %vm1119, %v3970, 0.0
    %3995 = vadd.xlane.f32.xlu0 %v3994
    %v3996 = vpop.xlane.xlu0 %3995
    %v3997 = vsel %vm1119, %v3972, 0.0
    %3998 = vadd.xlane.f32.xlu0 %v3997
    %v3999 = vpop.xlane.xlu0 %3998
    %v4000 = vsel %vm1119, %v3974, 0.0
    %4001 = vadd.xlane.f32.xlu0 %v4000
    %v4002 = vpop.xlane.xlu0 %4001
    %v4003 = vsel %vm1119, %v3976, 0.0
    %4004 = vadd.xlane.f32.xlu0 %v4003
    %v4005 = vpop.xlane.xlu0 %4004
    %v4006 = vsel %vm1119, %v3978, 0.0
    %4007 = vadd.xlane.f32.xlu0 %v4006
    %v4008 = vpop.xlane.xlu0 %4007
    %v4009 = vsel %vm1119, %v3980, 0.0
    %4010 = vadd.xlane.f32.xlu0 %v4009
    %v4011 = vpop.xlane.xlu0 %4010
    %v4012 = vsel %vm1119, %v3982, 0.0
    %4013 = vadd.xlane.f32.xlu0 %v4012
    %v4014 = vpop.xlane.xlu0 %4013
    %v4015 = vsel %vm1119, %v3984, 0.0
    %4016 = vadd.xlane.f32.xlu0 %v4015
    %v4017 = vpop.xlane.xlu0 %4016
    %v4018 = vsel %vm1119, %v3986, 0.0
    %4019 = vadd.xlane.f32.xlu0 %v4018
    %v4020 = vpop.xlane.xlu0 %4019
    %v4021 = vsel %vm1119, %v3988, 0.0
    %4022 = vadd.xlane.f32.xlu0 %v4021
    %v4023 = vpop.xlane.xlu0 %4022
    %v4024 = vsel %vm1119, %v3990, 0.0
    %4025 = vadd.xlane.f32.xlu0 %v4024
    %v4026 = vpop.xlane.xlu0 %4025
    %v4027 = vrcp.pop %v3993
    %v4028 = vrcp.pop %v3996
    %v4029 = vrcp.pop %v3999
    %v4030 = vrcp.pop %v4002
    %v4031 = vrcp.pop %v4005
    %v4032 = vrcp.pop %v4008
    %v4033 = vrcp.pop %v4011
    %v4034 = vrcp.pop %v4014
    %v4035 = vrcp.pop %v4017
    %v4036 = vrcp.pop %v4020
    %v4037 = vrcp.pop %v4023
    %v4038 = vrcp.pop %v4026
    %v4039 = vmul.f32 %v3968, %v4027
    %v4040 = vmul.f32 %v3970, %v4028
    %v4041 = vmul.f32 %v3972, %v4029
    %v4042 = vmul.f32 %v3974, %v4030
    %v4043 = vmul.f32 %v3976, %v4031
    %v4044 = vmul.f32 %v3978, %v4032
    %v4045 = vmul.f32 %v3980, %v4033
    %v4046 = vmul.f32 %v3982, %v4034
    %v4047 = vmul.f32 %v3984, %v4035
    %v4048 = vmul.f32 %v3986, %v4036
    %v4049 = vmul.f32 %v3988, %v4037
    %v4050 = vmul.f32 %v3990, %v4038
    %v4051 = vmul.f32 %v3287, %v217
    %v4052 = vmul.f32 %v3292, %v217
    %v4053 = vmul.f32 %v3297, %v217
    %v4054 = vmul.f32 %v3302, %v217
    %v4055 = vmul.f32 %v3307, %v217
    %v4056 = vmul.f32 %v3312, %v217
    %v4057 = vmul.f32 %v3317, %v217
    %v4058 = vmul.f32 %v3322, %v217
    %v4059 = vmul.f32 %v3327, %v217
    %v4060 = vmul.f32 %v3332, %v217
    %v4061 = vmul.f32 %v3337, %v217
    %v4062 = vmul.f32 %v3342, %v217
    %v4064 = vsel %vm1119, %v4039, 0
    %v4067 = vsel %vm1119, %v4040, 0
    %v4070 = vsel %vm1119, %v4041, 0
    %v4073 = vsel %vm1119, %v4042, 0
    %v4076 = vsel %vm1119, %v4043, 0
    %v4079 = vsel %vm1119, %v4044, 0
    %v4082 = vsel %vm1119, %v4045, 0
    %v4085 = vsel %vm1119, %v4046, 0
    %v4088 = vsel %vm1119, %v4047, 0
    %v4091 = vsel %vm1119, %v4048, 0
    %v4094 = vsel %vm1119, %v4049, 0
    %v4097 = vsel %vm1119, %v4050, 0
    %4099 = vmatprep.subr.mxu0 0.0
    %4100 = vmatpush1.msra.mxu0 %v4051
    %4101 = vmatprep.subr.mxu0 0.0
    %4102 = vmatpush1.msra.mxu0 %v4052
    %4103 = vmatprep.subr.mxu0 0.0
    %4104 = vmatpush1.msra.mxu0 %v4053
    %4105 = vmatprep.subr.mxu0 0.0
    %4106 = vmatpush1.msra.mxu0 %v4054
    %4107 = vmatprep.subr.mxu0 0.0
    %4108 = vmatpush1.msra.mxu0 %v4055
    %4109 = vmatprep.subr.mxu0 0.0
    %4110 = vmatpush1.msra.mxu0 %v4056
    %4111 = vmatprep.subr.mxu0 0.0
    %4112 = vmatpush1.msra.mxu0 %v4057
    %4113 = vmatprep.subr.mxu0 0.0
    %4114 = vmatpush1.msra.mxu0 %v4058
    %4115 = vmatprep.subr.mxu0 0.0
    %4116 = vmatpush1.msra.mxu0 %v4059
    %4117 = vmatprep.subr.mxu0 0.0
    %4118 = vmatpush1.msra.mxu0 %v4060
    %4119 = vmatprep.subr.mxu0 0.0
    %4120 = vmatpush1.msra.mxu0 %v4061
    %4121 = vmatprep.subr.mxu0 0.0
    %4122 = vmatpush1.msra.mxu0 %v4062
    %4123 = vmatprep.subr.mxu0 0.0
    %4124 = vmatpush1.msra.mxu0 0.0
    %4125 = vmatprep.subr.mxu0 0.0
    %4126 = vmatpush1.msra.mxu0 0.0
    %4127 = vmatprep.subr.mxu0 0.0
    %4128 = vmatpush1.msra.mxu0 0.0
    %4129 = vmatprep.subr.mxu0 0.0
    %4130 = vmatpush1.msra.mxu0 0.0
    %4131 = vmatprep.subr.mxu0 0.0
    %4132 = vmatpush1.msra.mxu0 0.0
    %4133 = vmatprep.subr.mxu0 0.0
    %4134 = vmatpush1.msra.mxu0 0.0
    %4135 = vmatprep.subr.mxu0 0.0
    %4136 = vmatpush1.msra.mxu0 0.0
    %4137 = vmatprep.subr.mxu0 0.0
    %4138 = vmatpush1.msra.mxu0 0.0
    %4139 = vmatprep.subr.mxu0 0.0
    %4140 = vmatpush1.msra.mxu0 0.0
    %4141 = vmatprep.subr.mxu0 0.0
    %4142 = vmatpush1.msra.mxu0 0.0
    %4143 = vmatprep.subr.mxu0 0.0
    %4144 = vmatpush1.msra.mxu0 0.0
    %4145 = vmatprep.subr.mxu0 0.0
    %4146 = vmatpush1.msra.mxu0 0.0
    %4147 = vmatprep.subr.mxu0 0.0
    %4148 = vmatpush1.msra.mxu0 0.0
    %4149 = vmatprep.subr.mxu0 0.0
    %4150 = vmatpush1.msra.mxu0 0.0
    %4151 = vmatprep.subr.mxu0 0.0
    %4152 = vmatpush1.msra.mxu0 0.0
    %4153 = vmatprep.subr.mxu0 0.0
    %4154 = vmatpush1.msra.mxu0 0.0
    %4155 = vmatprep.subr.mxu0 0.0
    %4156 = vmatpush1.msra.mxu0 0.0
    %4157 = vmatprep.subr.mxu0 0.0
    %4158 = vmatpush1.msra.mxu0 0.0
    %4159 = vmatprep.subr.mxu0 0.0
    %4160 = vmatpush1.msra.mxu0 0.0
    %4161 = vmatprep.subr.mxu0 0.0
    %4162 = vmatpush1.msra.mxu0 0.0
    %4163 = vmatprep.mubr.f32.mxu0 0.0
    %4164 = vmatmul.mubr.f32.gmra.mrb[0].mxu0 %v4064
    %v4165 = vpop.f32.mrb[0].mxu0
    %v4166 = vadd.f32 0.0, %v4165
    %v4167 = vpop.f32.mrb[0].mxu0
    %4168 = vmatprep.mubr.f32.mxu0 0.0
    %4169 = vmatmul.mubr.f32.gmra.mrb[0].mxu0 %v4067
    %v4170 = vpop.f32.mrb[0].mxu0
    %v4171 = vadd.f32 0.0, %v4170
    %v4172 = vpop.f32.mrb[0].mxu0
    %4173 = vmatprep.mubr.f32.mxu0 0.0
    %4174 = vmatmul.mubr.f32.gmra.mrb[0].mxu0 %v4070
    %v4175 = vpop.f32.mrb[0].mxu0
    %v4176 = vadd.f32 0.0, %v4175
    %v4177 = vpop.f32.mrb[0].mxu0
    %4178 = vmatprep.mubr.f32.mxu0 0.0
    %4179 = vmatmul.mubr.f32.gmra.mrb[0].mxu0 %v4073
    %v4180 = vpop.f32.mrb[0].mxu0
    %v4181 = vadd.f32 0.0, %v4180
    %v4182 = vpop.f32.mrb[0].mxu0
    %4183 = vmatprep.mubr.f32.mxu0 0.0
    %4184 = vmatmul.mubr.f32.gmra.mrb[0].mxu0 %v4076
    %v4185 = vpop.f32.mrb[0].mxu0
    %v4186 = vadd.f32 0.0, %v4185
    %v4187 = vpop.f32.mrb[0].mxu0
    %4188 = vmatprep.mubr.f32.mxu0 0.0
    %4189 = vmatmul.mubr.f32.gmra.mrb[0].mxu0 %v4079
    %v4190 = vpop.f32.mrb[0].mxu0
    %v4191 = vadd.f32 0.0, %v4190
    %v4192 = vpop.f32.mrb[0].mxu0
    %4193 = vmatprep.mubr.f32.mxu0 0.0
    %4194 = vmatmul.mubr.f32.gmra.mrb[0].mxu0 %v4082
    %v4195 = vpop.f32.mrb[0].mxu0
    %v4196 = vadd.f32 0.0, %v4195
    %v4197 = vpop.f32.mrb[0].mxu0
    %4198 = vmatprep.mubr.f32.mxu0 0.0
    %4199 = vmatmul.mubr.f32.gmra.mrb[0].mxu0 %v4085
    %v4200 = vpop.f32.mrb[0].mxu0
    %v4201 = vadd.f32 0.0, %v4200
    %v4202 = vpop.f32.mrb[0].mxu0
    %4203 = vmatprep.mubr.f32.mxu0 0.0
    %4204 = vmatmul.mubr.f32.gmra.mrb[0].mxu0 %v4088
    %v4205 = vpop.f32.mrb[0].mxu0
    %v4206 = vadd.f32 0.0, %v4205
    %v4207 = vpop.f32.mrb[0].mxu0
    %4208 = vmatprep.mubr.f32.mxu0 0.0
    %4209 = vmatmul.mubr.f32.gmra.mrb[0].mxu0 %v4091
    %v4210 = vpop.f32.mrb[0].mxu0
    %v4211 = vadd.f32 0.0, %v4210
    %v4212 = vpop.f32.mrb[0].mxu0
    %4213 = vmatprep.mubr.f32.mxu0 0.0
    %4214 = vmatmul.mubr.f32.gmra.mrb[0].mxu0 %v4094
    %v4215 = vpop.f32.mrb[0].mxu0
    %v4216 = vadd.f32 0.0, %v4215
    %v4217 = vpop.f32.mrb[0].mxu0
    %4218 = vmatprep.mubr.f32.mxu0 0.0
    %4219 = vmatmul.mubr.f32.gmra.mrb[0].mxu0 %v4097
    %v4220 = vpop.f32.mrb[0].mxu0
    %v4221 = vadd.f32 0.0, %v4220
    %v4222 = vpop.f32.mrb[0].mxu0
    %4223 = vdwg.mxu0
    %v4225 = vsel %vm1119, %v3698, 0
    %v4228 = vsel %vm1119, %v3699, 0
    %v4231 = vsel %vm1119, %v3700, 0
    %v4234 = vsel %vm1119, %v3701, 0
    %v4237 = vsel %vm1119, %v3702, 0
    %v4240 = vsel %vm1119, %v3703, 0
    %v4243 = vsel %vm1119, %v3704, 0
    %v4246 = vsel %vm1119, %v3705, 0
    %v4249 = vsel %vm1119, %v3706, 0
    %v4252 = vsel %vm1119, %v3707, 0
    %v4255 = vsel %vm1119, %v3708, 0
    %v4258 = vsel %vm1119, %v3709, 0
    %4260 = vmatprep.subr.mxu0 0.0
    %4261 = vmatpush1.msra.mxu0 %v3710
    %4262 = vmatprep.subr.mxu0 0.0
    %4263 = vmatpush1.msra.mxu0 %v3711
    %4264 = vmatprep.subr.mxu0 0.0
    %4265 = vmatpush1.msra.mxu0 %v3712
    %4266 = vmatprep.subr.mxu0 0.0
    %4267 = vmatpush1.msra.mxu0 %v3713
    %4268 = vmatprep.subr.mxu0 0.0
    %4269 = vmatpush1.msra.mxu0 %v3714
    %4270 = vmatprep.subr.mxu0 0.0
    %4271 = vmatpush1.msra.mxu0 %v3715
    %4272 = vmatprep.subr.mxu0 0.0
    %4273 = vmatpush1.msra.mxu0 %v3716
    %4274 = vmatprep.subr.mxu0 0.0
    %4275 = vmatpush1.msra.mxu0 %v3717
    %4276 = vmatprep.subr.mxu0 0.0
    %4277 = vmatpush1.msra.mxu0 %v3718
    %4278 = vmatprep.subr.mxu0 0.0
    %4279 = vmatpush1.msra.mxu0 %v3719
    %4280 = vmatprep.subr.mxu0 0.0
    %4281 = vmatpush1.msra.mxu0 %v3720
    %4282 = vmatprep.subr.mxu0 0.0
    %4283 = vmatpush1.msra.mxu0 %v3721
    %4284 = vmatprep.subr.mxu0 0.0
    %4285 = vmatpush1.msra.mxu0 0.0
    %4286 = vmatprep.subr.mxu0 0.0
    %4287 = vmatpush1.msra.mxu0 0.0
    %4288 = vmatprep.subr.mxu0 0.0
    %4289 = vmatpush1.msra.mxu0 0.0
    %4290 = vmatprep.subr.mxu0 0.0
    %4291 = vmatpush1.msra.mxu0 0.0
    %4292 = vmatprep.subr.mxu0 0.0
    %4293 = vmatpush1.msra.mxu0 0.0
    %4294 = vmatprep.subr.mxu0 0.0
    %4295 = vmatpush1.msra.mxu0 0.0
    %4296 = vmatprep.subr.mxu0 0.0
    %4297 = vmatpush1.msra.mxu0 0.0
    %4298 = vmatprep.subr.mxu0 0.0
    %4299 = vmatpush1.msra.mxu0 0.0
    %4300 = vmatprep.subr.mxu0 0.0
    %4301 = vmatpush1.msra.mxu0 0.0
    %4302 = vmatprep.subr.mxu0 0.0
    %4303 = vmatpush1.msra.mxu0 0.0
    %4304 = vmatprep.subr.mxu0 0.0
    %4305 = vmatpush1.msra.mxu0 0.0
    %4306 = vmatprep.subr.mxu0 0.0
    %4307 = vmatpush1.msra.mxu0 0.0
    %4308 = vmatprep.subr.mxu0 0.0
    %4309 = vmatpush1.msra.mxu0 0.0
    %4310 = vmatprep.subr.mxu0 0.0
    %4311 = vmatpush1.msra.mxu0 0.0
    %4312 = vmatprep.subr.mxu0 0.0
    %4313 = vmatpush1.msra.mxu0 0.0
    %4314 = vmatprep.subr.mxu0 0.0
    %4315 = vmatpush1.msra.mxu0 0.0
    %4316 = vmatprep.subr.mxu0 0.0
    %4317 = vmatpush1.msra.mxu0 0.0
    %4318 = vmatprep.subr.mxu0 0.0
    %4319 = vmatpush1.msra.mxu0 0.0
    %4320 = vmatprep.subr.mxu0 0.0
    %4321 = vmatpush1.msra.mxu0 0.0
    %4322 = vmatprep.subr.mxu0 0.0
    %4323 = vmatpush1.msra.mxu0 0.0
    %4324 = vmatprep.mubr.f32.mxu0 0.0
    %4325 = vmatmul.mubr.f32.gmra.mrb[0].mxu0 %v4225
    %v4326 = vpop.f32.mrb[0].mxu0
    %v4327 = vadd.f32 %v4166, %v4326
    %v4328 = vpop.f32.mrb[0].mxu0
    %4329 = vmatprep.mubr.f32.mxu0 0.0
    %4330 = vmatmul.mubr.f32.gmra.mrb[0].mxu0 %v4228
    %v4331 = vpop.f32.mrb[0].mxu0
    %v4332 = vadd.f32 %v4171, %v4331
    %v4333 = vpop.f32.mrb[0].mxu0
    %4334 = vmatprep.mubr.f32.mxu0 0.0
    %4335 = vmatmul.mubr.f32.gmra.mrb[0].mxu0 %v4231
    %v4336 = vpop.f32.mrb[0].mxu0
    %v4337 = vadd.f32 %v4176, %v4336
    %v4338 = vpop.f32.mrb[0].mxu0
    %4339 = vmatprep.mubr.f32.mxu0 0.0
    %4340 = vmatmul.mubr.f32.gmra.mrb[0].mxu0 %v4234
    %v4341 = vpop.f32.mrb[0].mxu0
    %v4342 = vadd.f32 %v4181, %v4341
    %v4343 = vpop.f32.mrb[0].mxu0
    %4344 = vmatprep.mubr.f32.mxu0 0.0
    %4345 = vmatmul.mubr.f32.gmra.mrb[0].mxu0 %v4237
    %v4346 = vpop.f32.mrb[0].mxu0
    %v4347 = vadd.f32 %v4186, %v4346
    %v4348 = vpop.f32.mrb[0].mxu0
    %4349 = vmatprep.mubr.f32.mxu0 0.0
    %4350 = vmatmul.mubr.f32.gmra.mrb[0].mxu0 %v4240
    %v4351 = vpop.f32.mrb[0].mxu0
    %v4352 = vadd.f32 %v4191, %v4351
    %v4353 = vpop.f32.mrb[0].mxu0
    %4354 = vmatprep.mubr.f32.mxu0 0.0
    %4355 = vmatmul.mubr.f32.gmra.mrb[0].mxu0 %v4243
    %v4356 = vpop.f32.mrb[0].mxu0
    %v4357 = vadd.f32 %v4196, %v4356
    %v4358 = vpop.f32.mrb[0].mxu0
    %4359 = vmatprep.mubr.f32.mxu0 0.0
    %4360 = vmatmul.mubr.f32.gmra.mrb[0].mxu0 %v4246
    %v4361 = vpop.f32.mrb[0].mxu0
    %v4362 = vadd.f32 %v4201, %v4361
    %v4363 = vpop.f32.mrb[0].mxu0
    %4364 = vmatprep.mubr.f32.mxu0 0.0
    %4365 = vmatmul.mubr.f32.gmra.mrb[0].mxu0 %v4249
    %v4366 = vpop.f32.mrb[0].mxu0
    %v4367 = vadd.f32 %v4206, %v4366
    %v4368 = vpop.f32.mrb[0].mxu0
    %4369 = vmatprep.mubr.f32.mxu0 0.0
    %4370 = vmatmul.mubr.f32.gmra.mrb[0].mxu0 %v4252
    %v4371 = vpop.f32.mrb[0].mxu0
    %v4372 = vadd.f32 %v4211, %v4371
    %v4373 = vpop.f32.mrb[0].mxu0
    %4374 = vmatprep.mubr.f32.mxu0 0.0
    %4375 = vmatmul.mubr.f32.gmra.mrb[0].mxu0 %v4255
    %v4376 = vpop.f32.mrb[0].mxu0
    %v4377 = vadd.f32 %v4216, %v4376
    %v4378 = vpop.f32.mrb[0].mxu0
    %4379 = vmatprep.mubr.f32.mxu0 0.0
    %4380 = vmatmul.mubr.f32.gmra.mrb[0].mxu0 %v4258
    %v4381 = vpop.f32.mrb[0].mxu0
    %v4382 = vadd.f32 %v4221, %v4381
    %v4383 = vpop.f32.mrb[0].mxu0
    %4384 = vdwg.mxu0
    %s4385 = scalar_lea.vmem [#allocation2], 288
    %v4386 = vld [vmem:[%s4385] sm:$0xff]
    %v4387 = vld [vmem:[%s4385 + $0x8] sm:$0xff]
    %v4388 = vld [vmem:[%s4385 + $0x10] sm:$0xff]
    %v4389 = vld [vmem:[%s4385 + $0x18] sm:$0xff]
    %v4390 = vld [vmem:[%s5 + $0xf] sm:$0x1]
    %v4391 = vlaneseq
    %v4392 = vshrl.u32 %v4391, 7
    %v4393 = vsub.s32 0, %v4392
    %v4394 = vrot.slane %v4390, %v4393
    %v4396 = vsel %vm220, %v4327, 0
    %v4399 = vsel %vm220, %v4332, 0
    %v4402 = vsel %vm220, %v4337, 0
    %v4405 = vsel %vm220, %v4342, 0
    %v4408 = vsel %vm220, %v4347, 0
    %v4411 = vsel %vm220, %v4352, 0
    %v4414 = vsel %vm220, %v4357, 0
    %v4417 = vsel %vm220, %v4362, 0
    %v4420 = vsel %vm220, %v4367, 0
    %v4423 = vsel %vm220, %v4372, 0
    %v4426 = vsel %vm220, %v4377, 0
    %v4429 = vsel %vm220, %v4382, 0
    %4431 = vmatprep.subr.mxu0 0.0
    %4432 = vmatpush1.msra.mxu0 %v4386
    %4433 = vmatprep.subr.mxu0 0.0
    %4434 = vmatpush1.msra.mxu0 %v4387
    %4435 = vmatprep.subr.mxu0 0.0
    %4436 = vmatpush1.msra.mxu0 %v4388
    %4437 = vmatprep.subr.mxu0 0.0
    %4438 = vmatpush1.msra.mxu0 %v4389
    %4439 = vmatprep.subr.mxu0 0.0
    %4440 = vmatpush1.msra.mxu0 0.0
    %4441 = vmatprep.subr.mxu0 0.0
    %4442 = vmatpush1.msra.mxu0 0.0
    %4443 = vmatprep.subr.mxu0 0.0
    %4444 = vmatpush1.msra.mxu0 0.0
    %4445 = vmatprep.subr.mxu0 0.0
    %4446 = vmatpush1.msra.mxu0 0.0
    %4447 = vmatprep.subr.mxu0 0.0
    %4448 = vmatpush1.msra.mxu0 0.0
    %4449 = vmatprep.subr.mxu0 0.0
    %4450 = vmatpush1.msra.mxu0 0.0
    %4451 = vmatprep.subr.mxu0 0.0
    %4452 = vmatpush1.msra.mxu0 0.0
    %4453 = vmatprep.subr.mxu0 0.0
    %4454 = vmatpush1.msra.mxu0 0.0
    %4455 = vmatprep.subr.mxu0 0.0
    %4456 = vmatpush1.msra.mxu0 0.0
    %4457 = vmatprep.subr.mxu0 0.0
    %4458 = vmatpush1.msra.mxu0 0.0
    %4459 = vmatprep.subr.mxu0 0.0
    %4460 = vmatpush1.msra.mxu0 0.0
    %4461 = vmatprep.subr.mxu0 0.0
    %4462 = vmatpush1.msra.mxu0 0.0
    %4463 = vmatprep.subr.mxu0 0.0
    %4464 = vmatpush1.msra.mxu0 0.0
    %4465 = vmatprep.subr.mxu0 0.0
    %4466 = vmatpush1.msra.mxu0 0.0
    %4467 = vmatprep.subr.mxu0 0.0
    %4468 = vmatpush1.msra.mxu0 0.0
    %4469 = vmatprep.subr.mxu0 0.0
    %4470 = vmatpush1.msra.mxu0 0.0
    %4471 = vmatprep.subr.mxu0 0.0
    %4472 = vmatpush1.msra.mxu0 0.0
    %4473 = vmatprep.subr.mxu0 0.0
    %4474 = vmatpush1.msra.mxu0 0.0
    %4475 = vmatprep.subr.mxu0 0.0
    %4476 = vmatpush1.msra.mxu0 0.0
    %4477 = vmatprep.subr.mxu0 0.0
    %4478 = vmatpush1.msra.mxu0 0.0
    %4479 = vmatprep.subr.mxu0 0.0
    %4480 = vmatpush1.msra.mxu0 0.0
    %4481 = vmatprep.subr.mxu0 0.0
    %4482 = vmatpush1.msra.mxu0 0.0
    %4483 = vmatprep.subr.mxu0 0.0
    %4484 = vmatpush1.msra.mxu0 0.0
    %4485 = vmatprep.subr.mxu0 0.0
    %4486 = vmatpush1.msra.mxu0 0.0
    %4487 = vmatprep.subr.mxu0 0.0
    %4488 = vmatpush1.msra.mxu0 0.0
    %4489 = vmatprep.subr.mxu0 0.0
    %4490 = vmatpush1.msra.mxu0 0.0
    %4491 = vmatprep.subr.mxu0 0.0
    %4492 = vmatpush1.msra.mxu0 0.0
    %4493 = vmatprep.subr.mxu0 0.0
    %4494 = vmatpush1.msra.mxu0 0.0
    %4495 = vmatprep.mubr.f32.mxu0 0.0
    %4496 = vmatmul.mubr.f32.gmra.mrb[0].mxu0 %v4396
    %v4497 = vpop.f32.mrb[0].mxu0
    %v4498 = vadd.f32 %v4394, %v4497
    %v4499 = vpop.f32.mrb[0].mxu0
    %4500 = vmatprep.mubr.f32.mxu0 0.0
    %4501 = vmatmul.mubr.f32.gmra.mrb[0].mxu0 %v4399
    %v4502 = vpop.f32.mrb[0].mxu0
    %v4503 = vadd.f32 %v4394, %v4502
    %v4504 = vpop.f32.mrb[0].mxu0
    %4505 = vmatprep.mubr.f32.mxu0 0.0
    %4506 = vmatmul.mubr.f32.gmra.mrb[0].mxu0 %v4402
    %v4507 = vpop.f32.mrb[0].mxu0
    %v4508 = vadd.f32 %v4394, %v4507
    %v4509 = vpop.f32.mrb[0].mxu0
    %4510 = vmatprep.mubr.f32.mxu0 0.0
    %4511 = vmatmul.mubr.f32.gmra.mrb[0].mxu0 %v4405
    %v4512 = vpop.f32.mrb[0].mxu0
    %v4513 = vadd.f32 %v4394, %v4512
    %v4514 = vpop.f32.mrb[0].mxu0
    %4515 = vmatprep.mubr.f32.mxu0 0.0
    %4516 = vmatmul.mubr.f32.gmra.mrb[0].mxu0 %v4408
    %v4517 = vpop.f32.mrb[0].mxu0
    %v4518 = vadd.f32 %v4394, %v4517
    %v4519 = vpop.f32.mrb[0].mxu0
    %4520 = vmatprep.mubr.f32.mxu0 0.0
    %4521 = vmatmul.mubr.f32.gmra.mrb[0].mxu0 %v4411
    %v4522 = vpop.f32.mrb[0].mxu0
    %v4523 = vadd.f32 %v4394, %v4522
    %v4524 = vpop.f32.mrb[0].mxu0
    %4525 = vmatprep.mubr.f32.mxu0 0.0
    %4526 = vmatmul.mubr.f32.gmra.mrb[0].mxu0 %v4414
    %v4527 = vpop.f32.mrb[0].mxu0
    %v4528 = vadd.f32 %v4394, %v4527
    %v4529 = vpop.f32.mrb[0].mxu0
    %4530 = vmatprep.mubr.f32.mxu0 0.0
    %4531 = vmatmul.mubr.f32.gmra.mrb[0].mxu0 %v4417
    %v4532 = vpop.f32.mrb[0].mxu0
    %v4533 = vadd.f32 %v4394, %v4532
    %v4534 = vpop.f32.mrb[0].mxu0
    %4535 = vmatprep.mubr.f32.mxu0 0.0
    %4536 = vmatmul.mubr.f32.gmra.mrb[0].mxu0 %v4420
    %v4537 = vpop.f32.mrb[0].mxu0
    %v4538 = vadd.f32 %v4394, %v4537
    %v4539 = vpop.f32.mrb[0].mxu0
    %4540 = vmatprep.mubr.f32.mxu0 0.0
    %4541 = vmatmul.mubr.f32.gmra.mrb[0].mxu0 %v4423
    %v4542 = vpop.f32.mrb[0].mxu0
    %v4543 = vadd.f32 %v4394, %v4542
    %v4544 = vpop.f32.mrb[0].mxu0
    %4545 = vmatprep.mubr.f32.mxu0 0.0
    %4546 = vmatmul.mubr.f32.gmra.mrb[0].mxu0 %v4426
    %v4547 = vpop.f32.mrb[0].mxu0
    %v4548 = vadd.f32 %v4394, %v4547
    %v4549 = vpop.f32.mrb[0].mxu0
    %4550 = vmatprep.mubr.f32.mxu0 0.0
    %4551 = vmatmul.mubr.f32.gmra.mrb[0].mxu0 %v4429
    %v4552 = vpop.f32.mrb[0].mxu0
    %v4553 = vadd.f32 %v4394, %v4552
    %v4554 = vpop.f32.mrb[0].mxu0
    %4555 = vdwg.mxu0
    %v4556 = vadd.f32 %v2856, %v4498
    %v4557 = vadd.f32 %v2857, %v4503
    %v4558 = vadd.f32 %v2858, %v4508
    %v4559 = vadd.f32 %v2859, %v4513
    %v4560 = vadd.f32 %v2860, %v4518
    %v4561 = vadd.f32 %v2861, %v4523
    %v4562 = vadd.f32 %v2862, %v4528
    %v4563 = vadd.f32 %v2863, %v4533
    %v4564 = vadd.f32 %v2864, %v4538
    %v4565 = vadd.f32 %v2865, %v4543
    %v4566 = vadd.f32 %v2866, %v4548
    %v4567 = vadd.f32 %v2867, %v4553
    %v4568 = vld [vmem:[%s5 + $0x10] sm:$0x1]
    %v4569 = vld [vmem:[%s5 + $0x11] sm:$0x1]
    %v4570 = vsel %vm220, %v4556, 0.0
    %4571 = vadd.xlane.f32.xlu0 %v4570
    %v4572 = vpop.xlane.xlu0 %4571
    %v4573 = vsel %vm220, %v4557, 0.0
    %4574 = vadd.xlane.f32.xlu0 %v4573
    %v4575 = vpop.xlane.xlu0 %4574
    %v4576 = vsel %vm220, %v4558, 0.0
    %4577 = vadd.xlane.f32.xlu0 %v4576
    %v4578 = vpop.xlane.xlu0 %4577
    %v4579 = vsel %vm220, %v4559, 0.0
    %4580 = vadd.xlane.f32.xlu0 %v4579
    %v4581 = vpop.xlane.xlu0 %4580
    %v4582 = vsel %vm220, %v4560, 0.0
    %4583 = vadd.xlane.f32.xlu0 %v4582
    %v4584 = vpop.xlane.xlu0 %4583
    %v4585 = vsel %vm220, %v4561, 0.0
    %4586 = vadd.xlane.f32.xlu0 %v4585
    %v4587 = vpop.xlane.xlu0 %4586
    %v4588 = vsel %vm220, %v4562, 0.0
    %4589 = vadd.xlane.f32.xlu0 %v4588
    %v4590 = vpop.xlane.xlu0 %4589
    %v4591 = vsel %vm220, %v4563, 0.0
    %4592 = vadd.xlane.f32.xlu0 %v4591
    %v4593 = vpop.xlane.xlu0 %4592
    %v4594 = vsel %vm220, %v4564, 0.0
    %4595 = vadd.xlane.f32.xlu0 %v4594
    %v4596 = vpop.xlane.xlu0 %4595
    %v4597 = vsel %vm220, %v4565, 0.0
    %4598 = vadd.xlane.f32.xlu0 %v4597
    %v4599 = vpop.xlane.xlu0 %4598
    %v4600 = vsel %vm220, %v4566, 0.0
    %4601 = vadd.xlane.f32.xlu0 %v4600
    %v4602 = vpop.xlane.xlu0 %4601
    %v4603 = vsel %vm220, %v4567, 0.0
    %4604 = vadd.xlane.f32.xlu0 %v4603
    %v4605 = vpop.xlane.xlu0 %4604
    %v4606 = vmul.f32 %v4572, %v257
    %v4607 = vmul.f32 %v4575, %v257
    %v4608 = vmul.f32 %v4578, %v257
    %v4609 = vmul.f32 %v4581, %v257
    %v4610 = vmul.f32 %v4584, %v257
    %v4611 = vmul.f32 %v4587, %v257
    %v4612 = vmul.f32 %v4590, %v257
    %v4613 = vmul.f32 %v4593, %v257
    %v4614 = vmul.f32 %v4596, %v257
    %v4615 = vmul.f32 %v4599, %v257
    %v4616 = vmul.f32 %v4602, %v257
    %v4617 = vmul.f32 %v4605, %v257
    %v4618 = vsub.f32 %v4556, %v4606
    %v4619 = vsub.f32 %v4557, %v4607
    %v4620 = vsub.f32 %v4558, %v4608
    %v4621 = vsub.f32 %v4559, %v4609
    %v4622 = vsub.f32 %v4560, %v4610
    %v4623 = vsub.f32 %v4561, %v4611
    %v4624 = vsub.f32 %v4562, %v4612
    %v4625 = vsub.f32 %v4563, %v4613
    %v4626 = vsub.f32 %v4564, %v4614
    %v4627 = vsub.f32 %v4565, %v4615
    %v4628 = vsub.f32 %v4566, %v4616
    %v4629 = vsub.f32 %v4567, %v4617
    %v4630 = vmul.f32 %v4618, %v4618
    %v4631 = vmul.f32 %v4619, %v4619
    %v4632 = vmul.f32 %v4620, %v4620
    %v4633 = vmul.f32 %v4621, %v4621
    %v4634 = vmul.f32 %v4622, %v4622
    %v4635 = vmul.f32 %v4623, %v4623
    %v4636 = vmul.f32 %v4624, %v4624
    %v4637 = vmul.f32 %v4625, %v4625
    %v4638 = vmul.f32 %v4626, %v4626
    %v4639 = vmul.f32 %v4627, %v4627
    %v4640 = vmul.f32 %v4628, %v4628
    %v4641 = vmul.f32 %v4629, %v4629
    %v4642 = vsel %vm220, %v4630, 0.0
    %4643 = vadd.xlane.f32.xlu0 %v4642
    %v4644 = vpop.xlane.xlu0 %4643
    %v4645 = vsel %vm220, %v4631, 0.0
    %4646 = vadd.xlane.f32.xlu0 %v4645
    %v4647 = vpop.xlane.xlu0 %4646
    %v4648 = vsel %vm220, %v4632, 0.0
    %4649 = vadd.xlane.f32.xlu0 %v4648
    %v4650 = vpop.xlane.xlu0 %4649
    %v4651 = vsel %vm220, %v4633, 0.0
    %4652 = vadd.xlane.f32.xlu0 %v4651
    %v4653 = vpop.xlane.xlu0 %4652
    %v4654 = vsel %vm220, %v4634, 0.0
    %4655 = vadd.xlane.f32.xlu0 %v4654
    %v4656 = vpop.xlane.xlu0 %4655
    %v4657 = vsel %vm220, %v4635, 0.0
    %4658 = vadd.xlane.f32.xlu0 %v4657
    %v4659 = vpop.xlane.xlu0 %4658
    %v4660 = vsel %vm220, %v4636, 0.0
    %4661 = vadd.xlane.f32.xlu0 %v4660
    %v4662 = vpop.xlane.xlu0 %4661
    %v4663 = vsel %vm220, %v4637, 0.0
    %4664 = vadd.xlane.f32.xlu0 %v4663
    %v4665 = vpop.xlane.xlu0 %4664
    %v4666 = vsel %vm220, %v4638, 0.0
    %4667 = vadd.xlane.f32.xlu0 %v4666
    %v4668 = vpop.xlane.xlu0 %4667
    %v4669 = vsel %vm220, %v4639, 0.0
    %4670 = vadd.xlane.f32.xlu0 %v4669
    %v4671 = vpop.xlane.xlu0 %4670
    %v4672 = vsel %vm220, %v4640, 0.0
    %4673 = vadd.xlane.f32.xlu0 %v4672
    %v4674 = vpop.xlane.xlu0 %4673
    %v4675 = vsel %vm220, %v4641, 0.0
    %4676 = vadd.xlane.f32.xlu0 %v4675
    %v4677 = vpop.xlane.xlu0 %4676
    %v4678 = vmul.f32 %v4644, %v257
    %v4679 = vmul.f32 %v4647, %v257
    %v4680 = vmul.f32 %v4650, %v257
    %v4681 = vmul.f32 %v4653, %v257
    %v4682 = vmul.f32 %v4656, %v257
    %v4683 = vmul.f32 %v4659, %v257
    %v4684 = vmul.f32 %v4662, %v257
    %v4685 = vmul.f32 %v4665, %v257
    %v4686 = vmul.f32 %v4668, %v257
    %v4687 = vmul.f32 %v4671, %v257
    %v4688 = vmul.f32 %v4674, %v257
    %v4689 = vmul.f32 %v4677, %v257
    %v4690 = vadd.f32 %v4678, 1e-08
    %v4691 = vadd.f32 %v4679, 1e-08
    %v4692 = vadd.f32 %v4680, 1e-08
    %v4693 = vadd.f32 %v4681, 1e-08
    %v4694 = vadd.f32 %v4682, 1e-08
    %v4695 = vadd.f32 %v4683, 1e-08
    %v4696 = vadd.f32 %v4684, 1e-08
    %v4697 = vadd.f32 %v4685, 1e-08
    %v4698 = vadd.f32 %v4686, 1e-08
    %v4699 = vadd.f32 %v4687, 1e-08
    %v4700 = vadd.f32 %v4688, 1e-08
    %v4701 = vadd.f32 %v4689, 1e-08
    %v4702 = vrsqrt.pop %v4690
    %v4703 = vrsqrt.pop %v4691
    %v4704 = vrsqrt.pop %v4692
    %v4705 = vrsqrt.pop %v4693
    %v4706 = vrsqrt.pop %v4694
    %v4707 = vrsqrt.pop %v4695
    %v4708 = vrsqrt.pop %v4696
    %v4709 = vrsqrt.pop %v4697
    %v4710 = vrsqrt.pop %v4698
    %v4711 = vrsqrt.pop %v4699
    %v4712 = vrsqrt.pop %v4700
    %v4713 = vrsqrt.pop %v4701
    %v4714 = vmul.f32 %v4618, %v4702
    %v4715 = vmul.f32 %v4619, %v4703
    %v4716 = vmul.f32 %v4620, %v4704
    %v4717 = vmul.f32 %v4621, %v4705
    %v4718 = vmul.f32 %v4622, %v4706
    %v4719 = vmul.f32 %v4623, %v4707
    %v4720 = vmul.f32 %v4624, %v4708
    %v4721 = vmul.f32 %v4625, %v4709
    %v4722 = vmul.f32 %v4626, %v4710
    %v4723 = vmul.f32 %v4627, %v4711
    %v4724 = vmul.f32 %v4628, %v4712
    %v4725 = vmul.f32 %v4629, %v4713
    %v4726 = vlaneseq
    %v4727 = vshrl.u32 %v4726, 7
    %v4728 = vsub.s32 0, %v4727
    %v4729 = vrot.slane %v4568, %v4728
    %v4730 = vmul.f32 %v4714, %v4729
    %v4731 = vmul.f32 %v4715, %v4729
    %v4732 = vmul.f32 %v4716, %v4729
    %v4733 = vmul.f32 %v4717, %v4729
    %v4734 = vmul.f32 %v4718, %v4729
    %v4735 = vmul.f32 %v4719, %v4729
    %v4736 = vmul.f32 %v4720, %v4729
    %v4737 = vmul.f32 %v4721, %v4729
    %v4738 = vmul.f32 %v4722, %v4729
    %v4739 = vmul.f32 %v4723, %v4729
    %v4740 = vmul.f32 %v4724, %v4729
    %v4741 = vmul.f32 %v4725, %v4729
    %v4742 = vlaneseq
    %v4743 = vshrl.u32 %v4742, 7
    %v4744 = vsub.s32 0, %v4743
    %v4745 = vrot.slane %v4569, %v4744
    %v4746 = vadd.f32 %v4730, %v4745
    %v4747 = vadd.f32 %v4731, %v4745
    %v4748 = vadd.f32 %v4732, %v4745
    %v4749 = vadd.f32 %v4733, %v4745
    %v4750 = vadd.f32 %v4734, %v4745
    %v4751 = vadd.f32 %v4735, %v4745
    %v4752 = vadd.f32 %v4736, %v4745
    %v4753 = vadd.f32 %v4737, %v4745
    %v4754 = vadd.f32 %v4738, %v4745
    %v4755 = vadd.f32 %v4739, %v4745
    %v4756 = vadd.f32 %v4740, %v4745
    %v4757 = vadd.f32 %v4741, %v4745
    %s4758 = scalar_lea.vmem [#allocation2], 320
    %v4759 = vld [vmem:[%s4758] sm:$0xff]
    %v4760 = vld [vmem:[%s4758 + $0x8] sm:$0xff]
    %v4761 = vld [vmem:[%s4758 + $0x10] sm:$0xff]
    %v4762 = vld [vmem:[%s4758 + $0x18] sm:$0xff]
    %v4763 = vld [vmem:[%s5 + $0x12] sm:$0x1]
    %v4764 = vlaneseq
    %v4765 = vshrl.u32 %v4764, 7
    %v4766 = vsub.s32 0, %v4765
    %v4767 = vrot.slane %v4763, %v4766
    %v4769 = vsel %vm220, %v4746, 0
    %v4772 = vsel %vm220, %v4747, 0
    %v4775 = vsel %vm220, %v4748, 0
    %v4778 = vsel %vm220, %v4749, 0
    %v4781 = vsel %vm220, %v4750, 0
    %v4784 = vsel %vm220, %v4751, 0
    %v4787 = vsel %vm220, %v4752, 0
    %v4790 = vsel %vm220, %v4753, 0
    %v4793 = vsel %vm220, %v4754, 0
    %v4796 = vsel %vm220, %v4755, 0
    %v4799 = vsel %vm220, %v4756, 0
    %v4802 = vsel %vm220, %v4757, 0
    %4804 = vmatprep.subr.mxu0 0.0
    %4805 = vmatpush1.msra.mxu0 %v4759
    %4806 = vmatprep.subr.mxu0 0.0
    %4807 = vmatpush1.msra.mxu0 %v4760
    %4808 = vmatprep.subr.mxu0 0.0
    %4809 = vmatpush1.msra.mxu0 %v4761
    %4810 = vmatprep.subr.mxu0 0.0
    %4811 = vmatpush1.msra.mxu0 %v4762
    %4812 = vmatprep.subr.mxu0 0.0
    %4813 = vmatpush1.msra.mxu0 0.0
    %4814 = vmatprep.subr.mxu0 0.0
    %4815 = vmatpush1.msra.mxu0 0.0
    %4816 = vmatprep.subr.mxu0 0.0
    %4817 = vmatpush1.msra.mxu0 0.0
    %4818 = vmatprep.subr.mxu0 0.0
    %4819 = vmatpush1.msra.mxu0 0.0
    %4820 = vmatprep.subr.mxu0 0.0
    %4821 = vmatpush1.msra.mxu0 0.0
    %4822 = vmatprep.subr.mxu0 0.0
    %4823 = vmatpush1.msra.mxu0 0.0
    %4824 = vmatprep.subr.mxu0 0.0
    %4825 = vmatpush1.msra.mxu0 0.0
    %4826 = vmatprep.subr.mxu0 0.0
    %4827 = vmatpush1.msra.mxu0 0.0
    %4828 = vmatprep.subr.mxu0 0.0
    %4829 = vmatpush1.msra.mxu0 0.0
    %4830 = vmatprep.subr.mxu0 0.0
    %4831 = vmatpush1.msra.mxu0 0.0
    %4832 = vmatprep.subr.mxu0 0.0
    %4833 = vmatpush1.msra.mxu0 0.0
    %4834 = vmatprep.subr.mxu0 0.0
    %4835 = vmatpush1.msra.mxu0 0.0
    %4836 = vmatprep.subr.mxu0 0.0
    %4837 = vmatpush1.msra.mxu0 0.0
    %4838 = vmatprep.subr.mxu0 0.0
    %4839 = vmatpush1.msra.mxu0 0.0
    %4840 = vmatprep.subr.mxu0 0.0
    %4841 = vmatpush1.msra.mxu0 0.0
    %4842 = vmatprep.subr.mxu0 0.0
    %4843 = vmatpush1.msra.mxu0 0.0
    %4844 = vmatprep.subr.mxu0 0.0
    %4845 = vmatpush1.msra.mxu0 0.0
    %4846 = vmatprep.subr.mxu0 0.0
    %4847 = vmatpush1.msra.mxu0 0.0
    %4848 = vmatprep.subr.mxu0 0.0
    %4849 = vmatpush1.msra.mxu0 0.0
    %4850 = vmatprep.subr.mxu0 0.0
    %4851 = vmatpush1.msra.mxu0 0.0
    %4852 = vmatprep.subr.mxu0 0.0
    %4853 = vmatpush1.msra.mxu0 0.0
    %4854 = vmatprep.subr.mxu0 0.0
    %4855 = vmatpush1.msra.mxu0 0.0
    %4856 = vmatprep.subr.mxu0 0.0
    %4857 = vmatpush1.msra.mxu0 0.0
    %4858 = vmatprep.subr.mxu0 0.0
    %4859 = vmatpush1.msra.mxu0 0.0
    %4860 = vmatprep.subr.mxu0 0.0
    %4861 = vmatpush1.msra.mxu0 0.0
    %4862 = vmatprep.subr.mxu0 0.0
    %4863 = vmatpush1.msra.mxu0 0.0
    %4864 = vmatprep.subr.mxu0 0.0
    %4865 = vmatpush1.msra.mxu0 0.0
    %4866 = vmatprep.subr.mxu0 0.0
    %4867 = vmatpush1.msra.mxu0 0.0
    %4868 = vmatprep.mubr.f32.mxu0 0.0
    %4869 = vmatmul.mubr.f32.gmra.mrb[0].mxu0 %v4769
    %v4870 = vpop.f32.mrb[0].mxu0
    %v4871 = vadd.f32 %v4767, %v4870
    %v4872 = vpop.f32.mrb[0].mxu0
    %4873 = vmatprep.mubr.f32.mxu0 0.0
    %4874 = vmatmul.mubr.f32.gmra.mrb[0].mxu0 %v4772
    %v4875 = vpop.f32.mrb[0].mxu0
    %v4876 = vadd.f32 %v4767, %v4875
    %v4877 = vpop.f32.mrb[0].mxu0
    %4878 = vmatprep.mubr.f32.mxu0 0.0
    %4879 = vmatmul.mubr.f32.gmra.mrb[0].mxu0 %v4775
    %v4880 = vpop.f32.mrb[0].mxu0
    %v4881 = vadd.f32 %v4767, %v4880
    %v4882 = vpop.f32.mrb[0].mxu0
    %4883 = vmatprep.mubr.f32.mxu0 0.0
    %4884 = vmatmul.mubr.f32.gmra.mrb[0].mxu0 %v4778
    %v4885 = vpop.f32.mrb[0].mxu0
    %v4886 = vadd.f32 %v4767, %v4885
    %v4887 = vpop.f32.mrb[0].mxu0
    %4888 = vmatprep.mubr.f32.mxu0 0.0
    %4889 = vmatmul.mubr.f32.gmra.mrb[0].mxu0 %v4781
    %v4890 = vpop.f32.mrb[0].mxu0
    %v4891 = vadd.f32 %v4767, %v4890
    %v4892 = vpop.f32.mrb[0].mxu0
    %4893 = vmatprep.mubr.f32.mxu0 0.0
    %4894 = vmatmul.mubr.f32.gmra.mrb[0].mxu0 %v4784
    %v4895 = vpop.f32.mrb[0].mxu0
    %v4896 = vadd.f32 %v4767, %v4895
    %v4897 = vpop.f32.mrb[0].mxu0
    %4898 = vmatprep.mubr.f32.mxu0 0.0
    %4899 = vmatmul.mubr.f32.gmra.mrb[0].mxu0 %v4787
    %v4900 = vpop.f32.mrb[0].mxu0
    %v4901 = vadd.f32 %v4767, %v4900
    %v4902 = vpop.f32.mrb[0].mxu0
    %4903 = vmatprep.mubr.f32.mxu0 0.0
    %4904 = vmatmul.mubr.f32.gmra.mrb[0].mxu0 %v4790
    %v4905 = vpop.f32.mrb[0].mxu0
    %v4906 = vadd.f32 %v4767, %v4905
    %v4907 = vpop.f32.mrb[0].mxu0
    %4908 = vmatprep.mubr.f32.mxu0 0.0
    %4909 = vmatmul.mubr.f32.gmra.mrb[0].mxu0 %v4793
    %v4910 = vpop.f32.mrb[0].mxu0
    %v4911 = vadd.f32 %v4767, %v4910
    %v4912 = vpop.f32.mrb[0].mxu0
    %4913 = vmatprep.mubr.f32.mxu0 0.0
    %4914 = vmatmul.mubr.f32.gmra.mrb[0].mxu0 %v4796
    %v4915 = vpop.f32.mrb[0].mxu0
    %v4916 = vadd.f32 %v4767, %v4915
    %v4917 = vpop.f32.mrb[0].mxu0
    %4918 = vmatprep.mubr.f32.mxu0 0.0
    %4919 = vmatmul.mubr.f32.gmra.mrb[0].mxu0 %v4799
    %v4920 = vpop.f32.mrb[0].mxu0
    %v4921 = vadd.f32 %v4767, %v4920
    %v4922 = vpop.f32.mrb[0].mxu0
    %4923 = vmatprep.mubr.f32.mxu0 0.0
    %4924 = vmatmul.mubr.f32.gmra.mrb[0].mxu0 %v4802
    %v4925 = vpop.f32.mrb[0].mxu0
    %v4926 = vadd.f32 %v4767, %v4925
    %v4927 = vpop.f32.mrb[0].mxu0
    %4928 = vdwg.mxu0
    %v4929 = vmax.f32 %v4871, 0.0
    %v4930 = vmax.f32 %v4876, 0.0
    %v4931 = vmax.f32 %v4881, 0.0
    %v4932 = vmax.f32 %v4886, 0.0
    %v4933 = vmax.f32 %v4891, 0.0
    %v4934 = vmax.f32 %v4896, 0.0
    %v4935 = vmax.f32 %v4901, 0.0
    %v4936 = vmax.f32 %v4906, 0.0
    %v4937 = vmax.f32 %v4911, 0.0
    %v4938 = vmax.f32 %v4916, 0.0
    %v4939 = vmax.f32 %v4921, 0.0
    %v4940 = vmax.f32 %v4926, 0.0
    %s4941 = scalar_lea.vmem [#allocation2], 352
    %v4942 = vld [vmem:[%s4941] sm:$0xff]
    %v4943 = vld [vmem:[%s4941 + $0x8] sm:$0xff]
    %v4944 = vld [vmem:[%s4941 + $0x10] sm:$0xff]
    %v4945 = vld [vmem:[%s4941 + $0x18] sm:$0xff]
    %v4946 = vld [vmem:[%s5 + $0x13] sm:$0x1]
    %v4947 = vlaneseq
    %v4948 = vshrl.u32 %v4947, 7
    %v4949 = vsub.s32 0, %v4948
    %v4950 = vrot.slane %v4946, %v4949
    %v4952 = vsel %vm220, %v4929, 0
    %v4955 = vsel %vm220, %v4930, 0
    %v4958 = vsel %vm220, %v4931, 0
    %v4961 = vsel %vm220, %v4932, 0
    %v4964 = vsel %vm220, %v4933, 0
    %v4967 = vsel %vm220, %v4934, 0
    %v4970 = vsel %vm220, %v4935, 0
    %v4973 = vsel %vm220, %v4936, 0
    %v4976 = vsel %vm220, %v4937, 0
    %v4979 = vsel %vm220, %v4938, 0
    %v4982 = vsel %vm220, %v4939, 0
    %v4985 = vsel %vm220, %v4940, 0
    %4987 = vmatprep.subr.mxu0 0.0
    %4988 = vmatpush1.msra.mxu0 %v4942
    %4989 = vmatprep.subr.mxu0 0.0
    %4990 = vmatpush1.msra.mxu0 %v4943
    %4991 = vmatprep.subr.mxu0 0.0
    %4992 = vmatpush1.msra.mxu0 %v4944
    %4993 = vmatprep.subr.mxu0 0.0
    %4994 = vmatpush1.msra.mxu0 %v4945
    %4995 = vmatprep.subr.mxu0 0.0
    %4996 = vmatpush1.msra.mxu0 0.0
    %4997 = vmatprep.subr.mxu0 0.0
    %4998 = vmatpush1.msra.mxu0 0.0
    %4999 = vmatprep.subr.mxu0 0.0
    %5000 = vmatpush1.msra.mxu0 0.0
    %5001 = vmatprep.subr.mxu0 0.0
    %5002 = vmatpush1.msra.mxu0 0.0
    %5003 = vmatprep.subr.mxu0 0.0
    %5004 = vmatpush1.msra.mxu0 0.0
    %5005 = vmatprep.subr.mxu0 0.0
    %5006 = vmatpush1.msra.mxu0 0.0
    %5007 = vmatprep.subr.mxu0 0.0
    %5008 = vmatpush1.msra.mxu0 0.0
    %5009 = vmatprep.subr.mxu0 0.0
    %5010 = vmatpush1.msra.mxu0 0.0
    %5011 = vmatprep.subr.mxu0 0.0
    %5012 = vmatpush1.msra.mxu0 0.0
    %5013 = vmatprep.subr.mxu0 0.0
    %5014 = vmatpush1.msra.mxu0 0.0
    %5015 = vmatprep.subr.mxu0 0.0
    %5016 = vmatpush1.msra.mxu0 0.0
    %5017 = vmatprep.subr.mxu0 0.0
    %5018 = vmatpush1.msra.mxu0 0.0
    %5019 = vmatprep.subr.mxu0 0.0
    %5020 = vmatpush1.msra.mxu0 0.0
    %5021 = vmatprep.subr.mxu0 0.0
    %5022 = vmatpush1.msra.mxu0 0.0
    %5023 = vmatprep.subr.mxu0 0.0
    %5024 = vmatpush1.msra.mxu0 0.0
    %5025 = vmatprep.subr.mxu0 0.0
    %5026 = vmatpush1.msra.mxu0 0.0
    %5027 = vmatprep.subr.mxu0 0.0
    %5028 = vmatpush1.msra.mxu0 0.0
    %5029 = vmatprep.subr.mxu0 0.0
    %5030 = vmatpush1.msra.mxu0 0.0
    %5031 = vmatprep.subr.mxu0 0.0
    %5032 = vmatpush1.msra.mxu0 0.0
    %5033 = vmatprep.subr.mxu0 0.0
    %5034 = vmatpush1.msra.mxu0 0.0
    %5035 = vmatprep.subr.mxu0 0.0
    %5036 = vmatpush1.msra.mxu0 0.0
    %5037 = vmatprep.subr.mxu0 0.0
    %5038 = vmatpush1.msra.mxu0 0.0
    %5039 = vmatprep.subr.mxu0 0.0
    %5040 = vmatpush1.msra.mxu0 0.0
    %5041 = vmatprep.subr.mxu0 0.0
    %5042 = vmatpush1.msra.mxu0 0.0
    %5043 = vmatprep.subr.mxu0 0.0
    %5044 = vmatpush1.msra.mxu0 0.0
    %5045 = vmatprep.subr.mxu0 0.0
    %5046 = vmatpush1.msra.mxu0 0.0
    %5047 = vmatprep.subr.mxu0 0.0
    %5048 = vmatpush1.msra.mxu0 0.0
    %5049 = vmatprep.subr.mxu0 0.0
    %5050 = vmatpush1.msra.mxu0 0.0
    %5051 = vmatprep.mubr.f32.mxu0 0.0
    %5052 = vmatmul.mubr.f32.gmra.mrb[0].mxu0 %v4952
    %v5053 = vpop.f32.mrb[0].mxu0
    %v5054 = vadd.f32 %v4950, %v5053
    %v5055 = vpop.f32.mrb[0].mxu0
    %5056 = vmatprep.mubr.f32.mxu0 0.0
    %5057 = vmatmul.mubr.f32.gmra.mrb[0].mxu0 %v4955
    %v5058 = vpop.f32.mrb[0].mxu0
    %v5059 = vadd.f32 %v4950, %v5058
    %v5060 = vpop.f32.mrb[0].mxu0
    %5061 = vmatprep.mubr.f32.mxu0 0.0
    %5062 = vmatmul.mubr.f32.gmra.mrb[0].mxu0 %v4958
    %v5063 = vpop.f32.mrb[0].mxu0
    %v5064 = vadd.f32 %v4950, %v5063
    %v5065 = vpop.f32.mrb[0].mxu0
    %5066 = vmatprep.mubr.f32.mxu0 0.0
    %5067 = vmatmul.mubr.f32.gmra.mrb[0].mxu0 %v4961
    %v5068 = vpop.f32.mrb[0].mxu0
    %v5069 = vadd.f32 %v4950, %v5068
    %v5070 = vpop.f32.mrb[0].mxu0
    %5071 = vmatprep.mubr.f32.mxu0 0.0
    %5072 = vmatmul.mubr.f32.gmra.mrb[0].mxu0 %v4964
    %v5073 = vpop.f32.mrb[0].mxu0
    %v5074 = vadd.f32 %v4950, %v5073
    %v5075 = vpop.f32.mrb[0].mxu0
    %5076 = vmatprep.mubr.f32.mxu0 0.0
    %5077 = vmatmul.mubr.f32.gmra.mrb[0].mxu0 %v4967
    %v5078 = vpop.f32.mrb[0].mxu0
    %v5079 = vadd.f32 %v4950, %v5078
    %v5080 = vpop.f32.mrb[0].mxu0
    %5081 = vmatprep.mubr.f32.mxu0 0.0
    %5082 = vmatmul.mubr.f32.gmra.mrb[0].mxu0 %v4970
    %v5083 = vpop.f32.mrb[0].mxu0
    %v5084 = vadd.f32 %v4950, %v5083
    %v5085 = vpop.f32.mrb[0].mxu0
    %5086 = vmatprep.mubr.f32.mxu0 0.0
    %5087 = vmatmul.mubr.f32.gmra.mrb[0].mxu0 %v4973
    %v5088 = vpop.f32.mrb[0].mxu0
    %v5089 = vadd.f32 %v4950, %v5088
    %v5090 = vpop.f32.mrb[0].mxu0
    %5091 = vmatprep.mubr.f32.mxu0 0.0
    %5092 = vmatmul.mubr.f32.gmra.mrb[0].mxu0 %v4976
    %v5093 = vpop.f32.mrb[0].mxu0
    %v5094 = vadd.f32 %v4950, %v5093
    %v5095 = vpop.f32.mrb[0].mxu0
    %5096 = vmatprep.mubr.f32.mxu0 0.0
    %5097 = vmatmul.mubr.f32.gmra.mrb[0].mxu0 %v4979
    %v5098 = vpop.f32.mrb[0].mxu0
    %v5099 = vadd.f32 %v4950, %v5098
    %v5100 = vpop.f32.mrb[0].mxu0
    %5101 = vmatprep.mubr.f32.mxu0 0.0
    %5102 = vmatmul.mubr.f32.gmra.mrb[0].mxu0 %v4982
    %v5103 = vpop.f32.mrb[0].mxu0
    %v5104 = vadd.f32 %v4950, %v5103
    %v5105 = vpop.f32.mrb[0].mxu0
    %5106 = vmatprep.mubr.f32.mxu0 0.0
    %5107 = vmatmul.mubr.f32.gmra.mrb[0].mxu0 %v4985
    %v5108 = vpop.f32.mrb[0].mxu0
    %v5109 = vadd.f32 %v4950, %v5108
    %v5110 = vpop.f32.mrb[0].mxu0
    %5111 = vdwg.mxu0
    %v5112 = vadd.f32 %v4746, %v5054
    %v5113 = vadd.f32 %v4747, %v5059
    %v5114 = vadd.f32 %v4748, %v5064
    %v5115 = vadd.f32 %v4749, %v5069
    %v5116 = vadd.f32 %v4750, %v5074
    %v5117 = vadd.f32 %v4751, %v5079
    %v5118 = vadd.f32 %v4752, %v5084
    %v5119 = vadd.f32 %v4753, %v5089
    %v5120 = vadd.f32 %v4754, %v5094
    %v5121 = vadd.f32 %v4755, %v5099
    %v5122 = vadd.f32 %v4756, %v5104
    %v5123 = vadd.f32 %v4757, %v5109
    %v5124 = vmul.f32 %v5112, %v113
    %v5125 = vmul.f32 %v5113, %v118
    %v5126 = vmul.f32 %v5114, %v123
    %v5127 = vmul.f32 %v5115, %v128
    %v5128 = vmul.f32 %v5116, %v133
    %v5129 = vmul.f32 %v5117, %v138
    %v5130 = vmul.f32 %v5118, %v143
    %v5131 = vmul.f32 %v5119, %v148
    %v5132 = vmul.f32 %v5120, %v153
    %v5133 = vmul.f32 %v5121, %v158
    %v5134 = vmul.f32 %v5122, %v163
    %v5135 = vmul.f32 %v5123, %v168
    %v5136 = vld [vmem:[%s6] sm:$0x1]
    %v5137 = vld [vmem:[%s6 + $0x1] sm:$0x1]
    %v5138 = vsel %vm220, %v5124, 0.0
    %5139 = vadd.xlane.f32.xlu0 %v5138
    %v5140 = vpop.xlane.xlu0 %5139
    %v5141 = vsel %vm220, %v5125, 0.0
    %5142 = vadd.xlane.f32.xlu0 %v5141
    %v5143 = vpop.xlane.xlu0 %5142
    %v5144 = vsel %vm220, %v5126, 0.0
    %5145 = vadd.xlane.f32.xlu0 %v5144
    %v5146 = vpop.xlane.xlu0 %5145
    %v5147 = vsel %vm220, %v5127, 0.0
    %5148 = vadd.xlane.f32.xlu0 %v5147
    %v5149 = vpop.xlane.xlu0 %5148
    %v5150 = vsel %vm220, %v5128, 0.0
    %5151 = vadd.xlane.f32.xlu0 %v5150
    %v5152 = vpop.xlane.xlu0 %5151
    %v5153 = vsel %vm220, %v5129, 0.0
    %5154 = vadd.xlane.f32.xlu0 %v5153
    %v5155 = vpop.xlane.xlu0 %5154
    %v5156 = vsel %vm220, %v5130, 0.0
    %5157 = vadd.xlane.f32.xlu0 %v5156
    %v5158 = vpop.xlane.xlu0 %5157
    %v5159 = vsel %vm220, %v5131, 0.0
    %5160 = vadd.xlane.f32.xlu0 %v5159
    %v5161 = vpop.xlane.xlu0 %5160
    %v5162 = vsel %vm220, %v5132, 0.0
    %5163 = vadd.xlane.f32.xlu0 %v5162
    %v5164 = vpop.xlane.xlu0 %5163
    %v5165 = vsel %vm220, %v5133, 0.0
    %5166 = vadd.xlane.f32.xlu0 %v5165
    %v5167 = vpop.xlane.xlu0 %5166
    %v5168 = vsel %vm220, %v5134, 0.0
    %5169 = vadd.xlane.f32.xlu0 %v5168
    %v5170 = vpop.xlane.xlu0 %5169
    %v5171 = vsel %vm220, %v5135, 0.0
    %5172 = vadd.xlane.f32.xlu0 %v5171
    %v5173 = vpop.xlane.xlu0 %5172
    %v5174 = vmul.f32 %v5140, %v257
    %v5175 = vmul.f32 %v5143, %v257
    %v5176 = vmul.f32 %v5146, %v257
    %v5177 = vmul.f32 %v5149, %v257
    %v5178 = vmul.f32 %v5152, %v257
    %v5179 = vmul.f32 %v5155, %v257
    %v5180 = vmul.f32 %v5158, %v257
    %v5181 = vmul.f32 %v5161, %v257
    %v5182 = vmul.f32 %v5164, %v257
    %v5183 = vmul.f32 %v5167, %v257
    %v5184 = vmul.f32 %v5170, %v257
    %v5185 = vmul.f32 %v5173, %v257
    %v5186 = vsub.f32 %v5124, %v5174
    %v5187 = vsub.f32 %v5125, %v5175
    %v5188 = vsub.f32 %v5126, %v5176
    %v5189 = vsub.f32 %v5127, %v5177
    %v5190 = vsub.f32 %v5128, %v5178
    %v5191 = vsub.f32 %v5129, %v5179
    %v5192 = vsub.f32 %v5130, %v5180
    %v5193 = vsub.f32 %v5131, %v5181
    %v5194 = vsub.f32 %v5132, %v5182
    %v5195 = vsub.f32 %v5133, %v5183
    %v5196 = vsub.f32 %v5134, %v5184
    %v5197 = vsub.f32 %v5135, %v5185
    %v5198 = vmul.f32 %v5186, %v5186
    %v5199 = vmul.f32 %v5187, %v5187
    %v5200 = vmul.f32 %v5188, %v5188
    %v5201 = vmul.f32 %v5189, %v5189
    %v5202 = vmul.f32 %v5190, %v5190
    %v5203 = vmul.f32 %v5191, %v5191
    %v5204 = vmul.f32 %v5192, %v5192
    %v5205 = vmul.f32 %v5193, %v5193
    %v5206 = vmul.f32 %v5194, %v5194
    %v5207 = vmul.f32 %v5195, %v5195
    %v5208 = vmul.f32 %v5196, %v5196
    %v5209 = vmul.f32 %v5197, %v5197
    %v5210 = vsel %vm220, %v5198, 0.0
    %5211 = vadd.xlane.f32.xlu0 %v5210
    %v5212 = vpop.xlane.xlu0 %5211
    %v5213 = vsel %vm220, %v5199, 0.0
    %5214 = vadd.xlane.f32.xlu0 %v5213
    %v5215 = vpop.xlane.xlu0 %5214
    %v5216 = vsel %vm220, %v5200, 0.0
    %5217 = vadd.xlane.f32.xlu0 %v5216
    %v5218 = vpop.xlane.xlu0 %5217
    %v5219 = vsel %vm220, %v5201, 0.0
    %5220 = vadd.xlane.f32.xlu0 %v5219
    %v5221 = vpop.xlane.xlu0 %5220
    %v5222 = vsel %vm220, %v5202, 0.0
    %5223 = vadd.xlane.f32.xlu0 %v5222
    %v5224 = vpop.xlane.xlu0 %5223
    %v5225 = vsel %vm220, %v5203, 0.0
    %5226 = vadd.xlane.f32.xlu0 %v5225
    %v5227 = vpop.xlane.xlu0 %5226
    %v5228 = vsel %vm220, %v5204, 0.0
    %5229 = vadd.xlane.f32.xlu0 %v5228
    %v5230 = vpop.xlane.xlu0 %5229
    %v5231 = vsel %vm220, %v5205, 0.0
    %5232 = vadd.xlane.f32.xlu0 %v5231
    %v5233 = vpop.xlane.xlu0 %5232
    %v5234 = vsel %vm220, %v5206, 0.0
    %5235 = vadd.xlane.f32.xlu0 %v5234
    %v5236 = vpop.xlane.xlu0 %5235
    %v5237 = vsel %vm220, %v5207, 0.0
    %5238 = vadd.xlane.f32.xlu0 %v5237
    %v5239 = vpop.xlane.xlu0 %5238
    %v5240 = vsel %vm220, %v5208, 0.0
    %5241 = vadd.xlane.f32.xlu0 %v5240
    %v5242 = vpop.xlane.xlu0 %5241
    %v5243 = vsel %vm220, %v5209, 0.0
    %5244 = vadd.xlane.f32.xlu0 %v5243
    %v5245 = vpop.xlane.xlu0 %5244
    %v5246 = vmul.f32 %v5212, %v257
    %v5247 = vmul.f32 %v5215, %v257
    %v5248 = vmul.f32 %v5218, %v257
    %v5249 = vmul.f32 %v5221, %v257
    %v5250 = vmul.f32 %v5224, %v257
    %v5251 = vmul.f32 %v5227, %v257
    %v5252 = vmul.f32 %v5230, %v257
    %v5253 = vmul.f32 %v5233, %v257
    %v5254 = vmul.f32 %v5236, %v257
    %v5255 = vmul.f32 %v5239, %v257
    %v5256 = vmul.f32 %v5242, %v257
    %v5257 = vmul.f32 %v5245, %v257
    %v5258 = vadd.f32 %v5246, 1e-08
    %v5259 = vadd.f32 %v5247, 1e-08
    %v5260 = vadd.f32 %v5248, 1e-08
    %v5261 = vadd.f32 %v5249, 1e-08
    %v5262 = vadd.f32 %v5250, 1e-08
    %v5263 = vadd.f32 %v5251, 1e-08
    %v5264 = vadd.f32 %v5252, 1e-08
    %v5265 = vadd.f32 %v5253, 1e-08
    %v5266 = vadd.f32 %v5254, 1e-08
    %v5267 = vadd.f32 %v5255, 1e-08
    %v5268 = vadd.f32 %v5256, 1e-08
    %v5269 = vadd.f32 %v5257, 1e-08
    %v5270 = vrsqrt.pop %v5258
    %v5271 = vrsqrt.pop %v5259
    %v5272 = vrsqrt.pop %v5260
    %v5273 = vrsqrt.pop %v5261
    %v5274 = vrsqrt.pop %v5262
    %v5275 = vrsqrt.pop %v5263
    %v5276 = vrsqrt.pop %v5264
    %v5277 = vrsqrt.pop %v5265
    %v5278 = vrsqrt.pop %v5266
    %v5279 = vrsqrt.pop %v5267
    %v5280 = vrsqrt.pop %v5268
    %v5281 = vrsqrt.pop %v5269
    %v5282 = vmul.f32 %v5186, %v5270
    %v5283 = vmul.f32 %v5187, %v5271
    %v5284 = vmul.f32 %v5188, %v5272
    %v5285 = vmul.f32 %v5189, %v5273
    %v5286 = vmul.f32 %v5190, %v5274
    %v5287 = vmul.f32 %v5191, %v5275
    %v5288 = vmul.f32 %v5192, %v5276
    %v5289 = vmul.f32 %v5193, %v5277
    %v5290 = vmul.f32 %v5194, %v5278
    %v5291 = vmul.f32 %v5195, %v5279
    %v5292 = vmul.f32 %v5196, %v5280
    %v5293 = vmul.f32 %v5197, %v5281
    %v5294 = vlaneseq
    %v5295 = vshrl.u32 %v5294, 7
    %v5296 = vsub.s32 0, %v5295
    %v5297 = vrot.slane %v5136, %v5296
    %v5298 = vmul.f32 %v5282, %v5297
    %v5299 = vmul.f32 %v5283, %v5297
    %v5300 = vmul.f32 %v5284, %v5297
    %v5301 = vmul.f32 %v5285, %v5297
    %v5302 = vmul.f32 %v5286, %v5297
    %v5303 = vmul.f32 %v5287, %v5297
    %v5304 = vmul.f32 %v5288, %v5297
    %v5305 = vmul.f32 %v5289, %v5297
    %v5306 = vmul.f32 %v5290, %v5297
    %v5307 = vmul.f32 %v5291, %v5297
    %v5308 = vmul.f32 %v5292, %v5297
    %v5309 = vmul.f32 %v5293, %v5297
    %v5310 = vlaneseq
    %v5311 = vshrl.u32 %v5310, 7
    %v5312 = vsub.s32 0, %v5311
    %v5313 = vrot.slane %v5137, %v5312
    %v5314 = vadd.f32 %v5298, %v5313
    %v5315 = vadd.f32 %v5299, %v5313
    %v5316 = vadd.f32 %v5300, %v5313
    %v5317 = vadd.f32 %v5301, %v5313
    %v5318 = vadd.f32 %v5302, %v5313
    %v5319 = vadd.f32 %v5303, %v5313
    %v5320 = vadd.f32 %v5304, %v5313
    %v5321 = vadd.f32 %v5305, %v5313
    %v5322 = vadd.f32 %v5306, %v5313
    %v5323 = vadd.f32 %v5307, %v5313
    %v5324 = vadd.f32 %v5308, %v5313
    %v5325 = vadd.f32 %v5309, %v5313
    %v5326 = vld [vmem:[%s7] sm:$0xff]
    %v5327 = vld [vmem:[%s7 + $0x8] sm:$0xff]
    %v5328 = vld [vmem:[%s7 + $0x10] sm:$0xff]
    %v5329 = vld [vmem:[%s7 + $0x18] sm:$0xff]
    %v5330 = vmul.f32 %v5314, %v5326
    %v5331 = vmul.f32 %v5315, %v5327
    %v5332 = vmul.f32 %v5316, %v5328
    %v5333 = vmul.f32 %v5317, %v5329
    %v5334 = vsel %vm220, %v5330, 0.0
    %5335 = vadd.xlane.f32.xlu0 %v5334
    %v5336 = vpop.xlane.xlu0 %5335
    %v5337 = vsel %vm220, %v5331, 0.0
    %5338 = vadd.xlane.f32.xlu0 %v5337
    %v5339 = vpop.xlane.xlu0 %5338
    %v5340 = vsel %vm220, %v5332, 0.0
    %5341 = vadd.xlane.f32.xlu0 %v5340
    %v5342 = vpop.xlane.xlu0 %5341
    %v5343 = vsel %vm220, %v5333, 0.0
    %5344 = vadd.xlane.f32.xlu0 %v5343
    %v5345 = vpop.xlane.xlu0 %5344
    %vm5346 = vcmask 7168
    %5347 = vst.msk [vmem:[%s9] sm:$0xff] %vm5346, %v5336
    %5348 = vst.msk [vmem:[%s9 + $0x8] sm:$0xff] %vm5346, %v5339
    %5349 = vst.msk [vmem:[%s9 + $0x10] sm:$0xff] %vm5346, %v5342
    %5350 = vst.msk [vmem:[%s9 + $0x18] sm:$0xff] %vm5346, %v5345
    %v5351 = vld [vmem:[%s8] sm:$0xff]
    %v5352 = vld [vmem:[%s8 + $0x8] sm:$0xff]
    %v5353 = vld [vmem:[%s8 + $0x10] sm:$0xff]
    %v5354 = vld [vmem:[%s8 + $0x18] sm:$0xff]
    %v5355 = vmul.f32 %v5314, %v5351
    %v5356 = vmul.f32 %v5315, %v5352
    %v5357 = vmul.f32 %v5316, %v5353
    %v5358 = vmul.f32 %v5317, %v5354
    %v5359 = vsel %vm220, %v5355, 0.0
    %5360 = vadd.xlane.f32.xlu0 %v5359
    %v5361 = vpop.xlane.xlu0 %5360
    %v5362 = vsel %vm220, %v5356, 0.0
    %5363 = vadd.xlane.f32.xlu0 %v5362
    %v5364 = vpop.xlane.xlu0 %5363
    %v5365 = vsel %vm220, %v5357, 0.0
    %5366 = vadd.xlane.f32.xlu0 %v5365
    %v5367 = vpop.xlane.xlu0 %5366
    %v5368 = vsel %vm220, %v5358, 0.0
    %5369 = vadd.xlane.f32.xlu0 %v5368
    %v5370 = vpop.xlane.xlu0 %5369
    %5371 = vst.msk [vmem:[%s10] sm:$0xff] %vm5346, %v5361
    %5372 = vst.msk [vmem:[%s10 + $0x8] sm:$0xff] %vm5346, %v5364
    %5373 = vst.msk [vmem:[%s10 + $0x10] sm:$0xff] %vm5346, %v5367
    %5374 = vst.msk [vmem:[%s10 + $0x18] sm:$0xff] %vm5346, %v5370
    %v5375 = vlaneseq
    %v5376 = vshrl.u32 %v5375, 7
    %v5377 = vmul.u32 %v5376, 8
    %v5378 = vadd.s32 %v5377, 32
    %v5379 = vadd.s32 %v5378, 7
    %vm5380 = vcmp.eq.s32.totalorder %v207, %v5379
    %v5381 = vsel %vm5380, 1, 0
    %v5382 = vcvt.s32.f32 %v5381
    %v5384 = vsel %vm1119, %v5382, 0
    %5386 = vmatprep.subr.mxu0 0.0
    %5387 = vmatpush1.msra.mxu0 %v5314
    %5388 = vmatprep.subr.mxu0 0.0
    %5389 = vmatpush1.msra.mxu0 %v5315
    %5390 = vmatprep.subr.mxu0 0.0
    %5391 = vmatpush1.msra.mxu0 %v5316
    %5392 = vmatprep.subr.mxu0 0.0
    %5393 = vmatpush1.msra.mxu0 %v5317
    %5394 = vmatprep.subr.mxu0 0.0
    %5395 = vmatpush1.msra.mxu0 %v5318
    %5396 = vmatprep.subr.mxu0 0.0
    %5397 = vmatpush1.msra.mxu0 %v5319
    %5398 = vmatprep.subr.mxu0 0.0
    %5399 = vmatpush1.msra.mxu0 %v5320
    %5400 = vmatprep.subr.mxu0 0.0
    %5401 = vmatpush1.msra.mxu0 %v5321
    %5402 = vmatprep.subr.mxu0 0.0
    %5403 = vmatpush1.msra.mxu0 %v5322
    %5404 = vmatprep.subr.mxu0 0.0
    %5405 = vmatpush1.msra.mxu0 %v5323
    %5406 = vmatprep.subr.mxu0 0.0
    %5407 = vmatpush1.msra.mxu0 %v5324
    %5408 = vmatprep.subr.mxu0 0.0
    %5409 = vmatpush1.msra.mxu0 %v5325
    %5410 = vmatprep.subr.mxu0 0.0
    %5411 = vmatpush1.msra.mxu0 0.0
    %5412 = vmatprep.subr.mxu0 0.0
    %5413 = vmatpush1.msra.mxu0 0.0
    %5414 = vmatprep.subr.mxu0 0.0
    %5415 = vmatpush1.msra.mxu0 0.0
    %5416 = vmatprep.subr.mxu0 0.0
    %5417 = vmatpush1.msra.mxu0 0.0
    %5418 = vmatprep.subr.mxu0 0.0
    %5419 = vmatpush1.msra.mxu0 0.0
    %5420 = vmatprep.subr.mxu0 0.0
    %5421 = vmatpush1.msra.mxu0 0.0
    %5422 = vmatprep.subr.mxu0 0.0
    %5423 = vmatpush1.msra.mxu0 0.0
    %5424 = vmatprep.subr.mxu0 0.0
    %5425 = vmatpush1.msra.mxu0 0.0
    %5426 = vmatprep.subr.mxu0 0.0
    %5427 = vmatpush1.msra.mxu0 0.0
    %5428 = vmatprep.subr.mxu0 0.0
    %5429 = vmatpush1.msra.mxu0 0.0
    %5430 = vmatprep.subr.mxu0 0.0
    %5431 = vmatpush1.msra.mxu0 0.0
    %5432 = vmatprep.subr.mxu0 0.0
    %5433 = vmatpush1.msra.mxu0 0.0
    %5434 = vmatprep.subr.mxu0 0.0
    %5435 = vmatpush1.msra.mxu0 0.0
    %5436 = vmatprep.subr.mxu0 0.0
    %5437 = vmatpush1.msra.mxu0 0.0
    %5438 = vmatprep.subr.mxu0 0.0
    %5439 = vmatpush1.msra.mxu0 0.0
    %5440 = vmatprep.subr.mxu0 0.0
    %5441 = vmatpush1.msra.mxu0 0.0
    %5442 = vmatprep.subr.mxu0 0.0
    %5443 = vmatpush1.msra.mxu0 0.0
    %5444 = vmatprep.subr.mxu0 0.0
    %5445 = vmatpush1.msra.mxu0 0.0
    %5446 = vmatprep.subr.mxu0 0.0
    %5447 = vmatpush1.msra.mxu0 0.0
    %5448 = vmatprep.subr.mxu0 0.0
    %5449 = vmatpush1.msra.mxu0 0.0
    %5450 = vmatprep.mubr.f32.mxu0 0.0
    %5451 = vmatmul.mubr.f32.gmra.mrb[0].mxu0 %v5384
    %v5452 = vpop.f32.mrb[0].mxu0
    %v5453 = vadd.f32 0.0, %v5452
    %v5454 = vpop.f32.mrb[0].mxu0
    %5455 = vdwg.mxu0
    %v5457 = vsel %vm220, %v5453, 0
    %5459 = vmatprep.subr.mxu0 0.0
    %5460 = vmatpush1.xpose.msra.mxu0 %v5457
    %5461 = vmatprep.subr.mxu0 0.0
    %5462 = vmatpush1.xpose.msra.mxu0 0.0
    %5463 = vmatprep.subr.mxu0 0.0
    %5464 = vmatpush1.xpose.msra.mxu0 0.0
    %5465 = vmatprep.subr.mxu0 0.0
    %5466 = vmatpush1.xpose.msra.mxu0 0.0
    %5467 = vmatprep.subr.mxu0 0.0
    %5468 = vmatpush1.xpose.msra.mxu0 0.0
    %5469 = vmatprep.subr.mxu0 0.0
    %5470 = vmatpush1.xpose.msra.mxu0 0.0
    %5471 = vmatprep.subr.mxu0 0.0
    %5472 = vmatpush1.xpose.msra.mxu0 0.0
    %5473 = vmatprep.subr.mxu0 0.0
    %5474 = vmatpush1.xpose.msra.mxu0 0.0
    %5475 = vmatprep.subr.mxu0 0.0
    %5476 = vmatpush1.xpose.msra.mxu0 0.0
    %5477 = vmatprep.subr.mxu0 0.0
    %5478 = vmatpush1.xpose.msra.mxu0 0.0
    %5479 = vmatprep.subr.mxu0 0.0
    %5480 = vmatpush1.xpose.msra.mxu0 0.0
    %5481 = vmatprep.subr.mxu0 0.0
    %5482 = vmatpush1.xpose.msra.mxu0 0.0
    %5483 = vmatprep.subr.mxu0 0.0
    %5484 = vmatpush1.xpose.msra.mxu0 0.0
    %5485 = vmatprep.subr.mxu0 0.0
    %5486 = vmatpush1.xpose.msra.mxu0 0.0
    %5487 = vmatprep.subr.mxu0 0.0
    %5488 = vmatpush1.xpose.msra.mxu0 0.0
    %5489 = vmatprep.subr.mxu0 0.0
    %5490 = vmatpush1.xpose.msra.mxu0 0.0
    %5491 = vmatprep.subr.mxu0 0.0
    %5492 = vmatpush1.xpose.msra.mxu0 0.0
    %5493 = vmatprep.subr.mxu0 0.0
    %5494 = vmatpush1.xpose.msra.mxu0 0.0
    %5495 = vmatprep.subr.mxu0 0.0
    %5496 = vmatpush1.xpose.msra.mxu0 0.0
    %5497 = vmatprep.subr.mxu0 0.0
    %5498 = vmatpush1.xpose.msra.mxu0 0.0
    %5499 = vmatprep.subr.mxu0 0.0
    %5500 = vmatpush1.xpose.msra.mxu0 0.0
    %5501 = vmatprep.subr.mxu0 0.0
    %5502 = vmatpush1.xpose.msra.mxu0 0.0
    %5503 = vmatprep.subr.mxu0 0.0
    %5504 = vmatpush1.xpose.msra.mxu0 0.0
    %5505 = vmatprep.subr.mxu0 0.0
    %5506 = vmatpush1.xpose.msra.mxu0 0.0
    %5507 = vmatprep.subr.mxu0 0.0
    %5508 = vmatpush1.xpose.msra.mxu0 0.0
    %5509 = vmatprep.subr.mxu0 0.0
    %5510 = vmatpush1.xpose.msra.mxu0 0.0
    %5511 = vmatprep.subr.mxu0 0.0
    %5512 = vmatpush1.xpose.msra.mxu0 0.0
    %5513 = vmatprep.subr.mxu0 0.0
    %5514 = vmatpush1.xpose.msra.mxu0 0.0
    %5515 = vmatprep.subr.mxu0 0.0
    %5516 = vmatpush1.xpose.msra.mxu0 0.0
    %5517 = vmatprep.subr.mxu0 0.0
    %5518 = vmatpush1.xpose.msra.mxu0 0.0
    %5519 = vmatprep.subr.mxu0 0.0
    %5520 = vmatpush1.xpose.msra.mxu0 0.0
    %5521 = vmatprep.subr.mxu0 0.0
    %5522 = vmatpush1.xpose.msra.mxu0 0.0
    %5523 = vmatprep.mubr.f32.mxu0 0.0
    %5524 = vmatmul.mubr.f32.gmra.mrb[0].mxu0 %v5457
    %v5525 = vpop.f32.mrb[0].mxu0
    %v5526 = vadd.f32 0.0, %v5525
    %v5527 = vpop.f32.mrb[0].mxu0
    %5528 = vdwg.mxu0
    %vm5529 = vcmask 64512
    %5530 = vst.msk [vmem:[#allocation5] sm:$0xff] %vm5529, %v5526
    // Predicated region
    $region42: #{tpu_custom_call.1} parent=1 // pred_check
      _
    $region43: #{tpu_custom_call.1} parent=1 // pred_check_branch
      %5532 = sbr.rel (0) target = $region45
    $region44: #{tpu_custom_call.1} parent=1 // pred_region
      _
    $region45: #{tpu_custom_call.1} parent=1 // pred_fallthru
      _
    // Predicated region
    $region46: #{tpu_custom_call.1} parent=1 // pred_check
      _
    $region47: #{tpu_custom_call.1} parent=1 // pred_check_branch
      %5534 = sbr.rel (0) target = $region49
    $region48: #{tpu_custom_call.1} parent=1 // pred_region
      _
    $region49: #{tpu_custom_call.1} parent=1 // pred_fallthru
      _
    // Predicated region
    $region50: #{tpu_custom_call.1} parent=1 // pred_check
      _
    $region51: #{tpu_custom_call.1} parent=1 // pred_check_branch
      %5536 = sbr.rel (0) target = $region53
    $region52: #{tpu_custom_call.1} parent=1 // pred_region
      %s5538 = ssub.s32 128, 128
      %5539 = vsyncadd [#allocation4], %s5538
      %s5541 = sshll.u32 [#allocation5], 4
      %s5542 = int_to_ptr.vmem [resolvable:$true] %s5541
      %5544 = dma.vmem_to_hbm [thread:$0]  %s5542, 128, %s11, [#allocation4]
    $region53: #{tpu_custom_call.1} parent=1 // pred_fallthru
      _
    // Predicated region
    $region54: #{tpu_custom_call.1} parent=1 // pred_check
      _
    $region55: #{tpu_custom_call.1} parent=1 // pred_check_branch
      %5546 = sbr.rel (0) target = $region57
    $region56: #{tpu_custom_call.1} parent=1 // pred_region
      _
    $region57: #{tpu_custom_call.1} parent=1 // pred_fallthru
      _
    // Predicated region
    $region58: #{tpu_custom_call.1} parent=1 // pred_check
      _
    $region59: #{tpu_custom_call.1} parent=1 // pred_check_branch
      %5548 = sbr.rel (0) target = $region61
    $region60: #{tpu_custom_call.1} parent=1 // pred_region
      _
    $region61: #{tpu_custom_call.1} parent=1 // pred_fallthru
      _
    // Predicated region
    $region62: #{tpu_custom_call.1} parent=1 // pred_check
      _
    $region63: #{tpu_custom_call.1} parent=1 // pred_check_branch
      %5550 = sbr.rel (0) target = $region65
    $region64: #{tpu_custom_call.1} parent=1 // pred_region
      %5551 = dma.done [#allocation4], 128
    $region65: #{tpu_custom_call.1} parent=1 // pred_fallthru
      _
    %5552 = vsyncpa [#allocation3], 1
    %5553 = vsyncpa [#allocation4], 1

</llo_original>
